<compile_context>
chip_gen: v7x
topology: tpu7x:2x2x1
jax: 0.10.0
libtpu: 0.0.40
codegen_flags: <defaults>
</compile_context>

<pallas_src>
import functools

import numpy as np
import jax
import jax.numpy as jnp
from jax.experimental import pallas as pl
from jax.experimental.pallas import tpu as pltpu


# ---------------------------------------------------------------------------
# Positional coding (same formula as the PyTorch sine_position_coding helper)
# ---------------------------------------------------------------------------
def sine_position_coding(dims=32, max_length=300, freq_factor=2):
    time = np.arange(0, max_length, 1)
    freq_factors = freq_factor * np.arange(1, dims + 1, 1)
    codes = np.sin(2 * np.pi * np.outer(time, freq_factors) / max_length).astype("float32")
    return jnp.asarray(codes)


def _round_up(x, m):
    return (x + m - 1) // m * m


# ---------------------------------------------------------------------------
# Pallas kernel: one batch tile, all heads; grid = (batch_tiles, layers).
#   x_ref    : (BLt, Dpad)          f32   input rows of this batch tile (fetched once per tile)
#   pos_ref  : (1, Lp, Dpad)        bf16  this layer's positional codes (broadcast over batch in-kernel)
#   wqk_ref  : (1, Dpad, 2*H*Kp)    bf16  [Wq/temp | Wk], heads stacked, each head padded to Kp lanes
#   wv_ref   : (1, Dpad, H*Vp)      bf16  Wv, heads stacked, each head padded to Vp lanes
#   wp_ref   : (1, H*Vp, Doutp)     bf16  output projection (rows padded per head to Vp)
#   bp_ref   : (1, 1, Doutp)        f32   output projection bias
#   out_ref  : (BLt, Doutp)         f32   final activation (resident across the layer axis)
#   act_ref  : (BLt, Dpad)          bf16  VMEM scratch: inter-layer activation
#   oslab_ref: (BLt, H*Vp)          bf16  VMEM scratch: per-head attention outputs
# ---------------------------------------------------------------------------
def _encoder_kernel(x_ref, pos_ref, wqk_ref, wv_ref, wp_ref, bp_ref,
                    out_ref, act_ref, oslab_ref, *,
                    B_TILE, L, Lp, H, Kp, Vp, Doutp, Dpad, n_layers):
    layer = pl.program_id(1)
    BL = B_TILE * Lp
    HKp = H * Kp

    @pl.when(layer == 0)
    def _():
        act_ref[...] = x_ref[...].astype(act_ref.dtype)   # padded rows/lanes are zero

    x_bf = act_ref[...]                                   # (BL, Dpad) bf16 -- values input
    xb = x_bf.astype(jnp.float32)
    # keys/queries input: add positional codes, broadcast over the batch tile.
    kq = (xb.reshape(B_TILE, Lp, Dpad)
          + pos_ref[0].astype(jnp.float32)[None]).reshape(BL, Dpad)

    # Fused, lane-dense projections: bf16 operands, f32 accumulation on the MXU.
    qk = jnp.dot(kq.astype(jnp.bfloat16), wqk_ref[0],
                 preferred_element_type=jnp.float32)      # (BL, 2*H*Kp)
    vv = jnp.dot(x_bf, wv_ref[0],
                 preferred_element_type=jnp.float32)      # (BL, H*Vp)

    # Additive key-padding bias (key positions >= L are padding); L, Lp static.
    if L < Lp:
        key_ids = jax.lax.broadcasted_iota(jnp.int32, (1, 1, Lp), 2)
        key_bias = jnp.where(key_ids < L, jnp.float32(0.0), jnp.float32(-1e30))
    else:
        key_bias = jnp.float32(0.0)

    for h in range(H):   # static unroll; each head ends in a VMEM store -> bounded live ranges
        q_h = qk[:, h * Kp:(h + 1) * Kp].reshape(B_TILE, Lp, Kp)      # 1/temp pre-folded
        k_h = qk[:, HKp + h * Kp:HKp + (h + 1) * Kp].reshape(B_TILE, Lp, Kp)
        v_h = vv[:, h * Vp:(h + 1) * Vp].reshape(B_TILE, Lp, Vp)

        # scores[b, q, l]; softmax over the key axis (last), f32 throughout.
        # TODO(synk): "bqk,blk->bql" transposes k_h through the XLU; switch to a
        # K-major K layout only if the bundle shows XLU as the binding slot.
        s = jnp.einsum("bqk,blk->bql", q_h, k_h,
                       preferred_element_type=jnp.float32) + key_bias
        s = s - jnp.max(s, axis=-1, keepdims=True)
        e = jnp.exp(s)
        attn = e * pl.reciprocal(jnp.sum(e, axis=-1, keepdims=True), approx=True)

        o_h = jnp.einsum("bql,blv->bqv",
                         attn.astype(jnp.bfloat16), v_h.astype(jnp.bfloat16),
                         preferred_element_type=jnp.float32)          # (B_TILE, Lp, Vp)

        # 128-aligned lane-slice store into the fused head-output slab.
        oslab_ref[:, h * Vp:(h + 1) * Vp] = o_h.reshape(BL, Vp).astype(oslab_ref.dtype)

    # Single full-depth output projection + bias + ReLU (f32 elementwise).
    y = jnp.dot(oslab_ref[...], wp_ref[0], preferred_element_type=jnp.float32)
    y = jnp.maximum(y + bp_ref[0], 0.0)                   # (BL, Doutp)
    # TODO(synk): dropout treated as identity (eval mode); mask path not implemented.

    # Stash the activation for the next layer; keep padding lanes zeroed.
    @pl.when(layer < n_layers - 1)
    def _():
        act_ref[:, :Doutp] = y.astype(act_ref.dtype)
        if Doutp < Dpad:   # static
            act_ref[:, Doutp:] = jnp.zeros((BL, Dpad - Doutp), act_ref.dtype)

    @pl.when(layer == n_layers - 1)
    def _():
        out_ref[...] = y


# ---------------------------------------------------------------------------
# Wrapper: packs per-layer weights into fused, lane-aligned layouts and launches
# a single pallas_call for the whole encoder.
# ---------------------------------------------------------------------------
def transformer_encoder_forward(params, sequence, *, b_tile=1):
    """sequence: (B, L, in_size) -> (B, L, out_size). mask is assumed None."""
    B, L, in_size = sequence.shape
    n_layers = len(params)
    H, _, K = params[0]["wq"].shape
    V = params[0]["wv"].shape[2]
    Dout = params[0]["wp"].shape[1]
    assert B % b_tile == 0

    # Lane-dense padded sizes (multiples of 128).
    Lp = _round_up(L, 128)
    Kp = _round_up(K, 128)
    Vp = _round_up(V, 128)
    Doutp = _round_up(Dout, 128)
    Dpad = max(_round_up(in_size, 128), Doutp)   # common padded feature width
    BLt = b_tile * Lp

    wqk_l, wv_l, wp_l, bp_l, pos_l = [], [], [], [], []
    for lyr in params:
        din = lyr["wq"].shape[1]
        temp = float(din) ** 0.5                 # in_query_size ** 0.5

        def stack_heads(w, fp):                  # (H, din, F) -> (Dpad, H*fp), h-major, per-head padded
            h_, _, f = w.shape
            w = jnp.pad(w, ((0, 0), (0, Dpad - din), (0, fp - f)))
            return jnp.transpose(w, (1, 0, 2)).reshape(Dpad, h_ * fp)

        wqk = jnp.concatenate([stack_heads(lyr["wq"] / temp, Kp),
                               stack_heads(lyr["wk"], Kp)], axis=-1)     # (Dpad, 2*H*Kp)
        wqk_l.append(wqk.astype(jnp.bfloat16))
        wv_l.append(stack_heads(lyr["wv"], Vp).astype(jnp.bfloat16))     # (Dpad, H*Vp)

        wp = lyr["wp"].reshape(H, V, Dout)
        wp = jnp.pad(wp, ((0, 0), (0, Vp - V), (0, Doutp - Dout)))
        wp_l.append(wp.reshape(H * Vp, Doutp).astype(jnp.bfloat16))      # (H*Vp, Doutp)

        bp_l.append(jnp.pad(lyr["bp"], ((0, 0), (0, Doutp - Dout))))     # (1, Doutp) f32

        p = jnp.pad(lyr["pos"][:L, :], ((0, Lp - L), (0, Dpad - din)))   # (Lp, Dpad)
        pos_l.append(p.astype(jnp.bfloat16))

    wqk = jnp.stack(wqk_l)               # (layers, Dpad, 2*H*Kp)  bf16
    wv = jnp.stack(wv_l)                 # (layers, Dpad, H*Vp)    bf16
    wp = jnp.stack(wp_l)                 # (layers, H*Vp, Doutp)   bf16
    bp = jnp.stack(bp_l)                 # (layers, 1, Doutp)      f32
    pos = jnp.stack(pos_l)               # (layers, Lp, Dpad)      bf16

    x = jnp.pad(sequence.astype(jnp.float32),
                ((0, 0), (0, Lp - L), (0, Dpad - in_size))).reshape(B * Lp, Dpad)

    kernel = functools.partial(_encoder_kernel, B_TILE=b_tile, L=L, Lp=Lp, H=H,
                               Kp=Kp, Vp=Vp, Doutp=Doutp, Dpad=Dpad,
                               n_layers=n_layers)

    # VMEM budget: double-buffered input/output blocks + resident scratch + main f32 temps.
    def nbytes(shape, dt):
        n = 1
        for s in shape:
            n *= s
        return n * jnp.dtype(dt).itemsize

    block_bytes = (nbytes((BLt, Dpad), jnp.float32)            # x
                   + nbytes((Lp, Dpad), jnp.bfloat16)          # pos
                   + nbytes((Dpad, 2 * H * Kp), jnp.bfloat16)  # wqk
                   + nbytes((Dpad, H * Vp), jnp.bfloat16)      # wv
                   + nbytes((H * Vp, Doutp), jnp.bfloat16)     # wp
                   + nbytes((1, Doutp), jnp.float32)           # bp
                   + nbytes((BLt, Doutp), jnp.float32))        # out
    scratch_bytes = (nbytes((BLt, Dpad), jnp.bfloat16)
                     + nbytes((BLt, H * Vp), jnp.bfloat16))
    temp_bytes = (nbytes((BLt, 2 * H * Kp), jnp.float32)       # qk
                  + nbytes((BLt, H * Vp), jnp.float32)         # vv
                  + 3 * nbytes((b_tile, Lp, Lp), jnp.float32)  # scores / exp / attn
                  + 2 * nbytes((BLt, Doutp), jnp.float32))     # y temporaries
    vmem_limit = min(max(2 * block_bytes + scratch_bytes + temp_bytes + (4 << 20),
                         32 << 20),
                     64 << 20)

    out = pl.pallas_call(
        kernel,
        out_shape=jax.ShapeDtypeStruct((B * Lp, Doutp), jnp.float32),
        grid=(B // b_tile, n_layers),
        in_specs=[
            pl.BlockSpec((BLt, Dpad), lambda b, l: (b, 0)),                # sequence (re-used across layers)
            pl.BlockSpec((1, Lp, Dpad), lambda b, l: (l, 0, 0)),           # pos codes (per layer)
            pl.BlockSpec((1, Dpad, 2 * H * Kp), lambda b, l: (l, 0, 0)),   # fused Wq|Wk
            pl.BlockSpec((1, Dpad, H * Vp), lambda b, l: (l, 0, 0)),       # fused Wv
            pl.BlockSpec((1, H * Vp, Doutp), lambda b, l: (l, 0, 0)),      # out proj W
            pl.BlockSpec((1, 1, Doutp), lambda b, l: (l, 0, 0)),           # out proj b
        ],
        out_specs=pl.BlockSpec((BLt, Doutp), lambda b, l: (b, 0)),
        scratch_shapes=[pltpu.VMEM((BLt, Dpad), jnp.bfloat16),             # inter-layer activation
                        pltpu.VMEM((BLt, H * Vp), jnp.bfloat16)],          # per-head output slab
        compiler_params=pltpu.CompilerParams(
            dimension_semantics=("parallel", "arbitrary"),   # batch tiles parallel, layers sequential
            vmem_limit_bytes=int(vmem_limit)),
    )(x, pos, wqk, wv, wp, bp)

    return out.reshape(B, Lp, Doutp)[:, :L, :Dout]


# ---------------------------------------------------------------------------
# Parameter construction (deterministic, xavier-normal-style, f32 masters)
# ---------------------------------------------------------------------------
def _xavier_normal(key, shape):
    fan_in, fan_out = shape[-2], shape[-1]
    std = (2.0 / (fan_in + fan_out)) ** 0.5
    return std * jax.random.normal(key, shape, dtype=jnp.float32)


def make_transformer_encoder_params(key, in_size, out_size, heads_n=4, layers_n=2,
                                    max_length=500):
    sizes = [in_size] + [out_size] * layers_n
    params = []
    for i in range(layers_n):
        din, dout = sizes[i], sizes[i + 1]
        key, k_q, k_k, k_v, k_w, k_b = jax.random.split(key, 6)
        params.append({
            "wq": _xavier_normal(k_q, (heads_n, din, dout)),
            "wk": _xavier_normal(k_k, (heads_n, din, dout)),
            "wv": _xavier_normal(k_v, (heads_n, din, dout)),
            "wp": _xavier_normal(k_w, (heads_n * dout, dout)),
            "bp": 0.01 * jax.random.normal(k_b, (1, dout), dtype=jnp.float32),
            "pos": sine_position_coding(din, max_length=max_length),
        })
    return params


# ---------------------------------------------------------------------------
# Pure-JAX reference: mirrors the PyTorch forward (eval-mode dropout) with the
# same mixed-precision policy as the kernel (bf16 matmul operands, f32 accum),
# using the original per-head einsum formulation and exact softmax divide.
# ---------------------------------------------------------------------------
def _reference_forward(params, sequence):
    x = sequence
    B, L, _ = x.shape
    bf16 = jnp.bfloat16
    for lyr in params:
        din = lyr["wq"].shape[1]
        temp = float(din) ** 0.5
        wq = (lyr["wq"] / temp).astype(bf16)
        wk = lyr["wk"].astype(bf16)
        wv = lyr["wv"].astype(bf16)
        wp = lyr["wp"].astype(bf16)
        kq = (x + lyr["pos"][:L, :][None, :, :]).astype(bf16)
        xv = x.astype(bf16)
        pq = jnp.einsum("bqi,hik->bqhk", kq, wq, preferred_element_type=jnp.float32)
        pk = jnp.einsum("bli,hik->blhk", kq, wk, preferred_element_type=jnp.float32)
        pv = jnp.einsum("bli,hiv->blhv", xv, wv, preferred_element_type=jnp.float32)
        rel = jnp.einsum("bqhk,blhk->blqh", pq, pk, preferred_element_type=jnp.float32)
        attn = jax.nn.softmax(rel, axis=1)
        out = jnp.einsum("blhv,blqh->bqhv", pv.astype(bf16), attn.astype(bf16),
                         preferred_element_type=jnp.float32)            # (B, Q, H, V)
        out = out.reshape(B, L, -1)
        out = jnp.dot(out.astype(bf16), wp,
                      preferred_element_type=jnp.float32) + lyr["bp"][0]
        x = jnp.maximum(out, 0.0)
    return x


# ---------------------------------------------------------------------------
if __name__ == "__main__":
    B, L = 2, 8
    in_size, out_size, heads_n, layers_n = 16, 32, 4, 2

    key = jax.random.PRNGKey(0)
    key, k_params, k_seq = jax.random.split(key, 3)

    params = make_transformer_encoder_params(k_params, in_size, out_size,
                                             heads_n=heads_n, layers_n=layers_n)
    sequence = jax.random.normal(k_seq, (B, L, in_size), dtype=jnp.float32)

    out = transformer_encoder_forward(params, sequence, b_tile=1)
    out = jax.block_until_ready(out)

    ref = _reference_forward(params, sequence)
    assert out.shape == (B, L, out_size)
    # Tolerance covers bf16 weight / bf16 positional-code / bf16 inter-layer
    # activation rounding and the EUP approximate reciprocal in the softmax.
    np.testing.assert_allclose(np.asarray(out), np.asarray(ref), atol=3e-2, rtol=3e-2)

    print("KERNEL_OK")
</pallas_src>

<mosaic_0001>
module attributes {stable_mosaic.version = 11 : i64} {
  func.func @_encoder_kernel(%arg0: i32, %arg1: i32, %arg2: memref<128x128xf32, #tpu.memory_space<vmem>>, %arg3: memref<1x128x128xbf16, #tpu.memory_space<vmem>>, %arg4: memref<1x128x1024xbf16, #tpu.memory_space<vmem>>, %arg5: memref<1x128x512xbf16, #tpu.memory_space<vmem>>, %arg6: memref<1x512x128xbf16, #tpu.memory_space<vmem>>, %arg7: memref<1x1x128xf32, #tpu.memory_space<vmem>>, %arg8: memref<128x128xf32, #tpu.memory_space<vmem>>, %arg9: memref<128x128xbf16, #tpu.memory_space<vmem>>, %arg10: memref<128x512xbf16, #tpu.memory_space<vmem>>) attributes {dimension_semantics = [#tpu.dimension_semantics<parallel>, #tpu.dimension_semantics<arbitrary>], iteration_bounds = array<i64: 2, 2>, scalar_prefetch = 0 : i64, scratch_operands = 2 : i64, tpu.core_type = #tpu.core_type<tc>, window_params = [{transform_indices = @transform_0, window_bounds = array<i64: 128, 128>}, {transform_indices = @transform_1, window_bounds = array<i64: 1, 128, 128>}, {transform_indices = @transform_2, window_bounds = array<i64: 1, 128, 1024>}, {transform_indices = @transform_3, window_bounds = array<i64: 1, 128, 512>}, {transform_indices = @transform_4, window_bounds = array<i64: 1, 512, 128>}, {transform_indices = @transform_5, window_bounds = array<i64: 1, 1, 128>}, {transform_indices = @transform_6, window_bounds = array<i64: 128, 128>}]} {
    %c0_i32 = arith.constant 0 : i32
    %0 = arith.cmpi eq, %arg1, %c0_i32 : i32
    %1 = arith.extui %0 : i1 to i32
    %c0_i32_0 = arith.constant 0 : i32
    %2 = arith.cmpi ne, %1, %c0_i32_0 : i32
    scf.if %2 {
      %c0_48 = arith.constant 0 : index
      %c0_49 = arith.constant 0 : index
      %141 = vector.load %arg2[%c0_48, %c0_49] : memref<128x128xf32, #tpu.memory_space<vmem>>, vector<128x128xf32>
      %142 = arith.truncf %141 : vector<128x128xf32> to vector<128x128xbf16>
      %c0_50 = arith.constant 0 : index
      %c0_51 = arith.constant 0 : index
      %143 = vector.load %arg9[%c0_50, %c0_51] : memref<128x128xbf16, #tpu.memory_space<vmem>>, vector<128x128xbf16>
      tpu.vector_store %arg9[%c0_50, %c0_51], %142 {strides = array<i32>} : memref<128x128xbf16, #tpu.memory_space<vmem>>, vector<128x128xbf16>,
    } else {
    }
    %c0 = arith.constant 0 : index
    %c0_1 = arith.constant 0 : index
    %3 = vector.load %arg9[%c0, %c0_1] : memref<128x128xbf16, #tpu.memory_space<vmem>>, vector<128x128xbf16>
    %4 = arith.extf %3 : vector<128x128xbf16> to vector<128x128xf32>
    %5 = vector.shape_cast %4 : vector<128x128xf32> to vector<1x128x128xf32>
    %c0_2 = arith.constant 0 : index
    %c0_3 = arith.constant 0 : index
    %c0_4 = arith.constant 0 : index
    %6 = vector.load %arg3[%c0_2, %c0_3, %c0_4] : memref<1x128x128xbf16, #tpu.memory_space<vmem>>, vector<1x128x128xbf16>
    %7 = vector.shape_cast %6 : vector<1x128x128xbf16> to vector<128x128xbf16>
    %8 = arith.extf %7 : vector<128x128xbf16> to vector<128x128xf32>
    %9 = vector.shape_cast %8 : vector<128x128xf32> to vector<1x128x128xf32>
    %10 = arith.addf %5, %9 : vector<1x128x128xf32>
    %11 = vector.shape_cast %10 : vector<1x128x128xf32> to vector<128x128xf32>
    %12 = arith.truncf %11 : vector<128x128xf32> to vector<128x128xbf16>
    %c0_5 = arith.constant 0 : index
    %c0_6 = arith.constant 0 : index
    %c0_7 = arith.constant 0 : index
    %13 = vector.load %arg4[%c0_5, %c0_6, %c0_7] : memref<1x128x1024xbf16, #tpu.memory_space<vmem>>, vector<1x128x1024xbf16>
    %14 = vector.shape_cast %13 : vector<1x128x1024xbf16> to vector<128x1024xbf16>
    %cst = arith.constant dense<0.000000e+00> : vector<128x1024xf32>
    %15 = tpu.matmul %12, %14, %cst {dimension_numbers = #tpu.dot_dimension_numbers<[1], [0], [0], [1], [0, 0, 1, 1], [], []>} : vector<128x128xbf16>, vector<128x1024xbf16>, vector<128x1024xf32> -> vector<128x1024xf32>
    %c0_8 = arith.constant 0 : index
    %c0_9 = arith.constant 0 : index
    %c0_10 = arith.constant 0 : index
    %16 = vector.load %arg5[%c0_8, %c0_9, %c0_10] : memref<1x128x512xbf16, #tpu.memory_space<vmem>>, vector<1x128x512xbf16>
    %17 = vector.shape_cast %16 : vector<1x128x512xbf16> to vector<128x512xbf16>
    %cst_11 = arith.constant dense<0.000000e+00> : vector<128x512xf32>
    %18 = tpu.matmul %3, %17, %cst_11 {dimension_numbers = #tpu.dot_dimension_numbers<[1], [0], [0], [1], [0, 0, 1, 1], [], []>} : vector<128x128xbf16>, vector<128x512xbf16>, vector<128x512xf32> -> vector<128x512xf32>
    %19 = tpu.iota {dimensions = array<i32: 2>} : vector<1x1x128xi32>
    %c8_i32 = arith.constant 8 : i32
    %20 = vector.broadcast %c8_i32 : i32 to vector<1x1x128xi32>
    %21 = arith.cmpi slt, %19, %20 : vector<1x1x128xi32>
    %cst_12 = arith.constant 0.000000e+00 : f32
    %cst_13 = arith.constant -1.000000e+30 : f32
    %22 = vector.broadcast %cst_12 : f32 to vector<1x1x128xf32>
    %23 = vector.broadcast %cst_13 : f32 to vector<1x1x128xf32>
    %24 = arith.select %21, %22, %23 : vector<1x1x128xi1>, vector<1x1x128xf32>
    %25 = vector.extract_strided_slice %15 {offsets = [0, 0], sizes = [128, 128], strides = [1, 1]} : vector<128x1024xf32> to vector<128x128xf32>
    %26 = vector.shape_cast %25 : vector<128x128xf32> to vector<1x128x128xf32>
    %27 = vector.extract_strided_slice %15 {offsets = [0, 512], sizes = [128, 128], strides = [1, 1]} : vector<128x1024xf32> to vector<128x128xf32>
    %28 = vector.shape_cast %27 : vector<128x128xf32> to vector<1x128x128xf32>
    %29 = vector.extract_strided_slice %18 {offsets = [0, 0], sizes = [128, 128], strides = [1, 1]} : vector<128x512xf32> to vector<128x128xf32>
    %30 = vector.shape_cast %29 : vector<128x128xf32> to vector<1x128x128xf32>
    "tpu.trace_start"() <{level = 10 : i32, message = "bqk,blk->bql"}> : () -> ()
    %cst_14 = arith.constant dense<0.000000e+00> : vector<1x128x128xf32>
    %31 = tpu.matmul %26, %28, %cst_14 {dimension_numbers = #tpu.dot_dimension_numbers<[2], [2], [1], [1], [0, 0, 0, 1, 1, 1], [0], [0]>} : vector<1x128x128xf32>, vector<1x128x128xf32>, vector<1x128x128xf32> -> vector<1x128x128xf32>
    "tpu.trace_stop"() : () -> ()
    %32 = vector.broadcast %24 : vector<1x1x128xf32> to vector<1x128x128xf32>
    %33 = arith.addf %31, %32 : vector<1x128x128xf32>
    %cst_15 = arith.constant dense<0xFF800000> : vector<1x128xf32>
    %34 = vector.multi_reduction <maximumf>, %33, %cst_15 [2] : vector<1x128x128xf32> to vector<1x128xf32>
    %35 = vector.shape_cast %34 : vector<1x128xf32> to vector<1x128x1xf32>
    %36 = vector.broadcast %35 : vector<1x128x1xf32> to vector<1x128x128xf32>
    %37 = arith.subf %33, %36 : vector<1x128x128xf32>
    %38 = math.exp %37 : vector<1x128x128xf32>
    %cst_16 = arith.constant dense<0.000000e+00> : vector<1x128xf32>
    %39 = vector.multi_reduction <add>, %38, %cst_16 [2] : vector<1x128x128xf32> to vector<1x128xf32>
    %40 = vector.shape_cast %39 : vector<1x128xf32> to vector<1x128x1xf32>
    %41 = tpu.reciprocal %40 {approx = true} : vector<1x128x1xf32> -> vector<1x128x1xf32>
    %42 = vector.broadcast %41 : vector<1x128x1xf32> to vector<1x128x128xf32>
    %43 = arith.mulf %38, %42 : vector<1x128x128xf32>
    %44 = arith.truncf %43 : vector<1x128x128xf32> to vector<1x128x128xbf16>
    %45 = arith.truncf %30 : vector<1x128x128xf32> to vector<1x128x128xbf16>
    "tpu.trace_start"() <{level = 10 : i32, message = "bql,blv->bqv"}> : () -> ()
    %cst_17 = arith.constant dense<0.000000e+00> : vector<1x128x128xf32>
    %46 = tpu.matmul %44, %45, %cst_17 {dimension_numbers = #tpu.dot_dimension_numbers<[2], [1], [1], [2], [0, 0, 0, 1, 1, 2], [0], [0]>} : vector<1x128x128xbf16>, vector<1x128x128xbf16>, vector<1x128x128xf32> -> vector<1x128x128xf32>
    "tpu.trace_stop"() : () -> ()
    %47 = vector.shape_cast %46 : vector<1x128x128xf32> to vector<128x128xf32>
    %48 = arith.truncf %47 : vector<128x128xf32> to vector<128x128xbf16>
    %c0_18 = arith.constant 0 : index
    %c0_19 = arith.constant 0 : index
    %49 = vector.load %arg10[%c0_18, %c0_19] : memref<128x512xbf16, #tpu.memory_space<vmem>>, vector<128x128xbf16>
    tpu.vector_store %arg10[%c0_18, %c0_19], %48 {strides = array<i32>} : memref<128x512xbf16, #tpu.memory_space<vmem>>, vector<128x128xbf16>,
    %50 = vector.extract_strided_slice %15 {offsets = [0, 128], sizes = [128, 128], strides = [1, 1]} : vector<128x1024xf32> to vector<128x128xf32>
    %51 = vector.shape_cast %50 : vector<128x128xf32> to vector<1x128x128xf32>
    %52 = vector.extract_strided_slice %15 {offsets = [0, 640], sizes = [128, 128], strides = [1, 1]} : vector<128x1024xf32> to vector<128x128xf32>
    %53 = vector.shape_cast %52 : vector<128x128xf32> to vector<1x128x128xf32>
    %54 = vector.extract_strided_slice %18 {offsets = [0, 128], sizes = [128, 128], strides = [1, 1]} : vector<128x512xf32> to vector<128x128xf32>
    %55 = vector.shape_cast %54 : vector<128x128xf32> to vector<1x128x128xf32>
    "tpu.trace_start"() <{level = 10 : i32, message = "bqk,blk->bql"}> : () -> ()
    %cst_20 = arith.constant dense<0.000000e+00> : vector<1x128x128xf32>
    %56 = tpu.matmul %51, %53, %cst_20 {dimension_numbers = #tpu.dot_dimension_numbers<[2], [2], [1], [1], [0, 0, 0, 1, 1, 1], [0], [0]>} : vector<1x128x128xf32>, vector<1x128x128xf32>, vector<1x128x128xf32> -> vector<1x128x128xf32>
    "tpu.trace_stop"() : () -> ()
    %57 = vector.broadcast %24 : vector<1x1x128xf32> to vector<1x128x128xf32>
    %58 = arith.addf %56, %57 : vector<1x128x128xf32>
    %cst_21 = arith.constant dense<0xFF800000> : vector<1x128xf32>
    %59 = vector.multi_reduction <maximumf>, %58, %cst_21 [2] : vector<1x128x128xf32> to vector<1x128xf32>
    %60 = vector.shape_cast %59 : vector<1x128xf32> to vector<1x128x1xf32>
    %61 = vector.broadcast %60 : vector<1x128x1xf32> to vector<1x128x128xf32>
    %62 = arith.subf %58, %61 : vector<1x128x128xf32>
    %63 = math.exp %62 : vector<1x128x128xf32>
    %cst_22 = arith.constant dense<0.000000e+00> : vector<1x128xf32>
    %64 = vector.multi_reduction <add>, %63, %cst_22 [2] : vector<1x128x128xf32> to vector<1x128xf32>
    %65 = vector.shape_cast %64 : vector<1x128xf32> to vector<1x128x1xf32>
    %66 = tpu.reciprocal %65 {approx = true} : vector<1x128x1xf32> -> vector<1x128x1xf32>
    %67 = vector.broadcast %66 : vector<1x128x1xf32> to vector<1x128x128xf32>
    %68 = arith.mulf %63, %67 : vector<1x128x128xf32>
    %69 = arith.truncf %68 : vector<1x128x128xf32> to vector<1x128x128xbf16>
    %70 = arith.truncf %55 : vector<1x128x128xf32> to vector<1x128x128xbf16>
    "tpu.trace_start"() <{level = 10 : i32, message = "bql,blv->bqv"}> : () -> ()
    %cst_23 = arith.constant dense<0.000000e+00> : vector<1x128x128xf32>
    %71 = tpu.matmul %69, %70, %cst_23 {dimension_numbers = #tpu.dot_dimension_numbers<[2], [1], [1], [2], [0, 0, 0, 1, 1, 2], [0], [0]>} : vector<1x128x128xbf16>, vector<1x128x128xbf16>, vector<1x128x128xf32> -> vector<1x128x128xf32>
    "tpu.trace_stop"() : () -> ()
    %72 = vector.shape_cast %71 : vector<1x128x128xf32> to vector<128x128xf32>
    %73 = arith.truncf %72 : vector<128x128xf32> to vector<128x128xbf16>
    %c0_24 = arith.constant 0 : index
    %c128 = arith.constant 128 : index
    %74 = vector.load %arg10[%c0_24, %c128] : memref<128x512xbf16, #tpu.memory_space<vmem>>, vector<128x128xbf16>
    tpu.vector_store %arg10[%c0_24, %c128], %73 {strides = array<i32>} : memref<128x512xbf16, #tpu.memory_space<vmem>>, vector<128x128xbf16>,
    %75 = vector.extract_strided_slice %15 {offsets = [0, 256], sizes = [128, 128], strides = [1, 1]} : vector<128x1024xf32> to vector<128x128xf32>
    %76 = vector.shape_cast %75 : vector<128x128xf32> to vector<1x128x128xf32>
    %77 = vector.extract_strided_slice %15 {offsets = [0, 768], sizes = [128, 128], strides = [1, 1]} : vector<128x1024xf32> to vector<128x128xf32>
    %78 = vector.shape_cast %77 : vector<128x128xf32> to vector<1x128x128xf32>
    %79 = vector.extract_strided_slice %18 {offsets = [0, 256], sizes = [128, 128], strides = [1, 1]} : vector<128x512xf32> to vector<128x128xf32>
    %80 = vector.shape_cast %79 : vector<128x128xf32> to vector<1x128x128xf32>
    "tpu.trace_start"() <{level = 10 : i32, message = "bqk,blk->bql"}> : () -> ()
    %cst_25 = arith.constant dense<0.000000e+00> : vector<1x128x128xf32>
    %81 = tpu.matmul %76, %78, %cst_25 {dimension_numbers = #tpu.dot_dimension_numbers<[2], [2], [1], [1], [0, 0, 0, 1, 1, 1], [0], [0]>} : vector<1x128x128xf32>, vector<1x128x128xf32>, vector<1x128x128xf32> -> vector<1x128x128xf32>
    "tpu.trace_stop"() : () -> ()
    %82 = vector.broadcast %24 : vector<1x1x128xf32> to vector<1x128x128xf32>
    %83 = arith.addf %81, %82 : vector<1x128x128xf32>
    %cst_26 = arith.constant dense<0xFF800000> : vector<1x128xf32>
    %84 = vector.multi_reduction <maximumf>, %83, %cst_26 [2] : vector<1x128x128xf32> to vector<1x128xf32>
    %85 = vector.shape_cast %84 : vector<1x128xf32> to vector<1x128x1xf32>
    %86 = vector.broadcast %85 : vector<1x128x1xf32> to vector<1x128x128xf32>
    %87 = arith.subf %83, %86 : vector<1x128x128xf32>
    %88 = math.exp %87 : vector<1x128x128xf32>
    %cst_27 = arith.constant dense<0.000000e+00> : vector<1x128xf32>
    %89 = vector.multi_reduction <add>, %88, %cst_27 [2] : vector<1x128x128xf32> to vector<1x128xf32>
    %90 = vector.shape_cast %89 : vector<1x128xf32> to vector<1x128x1xf32>
    %91 = tpu.reciprocal %90 {approx = true} : vector<1x128x1xf32> -> vector<1x128x1xf32>
    %92 = vector.broadcast %91 : vector<1x128x1xf32> to vector<1x128x128xf32>
    %93 = arith.mulf %88, %92 : vector<1x128x128xf32>
    %94 = arith.truncf %93 : vector<1x128x128xf32> to vector<1x128x128xbf16>
    %95 = arith.truncf %80 : vector<1x128x128xf32> to vector<1x128x128xbf16>
    "tpu.trace_start"() <{level = 10 : i32, message = "bql,blv->bqv"}> : () -> ()
    %cst_28 = arith.constant dense<0.000000e+00> : vector<1x128x128xf32>
    %96 = tpu.matmul %94, %95, %cst_28 {dimension_numbers = #tpu.dot_dimension_numbers<[2], [1], [1], [2], [0, 0, 0, 1, 1, 2], [0], [0]>} : vector<1x128x128xbf16>, vector<1x128x128xbf16>, vector<1x128x128xf32> -> vector<1x128x128xf32>
    "tpu.trace_stop"() : () -> ()
    %97 = vector.shape_cast %96 : vector<1x128x128xf32> to vector<128x128xf32>
    %98 = arith.truncf %97 : vector<128x128xf32> to vector<128x128xbf16>
    %c0_29 = arith.constant 0 : index
    %c256 = arith.constant 256 : index
    %99 = vector.load %arg10[%c0_29, %c256] : memref<128x512xbf16, #tpu.memory_space<vmem>>, vector<128x128xbf16>
    tpu.vector_store %arg10[%c0_29, %c256], %98 {strides = array<i32>} : memref<128x512xbf16, #tpu.memory_space<vmem>>, vector<128x128xbf16>,
    %100 = vector.extract_strided_slice %15 {offsets = [0, 384], sizes = [128, 128], strides = [1, 1]} : vector<128x1024xf32> to vector<128x128xf32>
    %101 = vector.shape_cast %100 : vector<128x128xf32> to vector<1x128x128xf32>
    %102 = vector.extract_strided_slice %15 {offsets = [0, 896], sizes = [128, 128], strides = [1, 1]} : vector<128x1024xf32> to vector<128x128xf32>
    %103 = vector.shape_cast %102 : vector<128x128xf32> to vector<1x128x128xf32>
    %104 = vector.extract_strided_slice %18 {offsets = [0, 384], sizes = [128, 128], strides = [1, 1]} : vector<128x512xf32> to vector<128x128xf32>
    %105 = vector.shape_cast %104 : vector<128x128xf32> to vector<1x128x128xf32>
    "tpu.trace_start"() <{level = 10 : i32, message = "bqk,blk->bql"}> : () -> ()
    %cst_30 = arith.constant dense<0.000000e+00> : vector<1x128x128xf32>
    %106 = tpu.matmul %101, %103, %cst_30 {dimension_numbers = #tpu.dot_dimension_numbers<[2], [2], [1], [1], [0, 0, 0, 1, 1, 1], [0], [0]>} : vector<1x128x128xf32>, vector<1x128x128xf32>, vector<1x128x128xf32> -> vector<1x128x128xf32>
    "tpu.trace_stop"() : () -> ()
    %107 = vector.broadcast %24 : vector<1x1x128xf32> to vector<1x128x128xf32>
    %108 = arith.addf %106, %107 : vector<1x128x128xf32>
    %cst_31 = arith.constant dense<0xFF800000> : vector<1x128xf32>
    %109 = vector.multi_reduction <maximumf>, %108, %cst_31 [2] : vector<1x128x128xf32> to vector<1x128xf32>
    %110 = vector.shape_cast %109 : vector<1x128xf32> to vector<1x128x1xf32>
    %111 = vector.broadcast %110 : vector<1x128x1xf32> to vector<1x128x128xf32>
    %112 = arith.subf %108, %111 : vector<1x128x128xf32>
    %113 = math.exp %112 : vector<1x128x128xf32>
    %cst_32 = arith.constant dense<0.000000e+00> : vector<1x128xf32>
    %114 = vector.multi_reduction <add>, %113, %cst_32 [2] : vector<1x128x128xf32> to vector<1x128xf32>
    %115 = vector.shape_cast %114 : vector<1x128xf32> to vector<1x128x1xf32>
    %116 = tpu.reciprocal %115 {approx = true} : vector<1x128x1xf32> -> vector<1x128x1xf32>
    %117 = vector.broadcast %116 : vector<1x128x1xf32> to vector<1x128x128xf32>
    %118 = arith.mulf %113, %117 : vector<1x128x128xf32>
    %119 = arith.truncf %118 : vector<1x128x128xf32> to vector<1x128x128xbf16>
    %120 = arith.truncf %105 : vector<1x128x128xf32> to vector<1x128x128xbf16>
    "tpu.trace_start"() <{level = 10 : i32, message = "bql,blv->bqv"}> : () -> ()
    %cst_33 = arith.constant dense<0.000000e+00> : vector<1x128x128xf32>
    %121 = tpu.matmul %119, %120, %cst_33 {dimension_numbers = #tpu.dot_dimension_numbers<[2], [1], [1], [2], [0, 0, 0, 1, 1, 2], [0], [0]>} : vector<1x128x128xbf16>, vector<1x128x128xbf16>, vector<1x128x128xf32> -> vector<1x128x128xf32>
    "tpu.trace_stop"() : () -> ()
    %122 = vector.shape_cast %121 : vector<1x128x128xf32> to vector<128x128xf32>
    %123 = arith.truncf %122 : vector<128x128xf32> to vector<128x128xbf16>
    %c0_34 = arith.constant 0 : index
    %c384 = arith.constant 384 : index
    %124 = vector.load %arg10[%c0_34, %c384] : memref<128x512xbf16, #tpu.memory_space<vmem>>, vector<128x128xbf16>
    tpu.vector_store %arg10[%c0_34, %c384], %123 {strides = array<i32>} : memref<128x512xbf16, #tpu.memory_space<vmem>>, vector<128x128xbf16>,
    %c0_35 = arith.constant 0 : index
    %c0_36 = arith.constant 0 : index
    %125 = vector.load %arg10[%c0_35, %c0_36] : memref<128x512xbf16, #tpu.memory_space<vmem>>, vector<128x512xbf16>
    %c0_37 = arith.constant 0 : index
    %c0_38 = arith.constant 0 : index
    %c0_39 = arith.constant 0 : index
    %126 = vector.load %arg6[%c0_37, %c0_38, %c0_39] : memref<1x512x128xbf16, #tpu.memory_space<vmem>>, vector<1x512x128xbf16>
    %127 = vector.shape_cast %126 : vector<1x512x128xbf16> to vector<512x128xbf16>
    %cst_40 = arith.constant dense<0.000000e+00> : vector<128x128xf32>
    %128 = tpu.matmul %125, %127, %cst_40 {dimension_numbers = #tpu.dot_dimension_numbers<[1], [0], [0], [1], [0, 0, 1, 1], [], []>} : vector<128x512xbf16>, vector<512x128xbf16>, vector<128x128xf32> -> vector<128x128xf32>
    %c0_41 = arith.constant 0 : index
    %c0_42 = arith.constant 0 : index
    %c0_43 = arith.constant 0 : index
    %129 = vector.load %arg7[%c0_41, %c0_42, %c0_43] : memref<1x1x128xf32, #tpu.memory_space<vmem>>, vector<1x1x128xf32>
    %130 = vector.shape_cast %129 : vector<1x1x128xf32> to vector<1x128xf32>
    %131 = vector.broadcast %130 : vector<1x128xf32> to vector<128x128xf32>
    %132 = arith.addf %128, %131 : vector<128x128xf32>
    %cst_44 = arith.constant 0.000000e+00 : f32
    %133 = vector.broadcast %cst_44 : f32 to vector<128x128xf32>
    %134 = arith.maximumf %132, %133 : vector<128x128xf32>
    %c1_i32 = arith.constant 1 : i32
    %135 = arith.cmpi slt, %arg1, %c1_i32 : i32
    %136 = arith.extui %135 : i1 to i32
    %c0_i32_45 = arith.constant 0 : i32
    %137 = arith.cmpi ne, %136, %c0_i32_45 : i32
    scf.if %137 {
      %141 = arith.truncf %134 : vector<128x128xf32> to vector<128x128xbf16>
      %c0_48 = arith.constant 0 : index
      %c0_49 = arith.constant 0 : index
      %142 = vector.load %arg9[%c0_48, %c0_49] : memref<128x128xbf16, #tpu.memory_space<vmem>>, vector<128x128xbf16>
      tpu.vector_store %arg9[%c0_48, %c0_49], %141 {strides = array<i32>} : memref<128x128xbf16, #tpu.memory_space<vmem>>, vector<128x128xbf16>,
    } else {
    }
    %c1_i32_46 = arith.constant 1 : i32
    %138 = arith.cmpi eq, %arg1, %c1_i32_46 : i32
    %139 = arith.extui %138 : i1 to i32
    %c0_i32_47 = arith.constant 0 : i32
    %140 = arith.cmpi ne, %139, %c0_i32_47 : i32
    scf.if %140 {
      %c0_48 = arith.constant 0 : index
      %c0_49 = arith.constant 0 : index
      %141 = vector.load %arg8[%c0_48, %c0_49] : memref<128x128xf32, #tpu.memory_space<vmem>>, vector<128x128xf32>
      tpu.vector_store %arg8[%c0_48, %c0_49], %134 {strides = array<i32>} : memref<128x128xf32, #tpu.memory_space<vmem>>, vector<128x128xf32>,
    } else {
    }
    return
  }
  func.func @transform_0(%arg0: i32, %arg1: i32) -> (i32, i32) {
    %c0_i32 = arith.constant 0 : i32
    %c0_i32_0 = arith.constant 0 : i32
    return %arg0, %c0_i32 : i32, i32
  }
  func.func @transform_1(%arg0: i32, %arg1: i32) -> (i32, i32, i32) {
    %c0_i32 = arith.constant 0 : i32
    %c0_i32_0 = arith.constant 0 : i32
    %c0_i32_1 = arith.constant 0 : i32
    return %arg1, %c0_i32, %c0_i32_0 : i32, i32, i32
  }
  func.func @transform_2(%arg0: i32, %arg1: i32) -> (i32, i32, i32) {
    %c0_i32 = arith.constant 0 : i32
    %c0_i32_0 = arith.constant 0 : i32
    %c0_i32_1 = arith.constant 0 : i32
    return %arg1, %c0_i32, %c0_i32_0 : i32, i32, i32
  }
  func.func @transform_3(%arg0: i32, %arg1: i32) -> (i32, i32, i32) {
    %c0_i32 = arith.constant 0 : i32
    %c0_i32_0 = arith.constant 0 : i32
    %c0_i32_1 = arith.constant 0 : i32
    return %arg1, %c0_i32, %c0_i32_0 : i32, i32, i32
  }
  func.func @transform_4(%arg0: i32, %arg1: i32) -> (i32, i32, i32) {
    %c0_i32 = arith.constant 0 : i32
    %c0_i32_0 = arith.constant 0 : i32
    %c0_i32_1 = arith.constant 0 : i32
    return %arg1, %c0_i32, %c0_i32_0 : i32, i32, i32
  }
  func.func @transform_5(%arg0: i32, %arg1: i32) -> (i32, i32, i32) {
    %c0_i32 = arith.constant 0 : i32
    %c0_i32_0 = arith.constant 0 : i32
    %c0_i32_1 = arith.constant 0 : i32
    return %arg1, %c0_i32, %c0_i32_0 : i32, i32, i32
  }
  func.func @transform_6(%arg0: i32, %arg1: i32) -> (i32, i32) {
    %c0_i32 = arith.constant 0 : i32
    %c0_i32_0 = arith.constant 0 : i32
    return %arg0, %c0_i32 : i32, i32
  }
}

</mosaic_0001>

<llo_original>
// kernel: tpu_custom_call.1
$region0: #{tpu_custom_call.1}
  #allocation0 [shape = 'u32[]', space=smem, size = 0x4, offset = 0x4, fixed_abs, tag = 'smem constant byte address 0x4 - core index']
  #allocation1 [shape = 'u32[144,128]{1,0:T(1,128)}', space=vmem, size = 0x12000, scoped, tag = 'internal scratch']
  #allocation2 [shape = 'bf16[128,128]{1,0:T(16,128)(2,1)}', space=vmem, size = 0x8000, scoped, tag = 'scratch operand']
  #allocation3 [shape = 'bf16[128,512]{1,0:T(16,128)(2,1)}', space=vmem, size = 0x20000, scoped, tag = 'scratch operand']
  %s0 = inlined_call_operand.hbm [shape: f32[256,128], index: 0, kind: input, shape index: {}]
  %s1 = inlined_call_operand.hbm [shape: bf16[2,128,128], index: 1, kind: input, shape index: {}]
  %s2 = inlined_call_operand.hbm [shape: bf16[2,128,1024], index: 2, kind: input, shape index: {}]
  %s3 = inlined_call_operand.hbm [shape: bf16[2,128,512], index: 3, kind: input, shape index: {}]
  %s4 = inlined_call_operand.hbm [shape: bf16[2,512,128], index: 4, kind: input, shape index: {}]
  %s5 = inlined_call_operand.vmem [shape: f32[2,1,128], index: 5, kind: input, shape index: {}]
  %s6 = inlined_call_operand.hbm [shape: f32[256,128], index: 6, kind: output, shape index: {}]
  %s7 = sld [smem:[#allocation0]]
  $region89: #{tpu_custom_call.1} parent=0
    _
  %s9 = ssub.s32 1, %s7
  %s10 = scalar_select 0, %s9, %s7
  $region1: #{tpu_custom_call.1} parent=0
    #allocation4 [shape = 'u8[131072]{0}', space=vmem, size = 0x20000, scoped, tag = 'input window, operand 0']
    #allocation5 [shape = 's32[2]{0}', space=sflag, size = 0x8, scoped, tag = 'scoped memory for tpu_custom_call.1']
    #allocation6 [shape = 's32[2]{0}', space=sflag, size = 0x8, scoped, tag = 'scoped memory for tpu_custom_call.1']
    #allocation7 [shape = 'u8[65536]{0}', space=vmem, size = 0x10000, scoped, tag = 'input window, operand 1']
    #allocation8 [shape = 's32[2]{0}', space=sflag, size = 0x8, scoped, tag = 'scoped memory for tpu_custom_call.1']
    #allocation9 [shape = 'u8[524288]{0}', space=vmem, size = 0x80000, scoped, tag = 'input window, operand 2']
    #allocation10 [shape = 'u8[262144]{0}', space=vmem, size = 0x40000, scoped, tag = 'input window, operand 3']
    #allocation11 [shape = 's32[2]{0}', space=sflag, size = 0x8, scoped, tag = 'scoped memory for tpu_custom_call.1']
    #allocation12 [shape = 'u8[262144]{0}', space=vmem, size = 0x40000, scoped, tag = 'input window, operand 4']
    #allocation13 [shape = 'u8[131072]{0}', space=vmem, size = 0x20000, scoped, tag = 'output window, operand 0']
    %11 = vsyncpa [#allocation5], 0
    %s12 = scalar_lea.sflag [#allocation5], 1
    %13 = vsyncpa %s12, 0
    %14 = vsyncpa [#allocation8], 0
    %s15 = scalar_lea.sflag [#allocation8], 1
    %16 = vsyncpa %s15, 0
    %17 = vsyncpa [#allocation11], 0
    %s18 = scalar_lea.sflag [#allocation11], 1
    %19 = vsyncpa %s18, 0
    %20 = vsyncpa [#allocation6], 0
    %s21 = scalar_lea.sflag [#allocation6], 1
    %22 = vsyncpa %s21, 0
    loop: start=0, step=1, limit=6
    $region2: #{tpu_custom_call.1} parent=1 // loop_pre_header
      _
    $region3: #{tpu_custom_call.1} parent=1 // loop_header
      %s24 = sphi 0, %s28
      %p25 = scmp.ge.s32.totalorder %s24, 6
      %s31 = sphi 0, %s43
      %s32 = sphi 0, %s39
      %s33 = sphi 0, %s31
      %s34 = sphi 0, %s32
      %s35 = sphi 0, %s33
      %s36 = sphi 0, %s34
      %s46 = sphi 0, %s48
      %s49 = sphi 0, %s46
      %s50 = sphi 0, %s49
      %s66 = sphi 0, %s50
      %s72 = sphi 0, %s74
      %s75 = sphi 0, %s72
      %s76 = sphi 0, %s75
      %s92 = sphi 0, %s76
      %s98 = sphi 0, %s100
      %s101 = sphi 0, %s98
      %s102 = sphi 0, %s101
      %s118 = sphi 0, %s102
      %s124 = sphi 0, %s126
      %s127 = sphi 0, %s124
      %s128 = sphi 0, %s127
      %s144 = sphi 0, %s128
      %s150 = sphi 0, %s152
      %s153 = sphi 0, %s150
      %s154 = sphi 0, %s153
      %s170 = sphi 0, %s154
      %s176 = sphi 0, %s178
      %s179 = sphi 0, %s176
      %s180 = sphi 0, %s179
      %s196 = sphi 0, %s180
      %s202 = sphi 0, %s204
      %s205 = sphi 0, %s202
      %s206 = sphi 0, %s205
      %s222 = sphi 0, %s206
    $region4: #{tpu_custom_call.1} parent=1 // loop_header_branch
      %27 = sbr.rel (%p25) target = $region8
    $region5: #{tpu_custom_call.1} parent=1 // loop_body
      %s29 = ssub.s32 %s24, 1
      %s30 = ssub.s32 %s24, 2
      %s37 = sadd.s32 1, %s32
      %p38 = scmp.ge.s32.totalorder %s37, 2
      %s39 = scalar_select %p38, 0, %s37
      %s40 = sadd.s32 1, %s31
      %s41 = scalar_select %p38, %s40, %s31
      %p42 = scmp.ge.s32.totalorder %s41, 2
      %s43 = scalar_select %p42, 0, %s41
      %s44 = ssub.s32 %s31, %s43
      %p45 = scmp.eq.s32.totalorder %s44, 0
      %s47 = sadd.s32 %s46, 1
      %s48 = scalar_select %p45, %s46, %s47
      %p51 = pneg %p45
      %p52 = scmp.eq.s32.totalorder %s24, 3
      %p53 = por %p51, %p52
      %p54 = scmp.ne.s32.totalorder %s46, %s49
      %p55 = scmp.eq.s32.totalorder %s24, 0
      %p56 = por %p54, %p55
      %p57 = scmp.ne.s32.totalorder %s46, %s49
      %p58 = scmp.eq.s32.totalorder %s29, 3
      %p59 = por %p57, %p58
      %p60 = scmp.ne.s32.totalorder %s49, %s50
      %p61 = scmp.eq.s32.totalorder %s29, 0
      %p62 = por %p60, %p61
      %p63 = scmp.ne.s32.totalorder %s49, %s50
      %p64 = scmp.eq.s32.totalorder %s30, 3
      %p65 = por %p63, %p64
      %p67 = scmp.ne.s32.totalorder %s50, %s66
      %p68 = scmp.eq.s32.totalorder %s30, 0
      %p69 = por %p67, %p68
      %s70 = ssub.s32 %s32, %s39
      %p71 = scmp.eq.s32.totalorder %s70, 0
      %s73 = sadd.s32 %s72, 1
      %s74 = scalar_select %p71, %s72, %s73
      %p77 = pneg %p71
      %p78 = scmp.eq.s32.totalorder %s24, 3
      %p79 = por %p77, %p78
      %p80 = scmp.ne.s32.totalorder %s72, %s75
      %p81 = scmp.eq.s32.totalorder %s24, 0
      %p82 = por %p80, %p81
      %p83 = scmp.ne.s32.totalorder %s72, %s75
      %p84 = scmp.eq.s32.totalorder %s29, 3
      %p85 = por %p83, %p84
      %p86 = scmp.ne.s32.totalorder %s75, %s76
      %p87 = scmp.eq.s32.totalorder %s29, 0
      %p88 = por %p86, %p87
      %p89 = scmp.ne.s32.totalorder %s75, %s76
      %p90 = scmp.eq.s32.totalorder %s30, 3
      %p91 = por %p89, %p90
      %p93 = scmp.ne.s32.totalorder %s76, %s92
      %p94 = scmp.eq.s32.totalorder %s30, 0
      %p95 = por %p93, %p94
      %s96 = ssub.s32 %s32, %s39
      %p97 = scmp.eq.s32.totalorder %s96, 0
      %s99 = sadd.s32 %s98, 1
      %s100 = scalar_select %p97, %s98, %s99
      %p103 = pneg %p97
      %p104 = scmp.eq.s32.totalorder %s24, 3
      %p105 = por %p103, %p104
      %p106 = scmp.ne.s32.totalorder %s98, %s101
      %p107 = scmp.eq.s32.totalorder %s24, 0
      %p108 = por %p106, %p107
      %p109 = scmp.ne.s32.totalorder %s98, %s101
      %p110 = scmp.eq.s32.totalorder %s29, 3
      %p111 = por %p109, %p110
      %p112 = scmp.ne.s32.totalorder %s101, %s102
      %p113 = scmp.eq.s32.totalorder %s29, 0
      %p114 = por %p112, %p113
      %p115 = scmp.ne.s32.totalorder %s101, %s102
      %p116 = scmp.eq.s32.totalorder %s30, 3
      %p117 = por %p115, %p116
      %p119 = scmp.ne.s32.totalorder %s102, %s118
      %p120 = scmp.eq.s32.totalorder %s30, 0
      %p121 = por %p119, %p120
      %s122 = ssub.s32 %s32, %s39
      %p123 = scmp.eq.s32.totalorder %s122, 0
      %s125 = sadd.s32 %s124, 1
      %s126 = scalar_select %p123, %s124, %s125
      %p129 = pneg %p123
      %p130 = scmp.eq.s32.totalorder %s24, 3
      %p131 = por %p129, %p130
      %p132 = scmp.ne.s32.totalorder %s124, %s127
      %p133 = scmp.eq.s32.totalorder %s24, 0
      %p134 = por %p132, %p133
      %p135 = scmp.ne.s32.totalorder %s124, %s127
      %p136 = scmp.eq.s32.totalorder %s29, 3
      %p137 = por %p135, %p136
      %p138 = scmp.ne.s32.totalorder %s127, %s128
      %p139 = scmp.eq.s32.totalorder %s29, 0
      %p140 = por %p138, %p139
      %p141 = scmp.ne.s32.totalorder %s127, %s128
      %p142 = scmp.eq.s32.totalorder %s30, 3
      %p143 = por %p141, %p142
      %p145 = scmp.ne.s32.totalorder %s128, %s144
      %p146 = scmp.eq.s32.totalorder %s30, 0
      %p147 = por %p145, %p146
      %s148 = ssub.s32 %s32, %s39
      %p149 = scmp.eq.s32.totalorder %s148, 0
      %s151 = sadd.s32 %s150, 1
      %s152 = scalar_select %p149, %s150, %s151
      %p155 = pneg %p149
      %p156 = scmp.eq.s32.totalorder %s24, 3
      %p157 = por %p155, %p156
      %p158 = scmp.ne.s32.totalorder %s150, %s153
      %p159 = scmp.eq.s32.totalorder %s24, 0
      %p160 = por %p158, %p159
      %p161 = scmp.ne.s32.totalorder %s150, %s153
      %p162 = scmp.eq.s32.totalorder %s29, 3
      %p163 = por %p161, %p162
      %p164 = scmp.ne.s32.totalorder %s153, %s154
      %p165 = scmp.eq.s32.totalorder %s29, 0
      %p166 = por %p164, %p165
      %p167 = scmp.ne.s32.totalorder %s153, %s154
      %p168 = scmp.eq.s32.totalorder %s30, 3
      %p169 = por %p167, %p168
      %p171 = scmp.ne.s32.totalorder %s154, %s170
      %p172 = scmp.eq.s32.totalorder %s30, 0
      %p173 = por %p171, %p172
      %s174 = ssub.s32 %s32, %s39
      %p175 = scmp.eq.s32.totalorder %s174, 0
      %s177 = sadd.s32 %s176, 1
      %s178 = scalar_select %p175, %s176, %s177
      %p181 = pneg %p175
      %p182 = scmp.eq.s32.totalorder %s24, 3
      %p183 = por %p181, %p182
      %p184 = scmp.ne.s32.totalorder %s176, %s179
      %p185 = scmp.eq.s32.totalorder %s24, 0
      %p186 = por %p184, %p185
      %p187 = scmp.ne.s32.totalorder %s176, %s179
      %p188 = scmp.eq.s32.totalorder %s29, 3
      %p189 = por %p187, %p188
      %p190 = scmp.ne.s32.totalorder %s179, %s180
      %p191 = scmp.eq.s32.totalorder %s29, 0
      %p192 = por %p190, %p191
      %p193 = scmp.ne.s32.totalorder %s179, %s180
      %p194 = scmp.eq.s32.totalorder %s30, 3
      %p195 = por %p193, %p194
      %p197 = scmp.ne.s32.totalorder %s180, %s196
      %p198 = scmp.eq.s32.totalorder %s30, 0
      %p199 = por %p197, %p198
      %s200 = ssub.s32 %s31, %s43
      %p201 = scmp.eq.s32.totalorder %s200, 0
      %s203 = sadd.s32 %s202, 1
      %s204 = scalar_select %p201, %s202, %s203
      %p207 = pneg %p201
      %p208 = scmp.eq.s32.totalorder %s24, 3
      %p209 = por %p207, %p208
      %p210 = scmp.ne.s32.totalorder %s202, %s205
      %p211 = scmp.eq.s32.totalorder %s24, 0
      %p212 = por %p210, %p211
      %p213 = scmp.ne.s32.totalorder %s202, %s205
      %p214 = scmp.eq.s32.totalorder %s29, 3
      %p215 = por %p213, %p214
      %p216 = scmp.ne.s32.totalorder %s205, %s206
      %p217 = scmp.eq.s32.totalorder %s29, 0
      %p218 = por %p216, %p217
      %p219 = scmp.ne.s32.totalorder %s205, %s206
      %p220 = scmp.eq.s32.totalorder %s30, 3
      %p221 = por %p219, %p220
      %p223 = scmp.ne.s32.totalorder %s206, %s222
      %p224 = scmp.eq.s32.totalorder %s30, 0
      %p225 = por %p223, %p224
      %p226 = scmp.le.s32.totalorder 1, %s24
      %p227 = scmp.lt.s32.totalorder %s24, 5
      %p228 = pnand %p226, %p227
      %p229 = pneg %p228
      // Predicated region
      $region9: #{tpu_custom_call.1} parent=5 // pred_check
        _
      $region10: #{tpu_custom_call.1} parent=5 // pred_check_branch
        %231 = sbr.rel (%p228) target = $region12
      $region11: #{tpu_custom_call.1} parent=5 // pred_region
        %s232 = ssub.s32 %s24, 1
      $region12: #{tpu_custom_call.1} parent=5 // pred_fallthru
        _
      %p233 = scmp.lt.s32.totalorder %s24, 4
      // Predicated region
      $region13: #{tpu_custom_call.1} parent=5 // pred_check
        %p234 = pneg %p233
      $region14: #{tpu_custom_call.1} parent=5 // pred_check_branch
        %236 = sbr.rel (%p234) target = $region16
      $region15: #{tpu_custom_call.1} parent=5 // pred_region
        // Predicated region
        $region17: #{tpu_custom_call.1} parent=15 // pred_check
          %p237 = pneg %p56
        $region18: #{tpu_custom_call.1} parent=15 // pred_check_branch
          %239 = sbr.rel (%p237) target = $region20
        $region19: #{tpu_custom_call.1} parent=15 // pred_region
          %s240 = sand.u32 %s46, 1
          %s241 = scalar_lea.sflag [#allocation5], %s240
          %s242 = sand.u32 %s46, 1
          %s243 = smul.addr %s242, 128
          %s244 = scalar_lea.vmem [#allocation4], %s243
          %s245 = smul.u32 16, %s31
          %s247 = ssub.s32 2048, 2048
          %248 = vsyncadd %s241, %s247
          %s249 = smul.addr %s245, 128
          %s250 = scalar_lea.hbm %s0, %s249
          %s251 = sshll.u32 %s244, 4
          %s252 = int_to_ptr.vmem [resolvable:$true] %s251
          %257 = dma.hbm_to_vmem [thread:$0]  %s250, 2048, %s252, %s241, 128, 128, 8
        $region20: #{tpu_custom_call.1} parent=15 // pred_fallthru
          _
        // Predicated region
        $region21: #{tpu_custom_call.1} parent=15 // pred_check
          %p258 = pneg %p82
        $region22: #{tpu_custom_call.1} parent=15 // pred_check_branch
          %260 = sbr.rel (%p258) target = $region24
        $region23: #{tpu_custom_call.1} parent=15 // pred_region
          %s261 = sand.u32 %s24, 1
          %s262 = scalar_lea.sflag [#allocation8], %s261
          %s263 = sand.u32 %s72, 1
          %s264 = smul.addr %s263, 64
          %s265 = scalar_lea.vmem [#allocation7], %s264
          %s267 = ssub.s32 1024, 1024
          %268 = vsyncadd %s262, %s267
          %s269 = smul.addr %s32, 16
          %s270 = smul.addr %s269, 64
          %s271 = scalar_lea.hbm %s1, %s270
          %s272 = sshll.u32 %s265, 4
          %s273 = int_to_ptr.vmem [resolvable:$true] %s272
          %278 = dma.hbm_to_vmem [thread:$0]  %s271, 1024, %s273, %s262, 64, 64, 4
        $region24: #{tpu_custom_call.1} parent=15 // pred_fallthru
          _
        // Predicated region
        $region25: #{tpu_custom_call.1} parent=15 // pred_check
          %p279 = pneg %p108
        $region26: #{tpu_custom_call.1} parent=15 // pred_check_branch
          %281 = sbr.rel (%p279) target = $region28
        $region27: #{tpu_custom_call.1} parent=15 // pred_region
          %s282 = sand.u32 %s24, 1
          %s283 = scalar_lea.sflag [#allocation8], %s282
          %s284 = sand.u32 %s98, 1
          %s285 = smul.addr %s284, 512
          %s286 = scalar_lea.vmem [#allocation9], %s285
          %s288 = ssub.s32 8192, 8192
          %289 = vsyncadd %s283, %s288
          %s290 = smul.addr %s32, 128
          %s291 = smul.addr %s290, 64
          %s292 = scalar_lea.hbm %s2, %s291
          %s293 = sshll.u32 %s286, 4
          %s294 = int_to_ptr.vmem [resolvable:$true] %s293
          %299 = dma.hbm_to_vmem [thread:$0]  %s292, 8192, %s294, %s283, 512, 512, 32
        $region28: #{tpu_custom_call.1} parent=15 // pred_fallthru
          _
        // Predicated region
        $region29: #{tpu_custom_call.1} parent=15 // pred_check
          %p300 = pneg %p134
        $region30: #{tpu_custom_call.1} parent=15 // pred_check_branch
          %302 = sbr.rel (%p300) target = $region32
        $region31: #{tpu_custom_call.1} parent=15 // pred_region
          %s303 = sand.u32 %s24, 1
          %s304 = scalar_lea.sflag [#allocation11], %s303
          %s305 = sand.u32 %s124, 1
          %s306 = smul.addr %s305, 256
          %s307 = scalar_lea.vmem [#allocation10], %s306
          %s309 = ssub.s32 4096, 4096
          %310 = vsyncadd %s304, %s309
          %s311 = smul.addr %s32, 64
          %s312 = smul.addr %s311, 64
          %s313 = scalar_lea.hbm %s3, %s312
          %s314 = sshll.u32 %s307, 4
          %s315 = int_to_ptr.vmem [resolvable:$true] %s314
          %320 = dma.hbm_to_vmem [thread:$0]  %s313, 4096, %s315, %s304, 256, 256, 16
        $region32: #{tpu_custom_call.1} parent=15 // pred_fallthru
          _
        // Predicated region
        $region33: #{tpu_custom_call.1} parent=15 // pred_check
          %p321 = pneg %p160
        $region34: #{tpu_custom_call.1} parent=15 // pred_check_branch
          %323 = sbr.rel (%p321) target = $region36
        $region35: #{tpu_custom_call.1} parent=15 // pred_region
          %s324 = sand.u32 %s24, 1
          %s325 = scalar_lea.sflag [#allocation11], %s324
          %s326 = sand.u32 %s150, 1
          %s327 = smul.addr %s326, 256
          %s328 = scalar_lea.vmem [#allocation12], %s327
          %s330 = ssub.s32 4096, 4096
          %331 = vsyncadd %s325, %s330
          %s332 = smul.addr %s32, 64
          %s333 = smul.addr %s332, 64
          %s334 = scalar_lea.hbm %s4, %s333
          %s335 = sshll.u32 %s328, 4
          %s336 = int_to_ptr.vmem [resolvable:$true] %s335
          %341 = dma.hbm_to_vmem [thread:$0]  %s334, 4096, %s336, %s325, 64, 64, 4
        $region36: #{tpu_custom_call.1} parent=15 // pred_fallthru
          _
        // Predicated region
        $region37: #{tpu_custom_call.1} parent=15 // pred_check
          %p342 = pneg %p186
        $region38: #{tpu_custom_call.1} parent=15 // pred_check_branch
          %344 = sbr.rel (%p342) target = $region40
        $region39: #{tpu_custom_call.1} parent=15 // pred_region
          %p345 = scmp.lt.s32.totalorder %s32, 1
          %s346 = scalar_select %p345, %s32, 1
          %s347 = scalar_lea.vmem %s5, %s346
        $region40: #{tpu_custom_call.1} parent=15 // pred_fallthru
          _
      $region16: #{tpu_custom_call.1} parent=5 // pred_fallthru
        _
      %p348 = scmp.le.s32.totalorder 1, %s24
      %p349 = scmp.lt.s32.totalorder %s24, 5
      %p350 = pnand %p348, %p349
      %p351 = pneg %p350
      // Predicated region
      $region41: #{tpu_custom_call.1} parent=5 // pred_check
        _
      $region42: #{tpu_custom_call.1} parent=5 // pred_check_branch
        %353 = sbr.rel (%p350) target = $region44
      $region43: #{tpu_custom_call.1} parent=5 // pred_region
        %s354 = ssub.s32 %s24, 1
        %s355 = sand.u32 %s49, 1
        %s356 = scalar_lea.sflag [#allocation5], %s355
        %s357 = sand.u32 %s49, 1
        %s358 = smul.addr %s357, 128
        %s359 = scalar_lea.vmem [#allocation4], %s358
        // Predicated region
        $region45: #{tpu_custom_call.1} parent=43 // pred_check
          %p360 = pneg %p62
        $region46: #{tpu_custom_call.1} parent=43 // pred_check_branch
          %362 = sbr.rel (%p360) target = $region48
        $region47: #{tpu_custom_call.1} parent=43 // pred_region
          %363 = dma.done %s356, 2048
        $region48: #{tpu_custom_call.1} parent=43 // pred_fallthru
          _
        %s364 = sand.u32 %s29, 1
        %s365 = scalar_lea.sflag [#allocation8], %s364
        %s366 = sand.u32 %s75, 1
        %s367 = smul.addr %s366, 64
        %s368 = scalar_lea.vmem [#allocation7], %s367
        // Predicated region
        $region49: #{tpu_custom_call.1} parent=43 // pred_check
          %p369 = pneg %p88
        $region50: #{tpu_custom_call.1} parent=43 // pred_check_branch
          %371 = sbr.rel (%p369) target = $region52
        $region51: #{tpu_custom_call.1} parent=43 // pred_region
          %372 = dma.done %s365, 1024
        $region52: #{tpu_custom_call.1} parent=43 // pred_fallthru
          _
        %s373 = sand.u32 %s29, 1
        %s374 = scalar_lea.sflag [#allocation8], %s373
        %s375 = sand.u32 %s101, 1
        %s376 = smul.addr %s375, 512
        %s377 = scalar_lea.vmem [#allocation9], %s376
        // Predicated region
        $region53: #{tpu_custom_call.1} parent=43 // pred_check
          %p378 = pneg %p114
        $region54: #{tpu_custom_call.1} parent=43 // pred_check_branch
          %380 = sbr.rel (%p378) target = $region56
        $region55: #{tpu_custom_call.1} parent=43 // pred_region
          %381 = dma.done %s374, 8192
        $region56: #{tpu_custom_call.1} parent=43 // pred_fallthru
          _
        %s382 = sand.u32 %s29, 1
        %s383 = scalar_lea.sflag [#allocation11], %s382
        %s384 = sand.u32 %s127, 1
        %s385 = smul.addr %s384, 256
        %s386 = scalar_lea.vmem [#allocation10], %s385
        // Predicated region
        $region57: #{tpu_custom_call.1} parent=43 // pred_check
          %p387 = pneg %p140
        $region58: #{tpu_custom_call.1} parent=43 // pred_check_branch
          %389 = sbr.rel (%p387) target = $region60
        $region59: #{tpu_custom_call.1} parent=43 // pred_region
          %390 = dma.done %s383, 4096
        $region60: #{tpu_custom_call.1} parent=43 // pred_fallthru
          _
        %s391 = sand.u32 %s29, 1
        %s392 = scalar_lea.sflag [#allocation11], %s391
        %s393 = sand.u32 %s153, 1
        %s394 = smul.addr %s393, 256
        %s395 = scalar_lea.vmem [#allocation12], %s394
        // Predicated region
        $region61: #{tpu_custom_call.1} parent=43 // pred_check
          %p396 = pneg %p166
        $region62: #{tpu_custom_call.1} parent=43 // pred_check_branch
          %398 = sbr.rel (%p396) target = $region64
        $region63: #{tpu_custom_call.1} parent=43 // pred_region
          %399 = dma.done %s392, 4096
        $region64: #{tpu_custom_call.1} parent=43 // pred_fallthru
          _
        %s400 = sand.u32 %s49, 1
        %s401 = scalar_lea.sflag [#allocation5], %s400
        %s402 = sand.u32 %s49, 1
        %s403 = smul.addr %s402, 128
        %s404 = scalar_lea.vmem [#allocation4], %s403
        %p405 = pneg %p62
        %p406 = pneg %p59
        %s407 = sand.u32 %s29, 1
        %s408 = scalar_lea.sflag [#allocation8], %s407
        %s409 = sand.u32 %s75, 1
        %s410 = smul.addr %s409, 64
        %s411 = scalar_lea.vmem [#allocation7], %s410
        %p412 = pneg %p88
        %p413 = pneg %p85
        %s414 = sand.u32 %s29, 1
        %s415 = scalar_lea.sflag [#allocation8], %s414
        %s416 = sand.u32 %s101, 1
        %s417 = smul.addr %s416, 512
        %s418 = scalar_lea.vmem [#allocation9], %s417
        %p419 = pneg %p114
        %p420 = pneg %p111
        %s421 = sand.u32 %s29, 1
        %s422 = scalar_lea.sflag [#allocation11], %s421
        %s423 = sand.u32 %s127, 1
        %s424 = smul.addr %s423, 256
        %s425 = scalar_lea.vmem [#allocation10], %s424
        %p426 = pneg %p140
        %p427 = pneg %p137
        %s428 = sand.u32 %s29, 1
        %s429 = scalar_lea.sflag [#allocation11], %s428
        %s430 = sand.u32 %s153, 1
        %s431 = smul.addr %s430, 256
        %s432 = scalar_lea.vmem [#allocation12], %s431
        %p433 = pneg %p166
        %p434 = pneg %p163
        %p435 = scmp.lt.s32.totalorder %s34, 1
        %s436 = scalar_select %p435, %s34, 1
        %s437 = scalar_lea.vmem %s5, %s436
        %p438 = pneg %p192
        %p439 = pneg %p189
        %p440 = pneg %p218
        %p441 = pneg %p215
        %s442 = sand.u32 %s205, 1
        %s443 = scalar_lea.sflag [#allocation6], %s442
        %s444 = sand.u32 %s205, 1
        %s445 = smul.addr %s444, 128
        %s446 = scalar_lea.vmem [#allocation13], %s445
        %s447 = smul.u32 16, %s33
        %p448 = scmp.lt.s32.totalorder %s34, 1
        %s449 = scalar_select %p448, %s34, 1
        %s450 = scalar_lea.vmem %s5, %s449
        %s451 = smul.u32 16, %s33
        %p453 = scmp.eq.s32.totalorder %s34, 0
        // Predicated region
        $region65: #{tpu_custom_call.1} parent=43 // pred_check
          %p454 = pneg %p453
        $region66: #{tpu_custom_call.1} parent=43 // pred_check_branch
          %456 = sbr.rel (%p454) target = $region68
        $region67: #{tpu_custom_call.1} parent=43 // pred_region
          %v457 = vld [vmem:[%s359] sm:$0xff]
          %v458 = vld [vmem:[%s359 + $0x8] sm:$0xff]
          %v459 = vld [vmem:[%s359 + $0x10] sm:$0xff]
          %v460 = vld [vmem:[%s359 + $0x18] sm:$0xff]
          %v461 = vld [vmem:[%s359 + $0x20] sm:$0xff]
          %v462 = vld [vmem:[%s359 + $0x28] sm:$0xff]
          %v463 = vld [vmem:[%s359 + $0x30] sm:$0xff]
          %v464 = vld [vmem:[%s359 + $0x38] sm:$0xff]
          %v465 = vld [vmem:[%s359 + $0x40] sm:$0xff]
          %v466 = vld [vmem:[%s359 + $0x48] sm:$0xff]
          %v467 = vld [vmem:[%s359 + $0x50] sm:$0xff]
          %v468 = vld [vmem:[%s359 + $0x58] sm:$0xff]
          %v469 = vld [vmem:[%s359 + $0x60] sm:$0xff]
          %v470 = vld [vmem:[%s359 + $0x68] sm:$0xff]
          %v471 = vld [vmem:[%s359 + $0x70] sm:$0xff]
          %v472 = vld [vmem:[%s359 + $0x78] sm:$0xff]
          %v473 = vpack.c.bf16 %v458, %v457
          %v474 = vpack.c.bf16 %v460, %v459
          %v475 = vpack.c.bf16 %v462, %v461
          %v476 = vpack.c.bf16 %v464, %v463
          %v477 = vpack.c.bf16 %v466, %v465
          %v478 = vpack.c.bf16 %v468, %v467
          %v479 = vpack.c.bf16 %v470, %v469
          %v480 = vpack.c.bf16 %v472, %v471
          %481 = vst [vmem:[#allocation2] sm:$0xff] %v473
          %482 = vst [vmem:[#allocation2 + $0x8] sm:$0xff] %v474
          %483 = vst [vmem:[#allocation2 + $0x10] sm:$0xff] %v475
          %484 = vst [vmem:[#allocation2 + $0x18] sm:$0xff] %v476
          %485 = vst [vmem:[#allocation2 + $0x20] sm:$0xff] %v477
          %486 = vst [vmem:[#allocation2 + $0x28] sm:$0xff] %v478
          %487 = vst [vmem:[#allocation2 + $0x30] sm:$0xff] %v479
          %488 = vst [vmem:[#allocation2 + $0x38] sm:$0xff] %v480
        $region68: #{tpu_custom_call.1} parent=43 // pred_fallthru
          _
        %v489 = vld [vmem:[#allocation2] sm:$0xff]
        %v490 = vld [vmem:[#allocation2 + $0x8] sm:$0xff]
        %v491 = vld [vmem:[#allocation2 + $0x10] sm:$0xff]
        %v492 = vld [vmem:[#allocation2 + $0x18] sm:$0xff]
        %v493 = vld [vmem:[#allocation2 + $0x20] sm:$0xff]
        %v494 = vld [vmem:[#allocation2 + $0x28] sm:$0xff]
        %v495 = vld [vmem:[#allocation2 + $0x30] sm:$0xff]
        %v496 = vld [vmem:[#allocation2 + $0x38] sm:$0xff]
        %v497 = vunpack.c.l.bf16 %v489
        %v498 = vunpack.c.h.bf16 %v489
        %v499 = vunpack.c.l.bf16 %v490
        %v500 = vunpack.c.h.bf16 %v490
        %v501 = vunpack.c.l.bf16 %v491
        %v502 = vunpack.c.h.bf16 %v491
        %v503 = vunpack.c.l.bf16 %v492
        %v504 = vunpack.c.h.bf16 %v492
        %v505 = vunpack.c.l.bf16 %v493
        %v506 = vunpack.c.h.bf16 %v493
        %v507 = vunpack.c.l.bf16 %v494
        %v508 = vunpack.c.h.bf16 %v494
        %v509 = vunpack.c.l.bf16 %v495
        %v510 = vunpack.c.h.bf16 %v495
        %v511 = vunpack.c.l.bf16 %v496
        %v512 = vunpack.c.h.bf16 %v496
        %v513 = vld [vmem:[%s368] sm:$0xf]
        %v514 = vld [vmem:[%s368 + $0x4] sm:$0xf]
        %v515 = vld [vmem:[%s368 + $0x8] sm:$0xf]
        %v516 = vld [vmem:[%s368 + $0xc] sm:$0xf]
        %v517 = vld [vmem:[%s368 + $0x10] sm:$0xf]
        %v518 = vld [vmem:[%s368 + $0x14] sm:$0xf]
        %v519 = vld [vmem:[%s368 + $0x18] sm:$0xf]
        %v520 = vld [vmem:[%s368 + $0x1c] sm:$0xf]
        %v521 = vld [vmem:[%s368 + $0x20] sm:$0xf]
        %v522 = vld [vmem:[%s368 + $0x24] sm:$0xf]
        %v523 = vld [vmem:[%s368 + $0x28] sm:$0xf]
        %v524 = vld [vmem:[%s368 + $0x2c] sm:$0xf]
        %v525 = vld [vmem:[%s368 + $0x30] sm:$0xf]
        %v526 = vld [vmem:[%s368 + $0x34] sm:$0xf]
        %v527 = vld [vmem:[%s368 + $0x38] sm:$0xf]
        %v528 = vld [vmem:[%s368 + $0x3c] sm:$0xf]
        %v529 = vunpack.c.l.bf16 %v513
        %v530 = vunpack.c.l.bf16 %v514
        %v531 = vunpack.c.l.bf16 %v515
        %v532 = vunpack.c.l.bf16 %v516
        %v533 = vunpack.c.l.bf16 %v517
        %v534 = vunpack.c.l.bf16 %v518
        %v535 = vunpack.c.l.bf16 %v519
        %v536 = vunpack.c.l.bf16 %v520
        %v537 = vunpack.c.l.bf16 %v521
        %v538 = vunpack.c.l.bf16 %v522
        %v539 = vunpack.c.l.bf16 %v523
        %v540 = vunpack.c.l.bf16 %v524
        %v541 = vunpack.c.l.bf16 %v525
        %v542 = vunpack.c.l.bf16 %v526
        %v543 = vunpack.c.l.bf16 %v527
        %v544 = vunpack.c.l.bf16 %v528
        %v545 = vadd.f32 %v497, %v529
        %v546 = vadd.f32 %v498, %v530
        %v547 = vadd.f32 %v499, %v531
        %v548 = vadd.f32 %v500, %v532
        %v549 = vadd.f32 %v501, %v533
        %v550 = vadd.f32 %v502, %v534
        %v551 = vadd.f32 %v503, %v535
        %v552 = vadd.f32 %v504, %v536
        %v553 = vadd.f32 %v505, %v537
        %v554 = vadd.f32 %v506, %v538
        %v555 = vadd.f32 %v507, %v539
        %v556 = vadd.f32 %v508, %v540
        %v557 = vadd.f32 %v509, %v541
        %v558 = vadd.f32 %v510, %v542
        %v559 = vadd.f32 %v511, %v543
        %v560 = vadd.f32 %v512, %v544
        %v561 = vpack.c.bf16 %v546, %v545
        %v562 = vpack.c.bf16 %v548, %v547
        %v563 = vpack.c.bf16 %v550, %v549
        %v564 = vpack.c.bf16 %v552, %v551
        %v565 = vpack.c.bf16 %v554, %v553
        %v566 = vpack.c.bf16 %v556, %v555
        %v567 = vpack.c.bf16 %v558, %v557
        %v568 = vpack.c.bf16 %v560, %v559
        %v569 = vld [vmem:[%s377] sm:$0xff]
        %v570 = vld [vmem:[%s377 + $0x8] sm:$0xff]
        %v571 = vld [vmem:[%s377 + $0x10] sm:$0xff]
        %v572 = vld [vmem:[%s377 + $0x18] sm:$0xff]
        %v573 = vld [vmem:[%s377 + $0x20] sm:$0xff]
        %v574 = vld [vmem:[%s377 + $0x28] sm:$0xff]
        %v575 = vld [vmem:[%s377 + $0x30] sm:$0xff]
        %v576 = vld [vmem:[%s377 + $0x38] sm:$0xff]
        %v577 = vld [vmem:[%s377 + $0x40] sm:$0xff]
        %v578 = vld [vmem:[%s377 + $0x48] sm:$0xff]
        %v579 = vld [vmem:[%s377 + $0x50] sm:$0xff]
        %v580 = vld [vmem:[%s377 + $0x58] sm:$0xff]
        %v581 = vld [vmem:[%s377 + $0x60] sm:$0xff]
        %v582 = vld [vmem:[%s377 + $0x68] sm:$0xff]
        %v583 = vld [vmem:[%s377 + $0x70] sm:$0xff]
        %v584 = vld [vmem:[%s377 + $0x78] sm:$0xff]
        %v585 = vld [vmem:[%s377 + $0x80] sm:$0xff]
        %v586 = vld [vmem:[%s377 + $0x88] sm:$0xff]
        %v587 = vld [vmem:[%s377 + $0x90] sm:$0xff]
        %v588 = vld [vmem:[%s377 + $0x98] sm:$0xff]
        %v589 = vld [vmem:[%s377 + $0xa0] sm:$0xff]
        %v590 = vld [vmem:[%s377 + $0xa8] sm:$0xff]
        %v591 = vld [vmem:[%s377 + $0xb0] sm:$0xff]
        %v592 = vld [vmem:[%s377 + $0xb8] sm:$0xff]
        %v593 = vld [vmem:[%s377 + $0xc0] sm:$0xff]
        %v594 = vld [vmem:[%s377 + $0xc8] sm:$0xff]
        %v595 = vld [vmem:[%s377 + $0xd0] sm:$0xff]
        %v596 = vld [vmem:[%s377 + $0xd8] sm:$0xff]
        %v597 = vld [vmem:[%s377 + $0xe0] sm:$0xff]
        %v598 = vld [vmem:[%s377 + $0xe8] sm:$0xff]
        %v599 = vld [vmem:[%s377 + $0xf0] sm:$0xff]
        %v600 = vld [vmem:[%s377 + $0xf8] sm:$0xff]
        %v601 = vld [vmem:[%s377 + $0x100] sm:$0xff]
        %v602 = vld [vmem:[%s377 + $0x108] sm:$0xff]
        %v603 = vld [vmem:[%s377 + $0x110] sm:$0xff]
        %v604 = vld [vmem:[%s377 + $0x118] sm:$0xff]
        %v605 = vld [vmem:[%s377 + $0x120] sm:$0xff]
        %v606 = vld [vmem:[%s377 + $0x128] sm:$0xff]
        %v607 = vld [vmem:[%s377 + $0x130] sm:$0xff]
        %v608 = vld [vmem:[%s377 + $0x138] sm:$0xff]
        %v609 = vld [vmem:[%s377 + $0x140] sm:$0xff]
        %v610 = vld [vmem:[%s377 + $0x148] sm:$0xff]
        %v611 = vld [vmem:[%s377 + $0x150] sm:$0xff]
        %v612 = vld [vmem:[%s377 + $0x158] sm:$0xff]
        %v613 = vld [vmem:[%s377 + $0x160] sm:$0xff]
        %v614 = vld [vmem:[%s377 + $0x168] sm:$0xff]
        %v615 = vld [vmem:[%s377 + $0x170] sm:$0xff]
        %v616 = vld [vmem:[%s377 + $0x178] sm:$0xff]
        %v617 = vld [vmem:[%s377 + $0x180] sm:$0xff]
        %v618 = vld [vmem:[%s377 + $0x188] sm:$0xff]
        %v619 = vld [vmem:[%s377 + $0x190] sm:$0xff]
        %v620 = vld [vmem:[%s377 + $0x198] sm:$0xff]
        %v621 = vld [vmem:[%s377 + $0x1a0] sm:$0xff]
        %v622 = vld [vmem:[%s377 + $0x1a8] sm:$0xff]
        %v623 = vld [vmem:[%s377 + $0x1b0] sm:$0xff]
        %v624 = vld [vmem:[%s377 + $0x1b8] sm:$0xff]
        %v625 = vld [vmem:[%s377 + $0x1c0] sm:$0xff]
        %v626 = vld [vmem:[%s377 + $0x1c8] sm:$0xff]
        %v627 = vld [vmem:[%s377 + $0x1d0] sm:$0xff]
        %v628 = vld [vmem:[%s377 + $0x1d8] sm:$0xff]
        %v629 = vld [vmem:[%s377 + $0x1e0] sm:$0xff]
        %v630 = vld [vmem:[%s377 + $0x1e8] sm:$0xff]
        %v631 = vld [vmem:[%s377 + $0x1f0] sm:$0xff]
        %v632 = vld [vmem:[%s377 + $0x1f8] sm:$0xff]
        %v697 = vunpack.c.l.b16 %v569
        %v698 = vunpack.c.h.b16 %v569
        %v699 = vunpack.c.l.b16 %v570
        %v700 = vunpack.c.h.b16 %v570
        %v701 = vunpack.c.l.b16 %v571
        %v702 = vunpack.c.h.b16 %v571
        %v703 = vunpack.c.l.b16 %v572
        %v704 = vunpack.c.h.b16 %v572
        %v705 = vunpack.c.l.b16 %v573
        %v706 = vunpack.c.h.b16 %v573
        %v707 = vunpack.c.l.b16 %v574
        %v708 = vunpack.c.h.b16 %v574
        %v709 = vunpack.c.l.b16 %v575
        %v710 = vunpack.c.h.b16 %v575
        %v711 = vunpack.c.l.b16 %v576
        %v712 = vunpack.c.h.b16 %v576
        %v713 = vunpack.c.l.b16 %v577
        %v714 = vunpack.c.h.b16 %v577
        %v715 = vunpack.c.l.b16 %v578
        %v716 = vunpack.c.h.b16 %v578
        %v717 = vunpack.c.l.b16 %v579
        %v718 = vunpack.c.h.b16 %v579
        %v719 = vunpack.c.l.b16 %v580
        %v720 = vunpack.c.h.b16 %v580
        %v721 = vunpack.c.l.b16 %v581
        %v722 = vunpack.c.h.b16 %v581
        %v723 = vunpack.c.l.b16 %v582
        %v724 = vunpack.c.h.b16 %v582
        %v725 = vunpack.c.l.b16 %v583
        %v726 = vunpack.c.h.b16 %v583
        %v727 = vunpack.c.l.b16 %v584
        %v728 = vunpack.c.h.b16 %v584
        %v729 = vunpack.c.l.b16 %v585
        %v730 = vunpack.c.h.b16 %v585
        %v731 = vunpack.c.l.b16 %v586
        %v732 = vunpack.c.h.b16 %v586
        %v733 = vunpack.c.l.b16 %v587
        %v734 = vunpack.c.h.b16 %v587
        %v735 = vunpack.c.l.b16 %v588
        %v736 = vunpack.c.h.b16 %v588
        %v737 = vunpack.c.l.b16 %v589
        %v738 = vunpack.c.h.b16 %v589
        %v739 = vunpack.c.l.b16 %v590
        %v740 = vunpack.c.h.b16 %v590
        %v741 = vunpack.c.l.b16 %v591
        %v742 = vunpack.c.h.b16 %v591
        %v743 = vunpack.c.l.b16 %v592
        %v744 = vunpack.c.h.b16 %v592
        %v745 = vunpack.c.l.b16 %v593
        %v746 = vunpack.c.h.b16 %v593
        %v747 = vunpack.c.l.b16 %v594
        %v748 = vunpack.c.h.b16 %v594
        %v749 = vunpack.c.l.b16 %v595
        %v750 = vunpack.c.h.b16 %v595
        %v751 = vunpack.c.l.b16 %v596
        %v752 = vunpack.c.h.b16 %v596
        %v753 = vunpack.c.l.b16 %v597
        %v754 = vunpack.c.h.b16 %v597
        %v755 = vunpack.c.l.b16 %v598
        %v756 = vunpack.c.h.b16 %v598
        %v757 = vunpack.c.l.b16 %v599
        %v758 = vunpack.c.h.b16 %v599
        %v759 = vunpack.c.l.b16 %v600
        %v760 = vunpack.c.h.b16 %v600
        %v761 = vunpack.c.l.b16 %v601
        %v762 = vunpack.c.h.b16 %v601
        %v763 = vunpack.c.l.b16 %v602
        %v764 = vunpack.c.h.b16 %v602
        %v765 = vunpack.c.l.b16 %v603
        %v766 = vunpack.c.h.b16 %v603
        %v767 = vunpack.c.l.b16 %v604
        %v768 = vunpack.c.h.b16 %v604
        %v769 = vunpack.c.l.b16 %v605
        %v770 = vunpack.c.h.b16 %v605
        %v771 = vunpack.c.l.b16 %v606
        %v772 = vunpack.c.h.b16 %v606
        %v773 = vunpack.c.l.b16 %v607
        %v774 = vunpack.c.h.b16 %v607
        %v775 = vunpack.c.l.b16 %v608
        %v776 = vunpack.c.h.b16 %v608
        %v777 = vunpack.c.l.b16 %v609
        %v778 = vunpack.c.h.b16 %v609
        %v779 = vunpack.c.l.b16 %v610
        %v780 = vunpack.c.h.b16 %v610
        %v781 = vunpack.c.l.b16 %v611
        %v782 = vunpack.c.h.b16 %v611
        %v783 = vunpack.c.l.b16 %v612
        %v784 = vunpack.c.h.b16 %v612
        %v785 = vunpack.c.l.b16 %v613
        %v786 = vunpack.c.h.b16 %v613
        %v787 = vunpack.c.l.b16 %v614
        %v788 = vunpack.c.h.b16 %v614
        %v789 = vunpack.c.l.b16 %v615
        %v790 = vunpack.c.h.b16 %v615
        %v791 = vunpack.c.l.b16 %v616
        %v792 = vunpack.c.h.b16 %v616
        %v793 = vunpack.c.l.b16 %v617
        %v794 = vunpack.c.h.b16 %v617
        %v795 = vunpack.c.l.b16 %v618
        %v796 = vunpack.c.h.b16 %v618
        %v797 = vunpack.c.l.b16 %v619
        %v798 = vunpack.c.h.b16 %v619
        %v799 = vunpack.c.l.b16 %v620
        %v800 = vunpack.c.h.b16 %v620
        %v801 = vunpack.c.l.b16 %v621
        %v802 = vunpack.c.h.b16 %v621
        %v803 = vunpack.c.l.b16 %v622
        %v804 = vunpack.c.h.b16 %v622
        %v805 = vunpack.c.l.b16 %v623
        %v806 = vunpack.c.h.b16 %v623
        %v807 = vunpack.c.l.b16 %v624
        %v808 = vunpack.c.h.b16 %v624
        %v809 = vunpack.c.l.b16 %v625
        %v810 = vunpack.c.h.b16 %v625
        %v811 = vunpack.c.l.b16 %v626
        %v812 = vunpack.c.h.b16 %v626
        %v813 = vunpack.c.l.b16 %v627
        %v814 = vunpack.c.h.b16 %v627
        %v815 = vunpack.c.l.b16 %v628
        %v816 = vunpack.c.h.b16 %v628
        %v817 = vunpack.c.l.b16 %v629
        %v818 = vunpack.c.h.b16 %v629
        %v819 = vunpack.c.l.b16 %v630
        %v820 = vunpack.c.h.b16 %v630
        %v821 = vunpack.c.l.b16 %v631
        %v822 = vunpack.c.h.b16 %v631
        %v823 = vunpack.c.l.b16 %v632
        %v824 = vunpack.c.h.b16 %v632
        %v825 = vpack.c.b16 %v705, %v697
        %v826 = vpack.c.b16 %v706, %v698
        %v827 = vpack.c.b16 %v707, %v699
        %v828 = vpack.c.b16 %v708, %v700
        %v829 = vpack.c.b16 %v709, %v701
        %v830 = vpack.c.b16 %v710, %v702
        %v831 = vpack.c.b16 %v711, %v703
        %v832 = vpack.c.b16 %v712, %v704
        %v833 = vpack.c.b16 %v721, %v713
        %v834 = vpack.c.b16 %v722, %v714
        %v835 = vpack.c.b16 %v723, %v715
        %v836 = vpack.c.b16 %v724, %v716
        %v837 = vpack.c.b16 %v725, %v717
        %v838 = vpack.c.b16 %v726, %v718
        %v839 = vpack.c.b16 %v727, %v719
        %v840 = vpack.c.b16 %v728, %v720
        %v841 = vpack.c.b16 %v737, %v729
        %v842 = vpack.c.b16 %v738, %v730
        %v843 = vpack.c.b16 %v739, %v731
        %v844 = vpack.c.b16 %v740, %v732
        %v845 = vpack.c.b16 %v741, %v733
        %v846 = vpack.c.b16 %v742, %v734
        %v847 = vpack.c.b16 %v743, %v735
        %v848 = vpack.c.b16 %v744, %v736
        %v849 = vpack.c.b16 %v753, %v745
        %v850 = vpack.c.b16 %v754, %v746
        %v851 = vpack.c.b16 %v755, %v747
        %v852 = vpack.c.b16 %v756, %v748
        %v853 = vpack.c.b16 %v757, %v749
        %v854 = vpack.c.b16 %v758, %v750
        %v855 = vpack.c.b16 %v759, %v751
        %v856 = vpack.c.b16 %v760, %v752
        %v857 = vpack.c.b16 %v769, %v761
        %v858 = vpack.c.b16 %v770, %v762
        %v859 = vpack.c.b16 %v771, %v763
        %v860 = vpack.c.b16 %v772, %v764
        %v861 = vpack.c.b16 %v773, %v765
        %v862 = vpack.c.b16 %v774, %v766
        %v863 = vpack.c.b16 %v775, %v767
        %v864 = vpack.c.b16 %v776, %v768
        %v865 = vpack.c.b16 %v785, %v777
        %v866 = vpack.c.b16 %v786, %v778
        %v867 = vpack.c.b16 %v787, %v779
        %v868 = vpack.c.b16 %v788, %v780
        %v869 = vpack.c.b16 %v789, %v781
        %v870 = vpack.c.b16 %v790, %v782
        %v871 = vpack.c.b16 %v791, %v783
        %v872 = vpack.c.b16 %v792, %v784
        %v873 = vpack.c.b16 %v801, %v793
        %v874 = vpack.c.b16 %v802, %v794
        %v875 = vpack.c.b16 %v803, %v795
        %v876 = vpack.c.b16 %v804, %v796
        %v877 = vpack.c.b16 %v805, %v797
        %v878 = vpack.c.b16 %v806, %v798
        %v879 = vpack.c.b16 %v807, %v799
        %v880 = vpack.c.b16 %v808, %v800
        %v881 = vpack.c.b16 %v817, %v809
        %v882 = vpack.c.b16 %v818, %v810
        %v883 = vpack.c.b16 %v819, %v811
        %v884 = vpack.c.b16 %v820, %v812
        %v885 = vpack.c.b16 %v821, %v813
        %v886 = vpack.c.b16 %v822, %v814
        %v887 = vpack.c.b16 %v823, %v815
        %v888 = vpack.c.b16 %v824, %v816
        %953 = vmatprep.subr.bf16.mxu0 %v826
        %954 = vmatpush1.bf16.msra.mxu0 %v825
        %955 = vmatprep.subr.bf16.mxu0 %v834
        %956 = vmatpush1.bf16.msra.mxu0 %v833
        %957 = vmatprep.subr.bf16.mxu0 %v842
        %958 = vmatpush1.bf16.msra.mxu0 %v841
        %959 = vmatprep.subr.bf16.mxu0 %v850
        %960 = vmatpush1.bf16.msra.mxu0 %v849
        %961 = vmatprep.subr.bf16.mxu0 %v858
        %962 = vmatpush1.bf16.msra.mxu0 %v857
        %963 = vmatprep.subr.bf16.mxu0 %v866
        %964 = vmatpush1.bf16.msra.mxu0 %v865
        %965 = vmatprep.subr.bf16.mxu0 %v874
        %966 = vmatpush1.bf16.msra.mxu0 %v873
        %967 = vmatprep.subr.bf16.mxu0 %v882
        %968 = vmatpush1.bf16.msra.mxu0 %v881
        %969 = vmatprep.subr.bf16.mxu0 0
        %970 = vmatpush1.bf16.msra.mxu0 0
        %971 = vmatprep.subr.bf16.mxu0 0
        %972 = vmatpush1.bf16.msra.mxu0 0
        %973 = vmatprep.subr.bf16.mxu0 0
        %974 = vmatpush1.bf16.msra.mxu0 0
        %975 = vmatprep.subr.bf16.mxu0 0
        %976 = vmatpush1.bf16.msra.mxu0 0
        %977 = vmatprep.subr.bf16.mxu0 0
        %978 = vmatpush1.bf16.msra.mxu0 0
        %979 = vmatprep.subr.bf16.mxu0 0
        %980 = vmatpush1.bf16.msra.mxu0 0
        %981 = vmatprep.subr.bf16.mxu0 0
        %982 = vmatpush1.bf16.msra.mxu0 0
        %983 = vmatprep.subr.bf16.mxu0 0
        %984 = vmatpush1.bf16.msra.mxu0 0
        %985 = vmatprep.mubr.bf16.mxu0 0
        %986 = vmatmul.mubr.bf16.gmra.mrb[0].mxu0 %v561
        %v987 = vpop.f32.mrb[0].mxu0
        %v988 = vadd.f32 0.0, %v987
        %v989 = vpop.f32.mrb[0].mxu0
        %v990 = vadd.f32 0.0, %v989
        %v991 = vpop.f32.mrb[0].mxu0
        %v992 = vadd.f32 0.0, %v991
        %v993 = vpop.f32.mrb[0].mxu0
        %v994 = vadd.f32 0.0, %v993
        %995 = vmatprep.mubr.bf16.mxu0 0
        %996 = vmatmul.mubr.bf16.gmra.mrb[0].mxu0 %v562
        %v997 = vpop.f32.mrb[0].mxu0
        %v998 = vadd.f32 0.0, %v997
        %v999 = vpop.f32.mrb[0].mxu0
        %v1000 = vadd.f32 0.0, %v999
        %v1001 = vpop.f32.mrb[0].mxu0
        %v1002 = vadd.f32 0.0, %v1001
        %v1003 = vpop.f32.mrb[0].mxu0
        %v1004 = vadd.f32 0.0, %v1003
        %1005 = vmatprep.mubr.bf16.mxu0 0
        %1006 = vmatmul.mubr.bf16.gmra.mrb[0].mxu0 %v563
        %v1007 = vpop.f32.mrb[0].mxu0
        %v1008 = vadd.f32 0.0, %v1007
        %v1009 = vpop.f32.mrb[0].mxu0
        %v1010 = vadd.f32 0.0, %v1009
        %v1011 = vpop.f32.mrb[0].mxu0
        %v1012 = vadd.f32 0.0, %v1011
        %v1013 = vpop.f32.mrb[0].mxu0
        %v1014 = vadd.f32 0.0, %v1013
        %1015 = vmatprep.mubr.bf16.mxu0 0
        %1016 = vmatmul.mubr.bf16.gmra.mrb[0].mxu0 %v564
        %v1017 = vpop.f32.mrb[0].mxu0
        %v1018 = vadd.f32 0.0, %v1017
        %v1019 = vpop.f32.mrb[0].mxu0
        %v1020 = vadd.f32 0.0, %v1019
        %v1021 = vpop.f32.mrb[0].mxu0
        %v1022 = vadd.f32 0.0, %v1021
        %v1023 = vpop.f32.mrb[0].mxu0
        %v1024 = vadd.f32 0.0, %v1023
        %1025 = vmatprep.mubr.bf16.mxu0 0
        %1026 = vmatmul.mubr.bf16.gmra.mrb[0].mxu0 %v565
        %v1027 = vpop.f32.mrb[0].mxu0
        %v1028 = vadd.f32 0.0, %v1027
        %v1029 = vpop.f32.mrb[0].mxu0
        %v1030 = vadd.f32 0.0, %v1029
        %v1031 = vpop.f32.mrb[0].mxu0
        %v1032 = vadd.f32 0.0, %v1031
        %v1033 = vpop.f32.mrb[0].mxu0
        %v1034 = vadd.f32 0.0, %v1033
        %1035 = vmatprep.mubr.bf16.mxu0 0
        %1036 = vmatmul.mubr.bf16.gmra.mrb[0].mxu0 %v566
        %v1037 = vpop.f32.mrb[0].mxu0
        %v1038 = vadd.f32 0.0, %v1037
        %v1039 = vpop.f32.mrb[0].mxu0
        %v1040 = vadd.f32 0.0, %v1039
        %v1041 = vpop.f32.mrb[0].mxu0
        %v1042 = vadd.f32 0.0, %v1041
        %v1043 = vpop.f32.mrb[0].mxu0
        %v1044 = vadd.f32 0.0, %v1043
        %1045 = vmatprep.mubr.bf16.mxu0 0
        %1046 = vmatmul.mubr.bf16.gmra.mrb[0].mxu0 %v567
        %v1047 = vpop.f32.mrb[0].mxu0
        %v1048 = vadd.f32 0.0, %v1047
        %v1049 = vpop.f32.mrb[0].mxu0
        %v1050 = vadd.f32 0.0, %v1049
        %v1051 = vpop.f32.mrb[0].mxu0
        %v1052 = vadd.f32 0.0, %v1051
        %v1053 = vpop.f32.mrb[0].mxu0
        %v1054 = vadd.f32 0.0, %v1053
        %1055 = vmatprep.mubr.bf16.mxu0 0
        %1056 = vmatmul.mubr.bf16.gmra.mrb[0].mxu0 %v568
        %v1057 = vpop.f32.mrb[0].mxu0
        %v1058 = vadd.f32 0.0, %v1057
        %v1059 = vpop.f32.mrb[0].mxu0
        %v1060 = vadd.f32 0.0, %v1059
        %v1061 = vpop.f32.mrb[0].mxu0
        %v1062 = vadd.f32 0.0, %v1061
        %v1063 = vpop.f32.mrb[0].mxu0
        %v1064 = vadd.f32 0.0, %v1063
        %1065 = vdwg.mxu0
        %1066 = vmatprep.subr.bf16.mxu0 %v828
        %1067 = vmatpush1.bf16.msra.mxu0 %v827
        %1068 = vmatprep.subr.bf16.mxu0 %v836
        %1069 = vmatpush1.bf16.msra.mxu0 %v835
        %1070 = vmatprep.subr.bf16.mxu0 %v844
        %1071 = vmatpush1.bf16.msra.mxu0 %v843
        %1072 = vmatprep.subr.bf16.mxu0 %v852
        %1073 = vmatpush1.bf16.msra.mxu0 %v851
        %1074 = vmatprep.subr.bf16.mxu0 %v860
        %1075 = vmatpush1.bf16.msra.mxu0 %v859
        %1076 = vmatprep.subr.bf16.mxu0 %v868
        %1077 = vmatpush1.bf16.msra.mxu0 %v867
        %1078 = vmatprep.subr.bf16.mxu0 %v876
        %1079 = vmatpush1.bf16.msra.mxu0 %v875
        %1080 = vmatprep.subr.bf16.mxu0 %v884
        %1081 = vmatpush1.bf16.msra.mxu0 %v883
        %1082 = vmatprep.subr.bf16.mxu0 0
        %1083 = vmatpush1.bf16.msra.mxu0 0
        %1084 = vmatprep.subr.bf16.mxu0 0
        %1085 = vmatpush1.bf16.msra.mxu0 0
        %1086 = vmatprep.subr.bf16.mxu0 0
        %1087 = vmatpush1.bf16.msra.mxu0 0
        %1088 = vmatprep.subr.bf16.mxu0 0
        %1089 = vmatpush1.bf16.msra.mxu0 0
        %1090 = vmatprep.subr.bf16.mxu0 0
        %1091 = vmatpush1.bf16.msra.mxu0 0
        %1092 = vmatprep.subr.bf16.mxu0 0
        %1093 = vmatpush1.bf16.msra.mxu0 0
        %1094 = vmatprep.subr.bf16.mxu0 0
        %1095 = vmatpush1.bf16.msra.mxu0 0
        %1096 = vmatprep.subr.bf16.mxu0 0
        %1097 = vmatpush1.bf16.msra.mxu0 0
        %1098 = vmatprep.mubr.bf16.mxu0 0
        %1099 = vmatmul.mubr.bf16.gmra.mrb[0].mxu0 %v561
        %v1100 = vpop.f32.mrb[0].mxu0
        %v1101 = vadd.f32 0.0, %v1100
        %v1102 = vpop.f32.mrb[0].mxu0
        %v1103 = vadd.f32 0.0, %v1102
        %v1104 = vpop.f32.mrb[0].mxu0
        %v1105 = vadd.f32 0.0, %v1104
        %v1106 = vpop.f32.mrb[0].mxu0
        %v1107 = vadd.f32 0.0, %v1106
        %1108 = vmatprep.mubr.bf16.mxu0 0
        %1109 = vmatmul.mubr.bf16.gmra.mrb[0].mxu0 %v562
        %v1110 = vpop.f32.mrb[0].mxu0
        %v1111 = vadd.f32 0.0, %v1110
        %v1112 = vpop.f32.mrb[0].mxu0
        %v1113 = vadd.f32 0.0, %v1112
        %v1114 = vpop.f32.mrb[0].mxu0
        %v1115 = vadd.f32 0.0, %v1114
        %v1116 = vpop.f32.mrb[0].mxu0
        %v1117 = vadd.f32 0.0, %v1116
        %1118 = vmatprep.mubr.bf16.mxu0 0
        %1119 = vmatmul.mubr.bf16.gmra.mrb[0].mxu0 %v563
        %v1120 = vpop.f32.mrb[0].mxu0
        %v1121 = vadd.f32 0.0, %v1120
        %v1122 = vpop.f32.mrb[0].mxu0
        %v1123 = vadd.f32 0.0, %v1122
        %v1124 = vpop.f32.mrb[0].mxu0
        %v1125 = vadd.f32 0.0, %v1124
        %v1126 = vpop.f32.mrb[0].mxu0
        %v1127 = vadd.f32 0.0, %v1126
        %1128 = vmatprep.mubr.bf16.mxu0 0
        %1129 = vmatmul.mubr.bf16.gmra.mrb[0].mxu0 %v564
        %v1130 = vpop.f32.mrb[0].mxu0
        %v1131 = vadd.f32 0.0, %v1130
        %v1132 = vpop.f32.mrb[0].mxu0
        %v1133 = vadd.f32 0.0, %v1132
        %v1134 = vpop.f32.mrb[0].mxu0
        %v1135 = vadd.f32 0.0, %v1134
        %v1136 = vpop.f32.mrb[0].mxu0
        %v1137 = vadd.f32 0.0, %v1136
        %1138 = vmatprep.mubr.bf16.mxu0 0
        %1139 = vmatmul.mubr.bf16.gmra.mrb[0].mxu0 %v565
        %v1140 = vpop.f32.mrb[0].mxu0
        %v1141 = vadd.f32 0.0, %v1140
        %v1142 = vpop.f32.mrb[0].mxu0
        %v1143 = vadd.f32 0.0, %v1142
        %v1144 = vpop.f32.mrb[0].mxu0
        %v1145 = vadd.f32 0.0, %v1144
        %v1146 = vpop.f32.mrb[0].mxu0
        %v1147 = vadd.f32 0.0, %v1146
        %1148 = vmatprep.mubr.bf16.mxu0 0
        %1149 = vmatmul.mubr.bf16.gmra.mrb[0].mxu0 %v566
        %v1150 = vpop.f32.mrb[0].mxu0
        %v1151 = vadd.f32 0.0, %v1150
        %v1152 = vpop.f32.mrb[0].mxu0
        %v1153 = vadd.f32 0.0, %v1152
        %v1154 = vpop.f32.mrb[0].mxu0
        %v1155 = vadd.f32 0.0, %v1154
        %v1156 = vpop.f32.mrb[0].mxu0
        %v1157 = vadd.f32 0.0, %v1156
        %1158 = vmatprep.mubr.bf16.mxu0 0
        %1159 = vmatmul.mubr.bf16.gmra.mrb[0].mxu0 %v567
        %v1160 = vpop.f32.mrb[0].mxu0
        %v1161 = vadd.f32 0.0, %v1160
        %v1162 = vpop.f32.mrb[0].mxu0
        %v1163 = vadd.f32 0.0, %v1162
        %v1164 = vpop.f32.mrb[0].mxu0
        %v1165 = vadd.f32 0.0, %v1164
        %v1166 = vpop.f32.mrb[0].mxu0
        %v1167 = vadd.f32 0.0, %v1166
        %1168 = vmatprep.mubr.bf16.mxu0 0
        %1169 = vmatmul.mubr.bf16.gmra.mrb[0].mxu0 %v568
        %v1170 = vpop.f32.mrb[0].mxu0
        %v1171 = vadd.f32 0.0, %v1170
        %v1172 = vpop.f32.mrb[0].mxu0
        %v1173 = vadd.f32 0.0, %v1172
        %v1174 = vpop.f32.mrb[0].mxu0
        %v1175 = vadd.f32 0.0, %v1174
        %v1176 = vpop.f32.mrb[0].mxu0
        %v1177 = vadd.f32 0.0, %v1176
        %1178 = vdwg.mxu0
        %1179 = vmatprep.subr.bf16.mxu0 %v830
        %1180 = vmatpush1.bf16.msra.mxu0 %v829
        %1181 = vmatprep.subr.bf16.mxu0 %v838
        %1182 = vmatpush1.bf16.msra.mxu0 %v837
        %1183 = vmatprep.subr.bf16.mxu0 %v846
        %1184 = vmatpush1.bf16.msra.mxu0 %v845
        %1185 = vmatprep.subr.bf16.mxu0 %v854
        %1186 = vmatpush1.bf16.msra.mxu0 %v853
        %1187 = vmatprep.subr.bf16.mxu0 %v862
        %1188 = vmatpush1.bf16.msra.mxu0 %v861
        %1189 = vmatprep.subr.bf16.mxu0 %v870
        %1190 = vmatpush1.bf16.msra.mxu0 %v869
        %1191 = vmatprep.subr.bf16.mxu0 %v878
        %1192 = vmatpush1.bf16.msra.mxu0 %v877
        %1193 = vmatprep.subr.bf16.mxu0 %v886
        %1194 = vmatpush1.bf16.msra.mxu0 %v885
        %1195 = vmatprep.subr.bf16.mxu0 0
        %1196 = vmatpush1.bf16.msra.mxu0 0
        %1197 = vmatprep.subr.bf16.mxu0 0
        %1198 = vmatpush1.bf16.msra.mxu0 0
        %1199 = vmatprep.subr.bf16.mxu0 0
        %1200 = vmatpush1.bf16.msra.mxu0 0
        %1201 = vmatprep.subr.bf16.mxu0 0
        %1202 = vmatpush1.bf16.msra.mxu0 0
        %1203 = vmatprep.subr.bf16.mxu0 0
        %1204 = vmatpush1.bf16.msra.mxu0 0
        %1205 = vmatprep.subr.bf16.mxu0 0
        %1206 = vmatpush1.bf16.msra.mxu0 0
        %1207 = vmatprep.subr.bf16.mxu0 0
        %1208 = vmatpush1.bf16.msra.mxu0 0
        %1209 = vmatprep.subr.bf16.mxu0 0
        %1210 = vmatpush1.bf16.msra.mxu0 0
        %1211 = vmatprep.mubr.bf16.mxu0 0
        %1212 = vmatmul.mubr.bf16.gmra.mrb[0].mxu0 %v561
        %v1213 = vpop.f32.mrb[0].mxu0
        %v1214 = vadd.f32 0.0, %v1213
        %v1215 = vpop.f32.mrb[0].mxu0
        %v1216 = vadd.f32 0.0, %v1215
        %v1217 = vpop.f32.mrb[0].mxu0
        %v1218 = vadd.f32 0.0, %v1217
        %v1219 = vpop.f32.mrb[0].mxu0
        %v1220 = vadd.f32 0.0, %v1219
        %1221 = vmatprep.mubr.bf16.mxu0 0
        %1222 = vmatmul.mubr.bf16.gmra.mrb[0].mxu0 %v562
        %v1223 = vpop.f32.mrb[0].mxu0
        %v1224 = vadd.f32 0.0, %v1223
        %v1225 = vpop.f32.mrb[0].mxu0
        %v1226 = vadd.f32 0.0, %v1225
        %v1227 = vpop.f32.mrb[0].mxu0
        %v1228 = vadd.f32 0.0, %v1227
        %v1229 = vpop.f32.mrb[0].mxu0
        %v1230 = vadd.f32 0.0, %v1229
        %1231 = vmatprep.mubr.bf16.mxu0 0
        %1232 = vmatmul.mubr.bf16.gmra.mrb[0].mxu0 %v563
        %v1233 = vpop.f32.mrb[0].mxu0
        %v1234 = vadd.f32 0.0, %v1233
        %v1235 = vpop.f32.mrb[0].mxu0
        %v1236 = vadd.f32 0.0, %v1235
        %v1237 = vpop.f32.mrb[0].mxu0
        %v1238 = vadd.f32 0.0, %v1237
        %v1239 = vpop.f32.mrb[0].mxu0
        %v1240 = vadd.f32 0.0, %v1239
        %1241 = vmatprep.mubr.bf16.mxu0 0
        %1242 = vmatmul.mubr.bf16.gmra.mrb[0].mxu0 %v564
        %v1243 = vpop.f32.mrb[0].mxu0
        %v1244 = vadd.f32 0.0, %v1243
        %v1245 = vpop.f32.mrb[0].mxu0
        %v1246 = vadd.f32 0.0, %v1245
        %v1247 = vpop.f32.mrb[0].mxu0
        %v1248 = vadd.f32 0.0, %v1247
        %v1249 = vpop.f32.mrb[0].mxu0
        %v1250 = vadd.f32 0.0, %v1249
        %1251 = vmatprep.mubr.bf16.mxu0 0
        %1252 = vmatmul.mubr.bf16.gmra.mrb[0].mxu0 %v565
        %v1253 = vpop.f32.mrb[0].mxu0
        %v1254 = vadd.f32 0.0, %v1253
        %v1255 = vpop.f32.mrb[0].mxu0
        %v1256 = vadd.f32 0.0, %v1255
        %v1257 = vpop.f32.mrb[0].mxu0
        %v1258 = vadd.f32 0.0, %v1257
        %v1259 = vpop.f32.mrb[0].mxu0
        %v1260 = vadd.f32 0.0, %v1259
        %1261 = vmatprep.mubr.bf16.mxu0 0
        %1262 = vmatmul.mubr.bf16.gmra.mrb[0].mxu0 %v566
        %v1263 = vpop.f32.mrb[0].mxu0
        %v1264 = vadd.f32 0.0, %v1263
        %v1265 = vpop.f32.mrb[0].mxu0
        %v1266 = vadd.f32 0.0, %v1265
        %v1267 = vpop.f32.mrb[0].mxu0
        %v1268 = vadd.f32 0.0, %v1267
        %v1269 = vpop.f32.mrb[0].mxu0
        %v1270 = vadd.f32 0.0, %v1269
        %1271 = vmatprep.mubr.bf16.mxu0 0
        %1272 = vmatmul.mubr.bf16.gmra.mrb[0].mxu0 %v567
        %v1273 = vpop.f32.mrb[0].mxu0
        %v1274 = vadd.f32 0.0, %v1273
        %v1275 = vpop.f32.mrb[0].mxu0
        %v1276 = vadd.f32 0.0, %v1275
        %v1277 = vpop.f32.mrb[0].mxu0
        %v1278 = vadd.f32 0.0, %v1277
        %v1279 = vpop.f32.mrb[0].mxu0
        %v1280 = vadd.f32 0.0, %v1279
        %1281 = vmatprep.mubr.bf16.mxu0 0
        %1282 = vmatmul.mubr.bf16.gmra.mrb[0].mxu0 %v568
        %v1283 = vpop.f32.mrb[0].mxu0
        %v1284 = vadd.f32 0.0, %v1283
        %v1285 = vpop.f32.mrb[0].mxu0
        %v1286 = vadd.f32 0.0, %v1285
        %v1287 = vpop.f32.mrb[0].mxu0
        %v1288 = vadd.f32 0.0, %v1287
        %v1289 = vpop.f32.mrb[0].mxu0
        %v1290 = vadd.f32 0.0, %v1289
        %1291 = vdwg.mxu0
        %1292 = vmatprep.subr.bf16.mxu0 %v832
        %1293 = vmatpush1.bf16.msra.mxu0 %v831
        %1294 = vmatprep.subr.bf16.mxu0 %v840
        %1295 = vmatpush1.bf16.msra.mxu0 %v839
        %1296 = vmatprep.subr.bf16.mxu0 %v848
        %1297 = vmatpush1.bf16.msra.mxu0 %v847
        %1298 = vmatprep.subr.bf16.mxu0 %v856
        %1299 = vmatpush1.bf16.msra.mxu0 %v855
        %1300 = vmatprep.subr.bf16.mxu0 %v864
        %1301 = vmatpush1.bf16.msra.mxu0 %v863
        %1302 = vmatprep.subr.bf16.mxu0 %v872
        %1303 = vmatpush1.bf16.msra.mxu0 %v871
        %1304 = vmatprep.subr.bf16.mxu0 %v880
        %1305 = vmatpush1.bf16.msra.mxu0 %v879
        %1306 = vmatprep.subr.bf16.mxu0 %v888
        %1307 = vmatpush1.bf16.msra.mxu0 %v887
        %1308 = vmatprep.subr.bf16.mxu0 0
        %1309 = vmatpush1.bf16.msra.mxu0 0
        %1310 = vmatprep.subr.bf16.mxu0 0
        %1311 = vmatpush1.bf16.msra.mxu0 0
        %1312 = vmatprep.subr.bf16.mxu0 0
        %1313 = vmatpush1.bf16.msra.mxu0 0
        %1314 = vmatprep.subr.bf16.mxu0 0
        %1315 = vmatpush1.bf16.msra.mxu0 0
        %1316 = vmatprep.subr.bf16.mxu0 0
        %1317 = vmatpush1.bf16.msra.mxu0 0
        %1318 = vmatprep.subr.bf16.mxu0 0
        %1319 = vmatpush1.bf16.msra.mxu0 0
        %1320 = vmatprep.subr.bf16.mxu0 0
        %1321 = vmatpush1.bf16.msra.mxu0 0
        %1322 = vmatprep.subr.bf16.mxu0 0
        %1323 = vmatpush1.bf16.msra.mxu0 0
        %1324 = vmatprep.mubr.bf16.mxu0 0
        %1325 = vmatmul.mubr.bf16.gmra.mrb[0].mxu0 %v561
        %v1326 = vpop.f32.mrb[0].mxu0
        %v1327 = vadd.f32 0.0, %v1326
        %v1328 = vpop.f32.mrb[0].mxu0
        %v1329 = vadd.f32 0.0, %v1328
        %v1330 = vpop.f32.mrb[0].mxu0
        %v1331 = vadd.f32 0.0, %v1330
        %v1332 = vpop.f32.mrb[0].mxu0
        %v1333 = vadd.f32 0.0, %v1332
        %1334 = vmatprep.mubr.bf16.mxu0 0
        %1335 = vmatmul.mubr.bf16.gmra.mrb[0].mxu0 %v562
        %v1336 = vpop.f32.mrb[0].mxu0
        %v1337 = vadd.f32 0.0, %v1336
        %v1338 = vpop.f32.mrb[0].mxu0
        %v1339 = vadd.f32 0.0, %v1338
        %v1340 = vpop.f32.mrb[0].mxu0
        %v1341 = vadd.f32 0.0, %v1340
        %v1342 = vpop.f32.mrb[0].mxu0
        %v1343 = vadd.f32 0.0, %v1342
        %1344 = vmatprep.mubr.bf16.mxu0 0
        %1345 = vmatmul.mubr.bf16.gmra.mrb[0].mxu0 %v563
        %v1346 = vpop.f32.mrb[0].mxu0
        %v1347 = vadd.f32 0.0, %v1346
        %v1348 = vpop.f32.mrb[0].mxu0
        %v1349 = vadd.f32 0.0, %v1348
        %v1350 = vpop.f32.mrb[0].mxu0
        %v1351 = vadd.f32 0.0, %v1350
        %v1352 = vpop.f32.mrb[0].mxu0
        %v1353 = vadd.f32 0.0, %v1352
        %1354 = vmatprep.mubr.bf16.mxu0 0
        %1355 = vmatmul.mubr.bf16.gmra.mrb[0].mxu0 %v564
        %v1356 = vpop.f32.mrb[0].mxu0
        %v1357 = vadd.f32 0.0, %v1356
        %v1358 = vpop.f32.mrb[0].mxu0
        %v1359 = vadd.f32 0.0, %v1358
        %v1360 = vpop.f32.mrb[0].mxu0
        %v1361 = vadd.f32 0.0, %v1360
        %v1362 = vpop.f32.mrb[0].mxu0
        %v1363 = vadd.f32 0.0, %v1362
        %1364 = vmatprep.mubr.bf16.mxu0 0
        %1365 = vmatmul.mubr.bf16.gmra.mrb[0].mxu0 %v565
        %v1366 = vpop.f32.mrb[0].mxu0
        %v1367 = vadd.f32 0.0, %v1366
        %v1368 = vpop.f32.mrb[0].mxu0
        %v1369 = vadd.f32 0.0, %v1368
        %v1370 = vpop.f32.mrb[0].mxu0
        %v1371 = vadd.f32 0.0, %v1370
        %v1372 = vpop.f32.mrb[0].mxu0
        %v1373 = vadd.f32 0.0, %v1372
        %1374 = vmatprep.mubr.bf16.mxu0 0
        %1375 = vmatmul.mubr.bf16.gmra.mrb[0].mxu0 %v566
        %v1376 = vpop.f32.mrb[0].mxu0
        %v1377 = vadd.f32 0.0, %v1376
        %v1378 = vpop.f32.mrb[0].mxu0
        %v1379 = vadd.f32 0.0, %v1378
        %v1380 = vpop.f32.mrb[0].mxu0
        %v1381 = vadd.f32 0.0, %v1380
        %v1382 = vpop.f32.mrb[0].mxu0
        %v1383 = vadd.f32 0.0, %v1382
        %1384 = vmatprep.mubr.bf16.mxu0 0
        %1385 = vmatmul.mubr.bf16.gmra.mrb[0].mxu0 %v567
        %v1386 = vpop.f32.mrb[0].mxu0
        %v1387 = vadd.f32 0.0, %v1386
        %v1388 = vpop.f32.mrb[0].mxu0
        %v1389 = vadd.f32 0.0, %v1388
        %v1390 = vpop.f32.mrb[0].mxu0
        %v1391 = vadd.f32 0.0, %v1390
        %v1392 = vpop.f32.mrb[0].mxu0
        %v1393 = vadd.f32 0.0, %v1392
        %1394 = vmatprep.mubr.bf16.mxu0 0
        %1395 = vmatmul.mubr.bf16.gmra.mrb[0].mxu0 %v568
        %v1396 = vpop.f32.mrb[0].mxu0
        %v1397 = vadd.f32 0.0, %v1396
        %v1398 = vpop.f32.mrb[0].mxu0
        %v1399 = vadd.f32 0.0, %v1398
        %v1400 = vpop.f32.mrb[0].mxu0
        %v1401 = vadd.f32 0.0, %v1400
        %v1402 = vpop.f32.mrb[0].mxu0
        %v1403 = vadd.f32 0.0, %v1402
        %1404 = vdwg.mxu0
        %v1405 = vld [vmem:[%s386] sm:$0xff]
        %v1406 = vld [vmem:[%s386 + $0x8] sm:$0xff]
        %v1407 = vld [vmem:[%s386 + $0x10] sm:$0xff]
        %v1408 = vld [vmem:[%s386 + $0x18] sm:$0xff]
        %v1409 = vld [vmem:[%s386 + $0x20] sm:$0xff]
        %v1410 = vld [vmem:[%s386 + $0x28] sm:$0xff]
        %v1411 = vld [vmem:[%s386 + $0x30] sm:$0xff]
        %v1412 = vld [vmem:[%s386 + $0x38] sm:$0xff]
        %v1413 = vld [vmem:[%s386 + $0x40] sm:$0xff]
        %v1414 = vld [vmem:[%s386 + $0x48] sm:$0xff]
        %v1415 = vld [vmem:[%s386 + $0x50] sm:$0xff]
        %v1416 = vld [vmem:[%s386 + $0x58] sm:$0xff]
        %v1417 = vld [vmem:[%s386 + $0x60] sm:$0xff]
        %v1418 = vld [vmem:[%s386 + $0x68] sm:$0xff]
        %v1419 = vld [vmem:[%s386 + $0x70] sm:$0xff]
        %v1420 = vld [vmem:[%s386 + $0x78] sm:$0xff]
        %v1421 = vld [vmem:[%s386 + $0x80] sm:$0xff]
        %v1422 = vld [vmem:[%s386 + $0x88] sm:$0xff]
        %v1423 = vld [vmem:[%s386 + $0x90] sm:$0xff]
        %v1424 = vld [vmem:[%s386 + $0x98] sm:$0xff]
        %v1425 = vld [vmem:[%s386 + $0xa0] sm:$0xff]
        %v1426 = vld [vmem:[%s386 + $0xa8] sm:$0xff]
        %v1427 = vld [vmem:[%s386 + $0xb0] sm:$0xff]
        %v1428 = vld [vmem:[%s386 + $0xb8] sm:$0xff]
        %v1429 = vld [vmem:[%s386 + $0xc0] sm:$0xff]
        %v1430 = vld [vmem:[%s386 + $0xc8] sm:$0xff]
        %v1431 = vld [vmem:[%s386 + $0xd0] sm:$0xff]
        %v1432 = vld [vmem:[%s386 + $0xd8] sm:$0xff]
        %v1433 = vld [vmem:[%s386 + $0xe0] sm:$0xff]
        %v1434 = vld [vmem:[%s386 + $0xe8] sm:$0xff]
        %v1435 = vld [vmem:[%s386 + $0xf0] sm:$0xff]
        %v1436 = vld [vmem:[%s386 + $0xf8] sm:$0xff]
        %v1469 = vunpack.c.l.b16 %v1405
        %v1470 = vunpack.c.h.b16 %v1405
        %v1471 = vunpack.c.l.b16 %v1406
        %v1472 = vunpack.c.h.b16 %v1406
        %v1473 = vunpack.c.l.b16 %v1407
        %v1474 = vunpack.c.h.b16 %v1407
        %v1475 = vunpack.c.l.b16 %v1408
        %v1476 = vunpack.c.h.b16 %v1408
        %v1477 = vunpack.c.l.b16 %v1409
        %v1478 = vunpack.c.h.b16 %v1409
        %v1479 = vunpack.c.l.b16 %v1410
        %v1480 = vunpack.c.h.b16 %v1410
        %v1481 = vunpack.c.l.b16 %v1411
        %v1482 = vunpack.c.h.b16 %v1411
        %v1483 = vunpack.c.l.b16 %v1412
        %v1484 = vunpack.c.h.b16 %v1412
        %v1485 = vunpack.c.l.b16 %v1413
        %v1486 = vunpack.c.h.b16 %v1413
        %v1487 = vunpack.c.l.b16 %v1414
        %v1488 = vunpack.c.h.b16 %v1414
        %v1489 = vunpack.c.l.b16 %v1415
        %v1490 = vunpack.c.h.b16 %v1415
        %v1491 = vunpack.c.l.b16 %v1416
        %v1492 = vunpack.c.h.b16 %v1416
        %v1493 = vunpack.c.l.b16 %v1417
        %v1494 = vunpack.c.h.b16 %v1417
        %v1495 = vunpack.c.l.b16 %v1418
        %v1496 = vunpack.c.h.b16 %v1418
        %v1497 = vunpack.c.l.b16 %v1419
        %v1498 = vunpack.c.h.b16 %v1419
        %v1499 = vunpack.c.l.b16 %v1420
        %v1500 = vunpack.c.h.b16 %v1420
        %v1501 = vunpack.c.l.b16 %v1421
        %v1502 = vunpack.c.h.b16 %v1421
        %v1503 = vunpack.c.l.b16 %v1422
        %v1504 = vunpack.c.h.b16 %v1422
        %v1505 = vunpack.c.l.b16 %v1423
        %v1506 = vunpack.c.h.b16 %v1423
        %v1507 = vunpack.c.l.b16 %v1424
        %v1508 = vunpack.c.h.b16 %v1424
        %v1509 = vunpack.c.l.b16 %v1425
        %v1510 = vunpack.c.h.b16 %v1425
        %v1511 = vunpack.c.l.b16 %v1426
        %v1512 = vunpack.c.h.b16 %v1426
        %v1513 = vunpack.c.l.b16 %v1427
        %v1514 = vunpack.c.h.b16 %v1427
        %v1515 = vunpack.c.l.b16 %v1428
        %v1516 = vunpack.c.h.b16 %v1428
        %v1517 = vunpack.c.l.b16 %v1429
        %v1518 = vunpack.c.h.b16 %v1429
        %v1519 = vunpack.c.l.b16 %v1430
        %v1520 = vunpack.c.h.b16 %v1430
        %v1521 = vunpack.c.l.b16 %v1431
        %v1522 = vunpack.c.h.b16 %v1431
        %v1523 = vunpack.c.l.b16 %v1432
        %v1524 = vunpack.c.h.b16 %v1432
        %v1525 = vunpack.c.l.b16 %v1433
        %v1526 = vunpack.c.h.b16 %v1433
        %v1527 = vunpack.c.l.b16 %v1434
        %v1528 = vunpack.c.h.b16 %v1434
        %v1529 = vunpack.c.l.b16 %v1435
        %v1530 = vunpack.c.h.b16 %v1435
        %v1531 = vunpack.c.l.b16 %v1436
        %v1532 = vunpack.c.h.b16 %v1436
        %v1533 = vpack.c.b16 %v1473, %v1469
        %v1534 = vpack.c.b16 %v1474, %v1470
        %v1535 = vpack.c.b16 %v1475, %v1471
        %v1536 = vpack.c.b16 %v1476, %v1472
        %v1537 = vpack.c.b16 %v1481, %v1477
        %v1538 = vpack.c.b16 %v1482, %v1478
        %v1539 = vpack.c.b16 %v1483, %v1479
        %v1540 = vpack.c.b16 %v1484, %v1480
        %v1541 = vpack.c.b16 %v1489, %v1485
        %v1542 = vpack.c.b16 %v1490, %v1486
        %v1543 = vpack.c.b16 %v1491, %v1487
        %v1544 = vpack.c.b16 %v1492, %v1488
        %v1545 = vpack.c.b16 %v1497, %v1493
        %v1546 = vpack.c.b16 %v1498, %v1494
        %v1547 = vpack.c.b16 %v1499, %v1495
        %v1548 = vpack.c.b16 %v1500, %v1496
        %v1549 = vpack.c.b16 %v1505, %v1501
        %v1550 = vpack.c.b16 %v1506, %v1502
        %v1551 = vpack.c.b16 %v1507, %v1503
        %v1552 = vpack.c.b16 %v1508, %v1504
        %v1553 = vpack.c.b16 %v1513, %v1509
        %v1554 = vpack.c.b16 %v1514, %v1510
        %v1555 = vpack.c.b16 %v1515, %v1511
        %v1556 = vpack.c.b16 %v1516, %v1512
        %v1557 = vpack.c.b16 %v1521, %v1517
        %v1558 = vpack.c.b16 %v1522, %v1518
        %v1559 = vpack.c.b16 %v1523, %v1519
        %v1560 = vpack.c.b16 %v1524, %v1520
        %v1561 = vpack.c.b16 %v1529, %v1525
        %v1562 = vpack.c.b16 %v1530, %v1526
        %v1563 = vpack.c.b16 %v1531, %v1527
        %v1564 = vpack.c.b16 %v1532, %v1528
        %1597 = vmatprep.subr.bf16.mxu0 %v1534
        %1598 = vmatpush1.bf16.msra.mxu0 %v1533
        %1599 = vmatprep.subr.bf16.mxu0 %v1538
        %1600 = vmatpush1.bf16.msra.mxu0 %v1537
        %1601 = vmatprep.subr.bf16.mxu0 %v1542
        %1602 = vmatpush1.bf16.msra.mxu0 %v1541
        %1603 = vmatprep.subr.bf16.mxu0 %v1546
        %1604 = vmatpush1.bf16.msra.mxu0 %v1545
        %1605 = vmatprep.subr.bf16.mxu0 %v1550
        %1606 = vmatpush1.bf16.msra.mxu0 %v1549
        %1607 = vmatprep.subr.bf16.mxu0 %v1554
        %1608 = vmatpush1.bf16.msra.mxu0 %v1553
        %1609 = vmatprep.subr.bf16.mxu0 %v1558
        %1610 = vmatpush1.bf16.msra.mxu0 %v1557
        %1611 = vmatprep.subr.bf16.mxu0 %v1562
        %1612 = vmatpush1.bf16.msra.mxu0 %v1561
        %1613 = vmatprep.subr.bf16.mxu0 0
        %1614 = vmatpush1.bf16.msra.mxu0 0
        %1615 = vmatprep.subr.bf16.mxu0 0
        %1616 = vmatpush1.bf16.msra.mxu0 0
        %1617 = vmatprep.subr.bf16.mxu0 0
        %1618 = vmatpush1.bf16.msra.mxu0 0
        %1619 = vmatprep.subr.bf16.mxu0 0
        %1620 = vmatpush1.bf16.msra.mxu0 0
        %1621 = vmatprep.subr.bf16.mxu0 0
        %1622 = vmatpush1.bf16.msra.mxu0 0
        %1623 = vmatprep.subr.bf16.mxu0 0
        %1624 = vmatpush1.bf16.msra.mxu0 0
        %1625 = vmatprep.subr.bf16.mxu0 0
        %1626 = vmatpush1.bf16.msra.mxu0 0
        %1627 = vmatprep.subr.bf16.mxu0 0
        %1628 = vmatpush1.bf16.msra.mxu0 0
        %1629 = vmatprep.mubr.bf16.mxu0 0
        %1630 = vmatmul.mubr.bf16.gmra.mrb[0].mxu0 %v489
        %v1631 = vpop.f32.mrb[0].mxu0
        %v1632 = vadd.f32 0.0, %v1631
        %v1633 = vpop.f32.mrb[0].mxu0
        %v1634 = vadd.f32 0.0, %v1633
        %v1635 = vpop.f32.mrb[0].mxu0
        %v1636 = vadd.f32 0.0, %v1635
        %v1637 = vpop.f32.mrb[0].mxu0
        %v1638 = vadd.f32 0.0, %v1637
        %1639 = vmatprep.mubr.bf16.mxu0 0
        %1640 = vmatmul.mubr.bf16.gmra.mrb[0].mxu0 %v490
        %v1641 = vpop.f32.mrb[0].mxu0
        %v1642 = vadd.f32 0.0, %v1641
        %v1643 = vpop.f32.mrb[0].mxu0
        %v1644 = vadd.f32 0.0, %v1643
        %v1645 = vpop.f32.mrb[0].mxu0
        %v1646 = vadd.f32 0.0, %v1645
        %v1647 = vpop.f32.mrb[0].mxu0
        %v1648 = vadd.f32 0.0, %v1647
        %1649 = vmatprep.mubr.bf16.mxu0 0
        %1650 = vmatmul.mubr.bf16.gmra.mrb[0].mxu0 %v491
        %v1651 = vpop.f32.mrb[0].mxu0
        %v1652 = vadd.f32 0.0, %v1651
        %v1653 = vpop.f32.mrb[0].mxu0
        %v1654 = vadd.f32 0.0, %v1653
        %v1655 = vpop.f32.mrb[0].mxu0
        %v1656 = vadd.f32 0.0, %v1655
        %v1657 = vpop.f32.mrb[0].mxu0
        %v1658 = vadd.f32 0.0, %v1657
        %1659 = vmatprep.mubr.bf16.mxu0 0
        %1660 = vmatmul.mubr.bf16.gmra.mrb[0].mxu0 %v492
        %v1661 = vpop.f32.mrb[0].mxu0
        %v1662 = vadd.f32 0.0, %v1661
        %v1663 = vpop.f32.mrb[0].mxu0
        %v1664 = vadd.f32 0.0, %v1663
        %v1665 = vpop.f32.mrb[0].mxu0
        %v1666 = vadd.f32 0.0, %v1665
        %v1667 = vpop.f32.mrb[0].mxu0
        %v1668 = vadd.f32 0.0, %v1667
        %1669 = vmatprep.mubr.bf16.mxu0 0
        %1670 = vmatmul.mubr.bf16.gmra.mrb[0].mxu0 %v493
        %v1671 = vpop.f32.mrb[0].mxu0
        %v1672 = vadd.f32 0.0, %v1671
        %v1673 = vpop.f32.mrb[0].mxu0
        %v1674 = vadd.f32 0.0, %v1673
        %v1675 = vpop.f32.mrb[0].mxu0
        %v1676 = vadd.f32 0.0, %v1675
        %v1677 = vpop.f32.mrb[0].mxu0
        %v1678 = vadd.f32 0.0, %v1677
        %1679 = vmatprep.mubr.bf16.mxu0 0
        %1680 = vmatmul.mubr.bf16.gmra.mrb[0].mxu0 %v494
        %v1681 = vpop.f32.mrb[0].mxu0
        %v1682 = vadd.f32 0.0, %v1681
        %v1683 = vpop.f32.mrb[0].mxu0
        %v1684 = vadd.f32 0.0, %v1683
        %v1685 = vpop.f32.mrb[0].mxu0
        %v1686 = vadd.f32 0.0, %v1685
        %v1687 = vpop.f32.mrb[0].mxu0
        %v1688 = vadd.f32 0.0, %v1687
        %1689 = vmatprep.mubr.bf16.mxu0 0
        %1690 = vmatmul.mubr.bf16.gmra.mrb[0].mxu0 %v495
        %v1691 = vpop.f32.mrb[0].mxu0
        %v1692 = vadd.f32 0.0, %v1691
        %v1693 = vpop.f32.mrb[0].mxu0
        %v1694 = vadd.f32 0.0, %v1693
        %v1695 = vpop.f32.mrb[0].mxu0
        %v1696 = vadd.f32 0.0, %v1695
        %v1697 = vpop.f32.mrb[0].mxu0
        %v1698 = vadd.f32 0.0, %v1697
        %1699 = vmatprep.mubr.bf16.mxu0 0
        %1700 = vmatmul.mubr.bf16.gmra.mrb[0].mxu0 %v496
        %v1701 = vpop.f32.mrb[0].mxu0
        %v1702 = vadd.f32 0.0, %v1701
        %v1703 = vpop.f32.mrb[0].mxu0
        %v1704 = vadd.f32 0.0, %v1703
        %v1705 = vpop.f32.mrb[0].mxu0
        %v1706 = vadd.f32 0.0, %v1705
        %v1707 = vpop.f32.mrb[0].mxu0
        %v1708 = vadd.f32 0.0, %v1707
        %1709 = vdwg.mxu0
        %1710 = vmatprep.subr.bf16.mxu0 %v1536
        %1711 = vmatpush1.bf16.msra.mxu0 %v1535
        %1712 = vmatprep.subr.bf16.mxu0 %v1540
        %1713 = vmatpush1.bf16.msra.mxu0 %v1539
        %1714 = vmatprep.subr.bf16.mxu0 %v1544
        %1715 = vmatpush1.bf16.msra.mxu0 %v1543
        %1716 = vmatprep.subr.bf16.mxu0 %v1548
        %1717 = vmatpush1.bf16.msra.mxu0 %v1547
        %1718 = vmatprep.subr.bf16.mxu0 %v1552
        %1719 = vmatpush1.bf16.msra.mxu0 %v1551
        %1720 = vmatprep.subr.bf16.mxu0 %v1556
        %1721 = vmatpush1.bf16.msra.mxu0 %v1555
        %1722 = vmatprep.subr.bf16.mxu0 %v1560
        %1723 = vmatpush1.bf16.msra.mxu0 %v1559
        %1724 = vmatprep.subr.bf16.mxu0 %v1564
        %1725 = vmatpush1.bf16.msra.mxu0 %v1563
        %1726 = vmatprep.subr.bf16.mxu0 0
        %1727 = vmatpush1.bf16.msra.mxu0 0
        %1728 = vmatprep.subr.bf16.mxu0 0
        %1729 = vmatpush1.bf16.msra.mxu0 0
        %1730 = vmatprep.subr.bf16.mxu0 0
        %1731 = vmatpush1.bf16.msra.mxu0 0
        %1732 = vmatprep.subr.bf16.mxu0 0
        %1733 = vmatpush1.bf16.msra.mxu0 0
        %1734 = vmatprep.subr.bf16.mxu0 0
        %1735 = vmatpush1.bf16.msra.mxu0 0
        %1736 = vmatprep.subr.bf16.mxu0 0
        %1737 = vmatpush1.bf16.msra.mxu0 0
        %1738 = vmatprep.subr.bf16.mxu0 0
        %1739 = vmatpush1.bf16.msra.mxu0 0
        %1740 = vmatprep.subr.bf16.mxu0 0
        %1741 = vmatpush1.bf16.msra.mxu0 0
        %1742 = vmatprep.mubr.bf16.mxu0 0
        %1743 = vmatmul.mubr.bf16.gmra.mrb[0].mxu0 %v489
        %v1744 = vpop.f32.mrb[0].mxu0
        %v1745 = vadd.f32 0.0, %v1744
        %v1746 = vpop.f32.mrb[0].mxu0
        %v1747 = vadd.f32 0.0, %v1746
        %v1748 = vpop.f32.mrb[0].mxu0
        %v1749 = vadd.f32 0.0, %v1748
        %v1750 = vpop.f32.mrb[0].mxu0
        %v1751 = vadd.f32 0.0, %v1750
        %1752 = vmatprep.mubr.bf16.mxu0 0
        %1753 = vmatmul.mubr.bf16.gmra.mrb[0].mxu0 %v490
        %v1754 = vpop.f32.mrb[0].mxu0
        %v1755 = vadd.f32 0.0, %v1754
        %v1756 = vpop.f32.mrb[0].mxu0
        %v1757 = vadd.f32 0.0, %v1756
        %v1758 = vpop.f32.mrb[0].mxu0
        %v1759 = vadd.f32 0.0, %v1758
        %v1760 = vpop.f32.mrb[0].mxu0
        %v1761 = vadd.f32 0.0, %v1760
        %1762 = vmatprep.mubr.bf16.mxu0 0
        %1763 = vmatmul.mubr.bf16.gmra.mrb[0].mxu0 %v491
        %v1764 = vpop.f32.mrb[0].mxu0
        %v1765 = vadd.f32 0.0, %v1764
        %v1766 = vpop.f32.mrb[0].mxu0
        %v1767 = vadd.f32 0.0, %v1766
        %v1768 = vpop.f32.mrb[0].mxu0
        %v1769 = vadd.f32 0.0, %v1768
        %v1770 = vpop.f32.mrb[0].mxu0
        %v1771 = vadd.f32 0.0, %v1770
        %1772 = vmatprep.mubr.bf16.mxu0 0
        %1773 = vmatmul.mubr.bf16.gmra.mrb[0].mxu0 %v492
        %v1774 = vpop.f32.mrb[0].mxu0
        %v1775 = vadd.f32 0.0, %v1774
        %v1776 = vpop.f32.mrb[0].mxu0
        %v1777 = vadd.f32 0.0, %v1776
        %v1778 = vpop.f32.mrb[0].mxu0
        %v1779 = vadd.f32 0.0, %v1778
        %v1780 = vpop.f32.mrb[0].mxu0
        %v1781 = vadd.f32 0.0, %v1780
        %1782 = vmatprep.mubr.bf16.mxu0 0
        %1783 = vmatmul.mubr.bf16.gmra.mrb[0].mxu0 %v493
        %v1784 = vpop.f32.mrb[0].mxu0
        %v1785 = vadd.f32 0.0, %v1784
        %v1786 = vpop.f32.mrb[0].mxu0
        %v1787 = vadd.f32 0.0, %v1786
        %v1788 = vpop.f32.mrb[0].mxu0
        %v1789 = vadd.f32 0.0, %v1788
        %v1790 = vpop.f32.mrb[0].mxu0
        %v1791 = vadd.f32 0.0, %v1790
        %1792 = vmatprep.mubr.bf16.mxu0 0
        %1793 = vmatmul.mubr.bf16.gmra.mrb[0].mxu0 %v494
        %v1794 = vpop.f32.mrb[0].mxu0
        %v1795 = vadd.f32 0.0, %v1794
        %v1796 = vpop.f32.mrb[0].mxu0
        %v1797 = vadd.f32 0.0, %v1796
        %v1798 = vpop.f32.mrb[0].mxu0
        %v1799 = vadd.f32 0.0, %v1798
        %v1800 = vpop.f32.mrb[0].mxu0
        %v1801 = vadd.f32 0.0, %v1800
        %1802 = vmatprep.mubr.bf16.mxu0 0
        %1803 = vmatmul.mubr.bf16.gmra.mrb[0].mxu0 %v495
        %v1804 = vpop.f32.mrb[0].mxu0
        %v1805 = vadd.f32 0.0, %v1804
        %v1806 = vpop.f32.mrb[0].mxu0
        %v1807 = vadd.f32 0.0, %v1806
        %v1808 = vpop.f32.mrb[0].mxu0
        %v1809 = vadd.f32 0.0, %v1808
        %v1810 = vpop.f32.mrb[0].mxu0
        %v1811 = vadd.f32 0.0, %v1810
        %1812 = vmatprep.mubr.bf16.mxu0 0
        %1813 = vmatmul.mubr.bf16.gmra.mrb[0].mxu0 %v496
        %v1814 = vpop.f32.mrb[0].mxu0
        %v1815 = vadd.f32 0.0, %v1814
        %v1816 = vpop.f32.mrb[0].mxu0
        %v1817 = vadd.f32 0.0, %v1816
        %v1818 = vpop.f32.mrb[0].mxu0
        %v1819 = vadd.f32 0.0, %v1818
        %v1820 = vpop.f32.mrb[0].mxu0
        %v1821 = vadd.f32 0.0, %v1820
        %1822 = vdwg.mxu0
        %v1823 = vlaneseq
        %v1824 = vand.u32 %v1823, 127
        %vm1825 = vcmp.lt.s32.totalorder %v1824, 8
        %v1826 = vsel %vm1825, 0.0, -1e+30
        %1827 = vmatprep.subr.mxu0 0.0
        %1828 = vmatpush1.xpose.msra.mxu0 %v1214
        %1829 = vmatprep.subr.mxu0 0.0
        %1830 = vmatpush1.xpose.msra.mxu0 %v1218
        %1831 = vmatprep.subr.mxu0 0.0
        %1832 = vmatpush1.xpose.msra.mxu0 %v1224
        %1833 = vmatprep.subr.mxu0 0.0
        %1834 = vmatpush1.xpose.msra.mxu0 %v1228
        %1835 = vmatprep.subr.mxu0 0.0
        %1836 = vmatpush1.xpose.msra.mxu0 %v1234
        %1837 = vmatprep.subr.mxu0 0.0
        %1838 = vmatpush1.xpose.msra.mxu0 %v1238
        %1839 = vmatprep.subr.mxu0 0.0
        %1840 = vmatpush1.xpose.msra.mxu0 %v1244
        %1841 = vmatprep.subr.mxu0 0.0
        %1842 = vmatpush1.xpose.msra.mxu0 %v1248
        %1843 = vmatprep.subr.mxu0 0.0
        %1844 = vmatpush1.xpose.msra.mxu0 %v1254
        %1845 = vmatprep.subr.mxu0 0.0
        %1846 = vmatpush1.xpose.msra.mxu0 %v1258
        %1847 = vmatprep.subr.mxu0 0.0
        %1848 = vmatpush1.xpose.msra.mxu0 %v1264
        %1849 = vmatprep.subr.mxu0 0.0
        %1850 = vmatpush1.xpose.msra.mxu0 %v1268
        %1851 = vmatprep.subr.mxu0 0.0
        %1852 = vmatpush1.xpose.msra.mxu0 %v1274
        %1853 = vmatprep.subr.mxu0 0.0
        %1854 = vmatpush1.xpose.msra.mxu0 %v1278
        %1855 = vmatprep.subr.mxu0 0.0
        %1856 = vmatpush1.xpose.msra.mxu0 %v1284
        %1857 = vmatprep.subr.mxu0 0.0
        %1858 = vmatpush1.xpose.msra.mxu0 %v1288
        %1859 = vmatprep.subr.mxu0 0.0
        %1860 = vmatpush1.xpose.msra.mxu0 0.0
        %1861 = vmatprep.subr.mxu0 0.0
        %1862 = vmatpush1.xpose.msra.mxu0 0.0
        %1863 = vmatprep.subr.mxu0 0.0
        %1864 = vmatpush1.xpose.msra.mxu0 0.0
        %1865 = vmatprep.subr.mxu0 0.0
        %1866 = vmatpush1.xpose.msra.mxu0 0.0
        %1867 = vmatprep.subr.mxu0 0.0
        %1868 = vmatpush1.xpose.msra.mxu0 0.0
        %1869 = vmatprep.subr.mxu0 0.0
        %1870 = vmatpush1.xpose.msra.mxu0 0.0
        %1871 = vmatprep.subr.mxu0 0.0
        %1872 = vmatpush1.xpose.msra.mxu0 0.0
        %1873 = vmatprep.subr.mxu0 0.0
        %1874 = vmatpush1.xpose.msra.mxu0 0.0
        %1875 = vmatprep.subr.mxu0 0.0
        %1876 = vmatpush1.xpose.msra.mxu0 0.0
        %1877 = vmatprep.subr.mxu0 0.0
        %1878 = vmatpush1.xpose.msra.mxu0 0.0
        %1879 = vmatprep.subr.mxu0 0.0
        %1880 = vmatpush1.xpose.msra.mxu0 0.0
        %1881 = vmatprep.subr.mxu0 0.0
        %1882 = vmatpush1.xpose.msra.mxu0 0.0
        %1883 = vmatprep.subr.mxu0 0.0
        %1884 = vmatpush1.xpose.msra.mxu0 0.0
        %1885 = vmatprep.subr.mxu0 0.0
        %1886 = vmatpush1.xpose.msra.mxu0 0.0
        %1887 = vmatprep.subr.mxu0 0.0
        %1888 = vmatpush1.xpose.msra.mxu0 0.0
        %1889 = vmatprep.subr.mxu0 0.0
        %1890 = vmatpush1.xpose.msra.mxu0 0.0
        %1891 = vmatprep.mubr.f32.mxu0 0.0
        %1892 = vmatmul.mubr.f32.gmra.mrb[0].mxu0 %v988
        %v1893 = vpop.f32.mrb[0].mxu0
        %v1894 = vadd.f32 %v1826, %v1893
        %v1895 = vpop.f32.mrb[0].mxu0
        %1896 = vmatprep.mubr.f32.mxu0 0.0
        %1897 = vmatmul.mubr.f32.gmra.mrb[0].mxu0 %v992
        %v1898 = vpop.f32.mrb[0].mxu0
        %v1899 = vadd.f32 %v1826, %v1898
        %v1900 = vpop.f32.mrb[0].mxu0
        %1901 = vmatprep.mubr.f32.mxu0 0.0
        %1902 = vmatmul.mubr.f32.gmra.mrb[0].mxu0 %v998
        %v1903 = vpop.f32.mrb[0].mxu0
        %v1904 = vadd.f32 %v1826, %v1903
        %v1905 = vpop.f32.mrb[0].mxu0
        %1906 = vmatprep.mubr.f32.mxu0 0.0
        %1907 = vmatmul.mubr.f32.gmra.mrb[0].mxu0 %v1002
        %v1908 = vpop.f32.mrb[0].mxu0
        %v1909 = vadd.f32 %v1826, %v1908
        %v1910 = vpop.f32.mrb[0].mxu0
        %1911 = vmatprep.mubr.f32.mxu0 0.0
        %1912 = vmatmul.mubr.f32.gmra.mrb[0].mxu0 %v1008
        %v1913 = vpop.f32.mrb[0].mxu0
        %v1914 = vadd.f32 %v1826, %v1913
        %v1915 = vpop.f32.mrb[0].mxu0
        %1916 = vmatprep.mubr.f32.mxu0 0.0
        %1917 = vmatmul.mubr.f32.gmra.mrb[0].mxu0 %v1012
        %v1918 = vpop.f32.mrb[0].mxu0
        %v1919 = vadd.f32 %v1826, %v1918
        %v1920 = vpop.f32.mrb[0].mxu0
        %1921 = vmatprep.mubr.f32.mxu0 0.0
        %1922 = vmatmul.mubr.f32.gmra.mrb[0].mxu0 %v1018
        %v1923 = vpop.f32.mrb[0].mxu0
        %v1924 = vadd.f32 %v1826, %v1923
        %v1925 = vpop.f32.mrb[0].mxu0
        %1926 = vmatprep.mubr.f32.mxu0 0.0
        %1927 = vmatmul.mubr.f32.gmra.mrb[0].mxu0 %v1022
        %v1928 = vpop.f32.mrb[0].mxu0
        %v1929 = vadd.f32 %v1826, %v1928
        %v1930 = vpop.f32.mrb[0].mxu0
        %1931 = vmatprep.mubr.f32.mxu0 0.0
        %1932 = vmatmul.mubr.f32.gmra.mrb[0].mxu0 %v1028
        %v1933 = vpop.f32.mrb[0].mxu0
        %v1934 = vadd.f32 %v1826, %v1933
        %v1935 = vpop.f32.mrb[0].mxu0
        %1936 = vmatprep.mubr.f32.mxu0 0.0
        %1937 = vmatmul.mubr.f32.gmra.mrb[0].mxu0 %v1032
        %v1938 = vpop.f32.mrb[0].mxu0
        %v1939 = vadd.f32 %v1826, %v1938
        %v1940 = vpop.f32.mrb[0].mxu0
        %1941 = vmatprep.mubr.f32.mxu0 0.0
        %1942 = vmatmul.mubr.f32.gmra.mrb[0].mxu0 %v1038
        %v1943 = vpop.f32.mrb[0].mxu0
        %v1944 = vadd.f32 %v1826, %v1943
        %v1945 = vpop.f32.mrb[0].mxu0
        %1946 = vmatprep.mubr.f32.mxu0 0.0
        %1947 = vmatmul.mubr.f32.gmra.mrb[0].mxu0 %v1042
        %v1948 = vpop.f32.mrb[0].mxu0
        %v1949 = vadd.f32 %v1826, %v1948
        %v1950 = vpop.f32.mrb[0].mxu0
        %1951 = vmatprep.mubr.f32.mxu0 0.0
        %1952 = vmatmul.mubr.f32.gmra.mrb[0].mxu0 %v1048
        %v1953 = vpop.f32.mrb[0].mxu0
        %v1954 = vadd.f32 %v1826, %v1953
        %v1955 = vpop.f32.mrb[0].mxu0
        %1956 = vmatprep.mubr.f32.mxu0 0.0
        %1957 = vmatmul.mubr.f32.gmra.mrb[0].mxu0 %v1052
        %v1958 = vpop.f32.mrb[0].mxu0
        %v1959 = vadd.f32 %v1826, %v1958
        %v1960 = vpop.f32.mrb[0].mxu0
        %1961 = vmatprep.mubr.f32.mxu0 0.0
        %1962 = vmatmul.mubr.f32.gmra.mrb[0].mxu0 %v1058
        %v1963 = vpop.f32.mrb[0].mxu0
        %v1964 = vadd.f32 %v1826, %v1963
        %v1965 = vpop.f32.mrb[0].mxu0
        %1966 = vmatprep.mubr.f32.mxu0 0.0
        %1967 = vmatmul.mubr.f32.gmra.mrb[0].mxu0 %v1062
        %v1968 = vpop.f32.mrb[0].mxu0
        %v1969 = vadd.f32 %v1826, %v1968
        %v1970 = vpop.f32.mrb[0].mxu0
        %1971 = vdwg.mxu0
        %1972 = vmax.xlane.f32.xlu0 %v1894
        %v1973 = vpop.xlane.xlu0 %1972
        %1974 = vmax.xlane.f32.xlu0 %v1899
        %v1975 = vpop.xlane.xlu0 %1974
        %1976 = vmax.xlane.f32.xlu0 %v1904
        %v1977 = vpop.xlane.xlu0 %1976
        %1978 = vmax.xlane.f32.xlu0 %v1909
        %v1979 = vpop.xlane.xlu0 %1978
        %1980 = vmax.xlane.f32.xlu0 %v1914
        %v1981 = vpop.xlane.xlu0 %1980
        %1982 = vmax.xlane.f32.xlu0 %v1919
        %v1983 = vpop.xlane.xlu0 %1982
        %1984 = vmax.xlane.f32.xlu0 %v1924
        %v1985 = vpop.xlane.xlu0 %1984
        %1986 = vmax.xlane.f32.xlu0 %v1929
        %v1987 = vpop.xlane.xlu0 %1986
        %1988 = vmax.xlane.f32.xlu0 %v1934
        %v1989 = vpop.xlane.xlu0 %1988
        %1990 = vmax.xlane.f32.xlu0 %v1939
        %v1991 = vpop.xlane.xlu0 %1990
        %1992 = vmax.xlane.f32.xlu0 %v1944
        %v1993 = vpop.xlane.xlu0 %1992
        %1994 = vmax.xlane.f32.xlu0 %v1949
        %v1995 = vpop.xlane.xlu0 %1994
        %1996 = vmax.xlane.f32.xlu0 %v1954
        %v1997 = vpop.xlane.xlu0 %1996
        %1998 = vmax.xlane.f32.xlu0 %v1959
        %v1999 = vpop.xlane.xlu0 %1998
        %2000 = vmax.xlane.f32.xlu0 %v1964
        %v2001 = vpop.xlane.xlu0 %2000
        %2002 = vmax.xlane.f32.xlu0 %v1969
        %v2003 = vpop.xlane.xlu0 %2002
        %v2004 = vsub.f32 %v1894, %v1973
        %v2005 = vsub.f32 %v1899, %v1975
        %v2006 = vsub.f32 %v1904, %v1977
        %v2007 = vsub.f32 %v1909, %v1979
        %v2008 = vsub.f32 %v1914, %v1981
        %v2009 = vsub.f32 %v1919, %v1983
        %v2010 = vsub.f32 %v1924, %v1985
        %v2011 = vsub.f32 %v1929, %v1987
        %v2012 = vsub.f32 %v1934, %v1989
        %v2013 = vsub.f32 %v1939, %v1991
        %v2014 = vsub.f32 %v1944, %v1993
        %v2015 = vsub.f32 %v1949, %v1995
        %v2016 = vsub.f32 %v1954, %v1997
        %v2017 = vsub.f32 %v1959, %v1999
        %v2018 = vsub.f32 %v1964, %v2001
        %v2019 = vsub.f32 %v1969, %v2003
        %v2020 = vmul.f32 %v2004, 1.442695
        %v2021 = vpow.pop %v2020
        %v2022 = vmul.f32 %v2005, 1.442695
        %v2023 = vpow.pop %v2022
        %v2024 = vmul.f32 %v2006, 1.442695
        %v2025 = vpow.pop %v2024
        %v2026 = vmul.f32 %v2007, 1.442695
        %v2027 = vpow.pop %v2026
        %v2028 = vmul.f32 %v2008, 1.442695
        %v2029 = vpow.pop %v2028
        %v2030 = vmul.f32 %v2009, 1.442695
        %v2031 = vpow.pop %v2030
        %v2032 = vmul.f32 %v2010, 1.442695
        %v2033 = vpow.pop %v2032
        %v2034 = vmul.f32 %v2011, 1.442695
        %v2035 = vpow.pop %v2034
        %v2036 = vmul.f32 %v2012, 1.442695
        %v2037 = vpow.pop %v2036
        %v2038 = vmul.f32 %v2013, 1.442695
        %v2039 = vpow.pop %v2038
        %v2040 = vmul.f32 %v2014, 1.442695
        %v2041 = vpow.pop %v2040
        %v2042 = vmul.f32 %v2015, 1.442695
        %v2043 = vpow.pop %v2042
        %v2044 = vmul.f32 %v2016, 1.442695
        %v2045 = vpow.pop %v2044
        %v2046 = vmul.f32 %v2017, 1.442695
        %v2047 = vpow.pop %v2046
        %v2048 = vmul.f32 %v2018, 1.442695
        %v2049 = vpow.pop %v2048
        %v2050 = vmul.f32 %v2019, 1.442695
        %v2051 = vpow.pop %v2050
        %2052 = vadd.xlane.f32.xlu0 %v2021
        %v2053 = vpop.xlane.xlu0 %2052
        %2054 = vadd.xlane.f32.xlu0 %v2023
        %v2055 = vpop.xlane.xlu0 %2054
        %2056 = vadd.xlane.f32.xlu0 %v2025
        %v2057 = vpop.xlane.xlu0 %2056
        %2058 = vadd.xlane.f32.xlu0 %v2027
        %v2059 = vpop.xlane.xlu0 %2058
        %2060 = vadd.xlane.f32.xlu0 %v2029
        %v2061 = vpop.xlane.xlu0 %2060
        %2062 = vadd.xlane.f32.xlu0 %v2031
        %v2063 = vpop.xlane.xlu0 %2062
        %2064 = vadd.xlane.f32.xlu0 %v2033
        %v2065 = vpop.xlane.xlu0 %2064
        %2066 = vadd.xlane.f32.xlu0 %v2035
        %v2067 = vpop.xlane.xlu0 %2066
        %2068 = vadd.xlane.f32.xlu0 %v2037
        %v2069 = vpop.xlane.xlu0 %2068
        %2070 = vadd.xlane.f32.xlu0 %v2039
        %v2071 = vpop.xlane.xlu0 %2070
        %2072 = vadd.xlane.f32.xlu0 %v2041
        %v2073 = vpop.xlane.xlu0 %2072
        %2074 = vadd.xlane.f32.xlu0 %v2043
        %v2075 = vpop.xlane.xlu0 %2074
        %2076 = vadd.xlane.f32.xlu0 %v2045
        %v2077 = vpop.xlane.xlu0 %2076
        %2078 = vadd.xlane.f32.xlu0 %v2047
        %v2079 = vpop.xlane.xlu0 %2078
        %2080 = vadd.xlane.f32.xlu0 %v2049
        %v2081 = vpop.xlane.xlu0 %2080
        %2082 = vadd.xlane.f32.xlu0 %v2051
        %v2083 = vpop.xlane.xlu0 %2082
        %v2084 = vrcp.pop %v2053
        %v2085 = vrcp.pop %v2055
        %v2086 = vrcp.pop %v2057
        %v2087 = vrcp.pop %v2059
        %v2088 = vrcp.pop %v2061
        %v2089 = vrcp.pop %v2063
        %v2090 = vrcp.pop %v2065
        %v2091 = vrcp.pop %v2067
        %v2092 = vrcp.pop %v2069
        %v2093 = vrcp.pop %v2071
        %v2094 = vrcp.pop %v2073
        %v2095 = vrcp.pop %v2075
        %v2096 = vrcp.pop %v2077
        %v2097 = vrcp.pop %v2079
        %v2098 = vrcp.pop %v2081
        %v2099 = vrcp.pop %v2083
        %v2100 = vmul.f32 %v2021, %v2084
        %v2101 = vmul.f32 %v2023, %v2085
        %v2102 = vmul.f32 %v2025, %v2086
        %v2103 = vmul.f32 %v2027, %v2087
        %v2104 = vmul.f32 %v2029, %v2088
        %v2105 = vmul.f32 %v2031, %v2089
        %v2106 = vmul.f32 %v2033, %v2090
        %v2107 = vmul.f32 %v2035, %v2091
        %v2108 = vmul.f32 %v2037, %v2092
        %v2109 = vmul.f32 %v2039, %v2093
        %v2110 = vmul.f32 %v2041, %v2094
        %v2111 = vmul.f32 %v2043, %v2095
        %v2112 = vmul.f32 %v2045, %v2096
        %v2113 = vmul.f32 %v2047, %v2097
        %v2114 = vmul.f32 %v2049, %v2098
        %v2115 = vmul.f32 %v2051, %v2099
        %v2116 = vpack.c.bf16 %v2101, %v2100
        %v2117 = vpack.c.bf16 %v2103, %v2102
        %v2118 = vpack.c.bf16 %v2105, %v2104
        %v2119 = vpack.c.bf16 %v2107, %v2106
        %v2120 = vpack.c.bf16 %v2109, %v2108
        %v2121 = vpack.c.bf16 %v2111, %v2110
        %v2122 = vpack.c.bf16 %v2113, %v2112
        %v2123 = vpack.c.bf16 %v2115, %v2114
        %v2124 = vpack.c.bf16 %v1636, %v1632
        %v2125 = vpack.c.bf16 %v1646, %v1642
        %v2126 = vpack.c.bf16 %v1656, %v1652
        %v2127 = vpack.c.bf16 %v1666, %v1662
        %v2128 = vpack.c.bf16 %v1676, %v1672
        %v2129 = vpack.c.bf16 %v1686, %v1682
        %v2130 = vpack.c.bf16 %v1696, %v1692
        %v2131 = vpack.c.bf16 %v1706, %v1702
        %2132 = vmatprep.subr.bf16.mxu0 0
        %2133 = vmatpush1.bf16.msra.mxu0 %v2124
        %2134 = vmatprep.subr.bf16.mxu0 0
        %2135 = vmatpush1.bf16.msra.mxu0 %v2125
        %2136 = vmatprep.subr.bf16.mxu0 0
        %2137 = vmatpush1.bf16.msra.mxu0 %v2126
        %2138 = vmatprep.subr.bf16.mxu0 0
        %2139 = vmatpush1.bf16.msra.mxu0 %v2127
        %2140 = vmatprep.subr.bf16.mxu0 0
        %2141 = vmatpush1.bf16.msra.mxu0 %v2128
        %2142 = vmatprep.subr.bf16.mxu0 0
        %2143 = vmatpush1.bf16.msra.mxu0 %v2129
        %2144 = vmatprep.subr.bf16.mxu0 0
        %2145 = vmatpush1.bf16.msra.mxu0 %v2130
        %2146 = vmatprep.subr.bf16.mxu0 0
        %2147 = vmatpush1.bf16.msra.mxu0 %v2131
        %2148 = vmatprep.subr.bf16.mxu0 0
        %2149 = vmatpush1.bf16.msra.mxu0 0
        %2150 = vmatprep.subr.bf16.mxu0 0
        %2151 = vmatpush1.bf16.msra.mxu0 0
        %2152 = vmatprep.subr.bf16.mxu0 0
        %2153 = vmatpush1.bf16.msra.mxu0 0
        %2154 = vmatprep.subr.bf16.mxu0 0
        %2155 = vmatpush1.bf16.msra.mxu0 0
        %2156 = vmatprep.subr.bf16.mxu0 0
        %2157 = vmatpush1.bf16.msra.mxu0 0
        %2158 = vmatprep.subr.bf16.mxu0 0
        %2159 = vmatpush1.bf16.msra.mxu0 0
        %2160 = vmatprep.subr.bf16.mxu0 0
        %2161 = vmatpush1.bf16.msra.mxu0 0
        %2162 = vmatprep.subr.bf16.mxu0 0
        %2163 = vmatpush1.bf16.msra.mxu0 0
        %2164 = vmatprep.mubr.bf16.mxu0 0
        %2165 = vmatmul.mubr.bf16.gmra.mrb[0].mxu0 %v2116
        %v2166 = vpop.f32.mrb[0].mxu0
        %v2167 = vadd.f32 0.0, %v2166
        %v2168 = vpop.f32.mrb[0].mxu0
        %v2169 = vpop.f32.mrb[0].mxu0
        %v2170 = vadd.f32 0.0, %v2169
        %v2171 = vpop.f32.mrb[0].mxu0
        %2172 = vmatprep.mubr.bf16.mxu0 0
        %2173 = vmatmul.mubr.bf16.gmra.mrb[0].mxu0 %v2117
        %v2174 = vpop.f32.mrb[0].mxu0
        %v2175 = vadd.f32 0.0, %v2174
        %v2176 = vpop.f32.mrb[0].mxu0
        %v2177 = vpop.f32.mrb[0].mxu0
        %v2178 = vadd.f32 0.0, %v2177
        %v2179 = vpop.f32.mrb[0].mxu0
        %2180 = vmatprep.mubr.bf16.mxu0 0
        %2181 = vmatmul.mubr.bf16.gmra.mrb[0].mxu0 %v2118
        %v2182 = vpop.f32.mrb[0].mxu0
        %v2183 = vadd.f32 0.0, %v2182
        %v2184 = vpop.f32.mrb[0].mxu0
        %v2185 = vpop.f32.mrb[0].mxu0
        %v2186 = vadd.f32 0.0, %v2185
        %v2187 = vpop.f32.mrb[0].mxu0
        %2188 = vmatprep.mubr.bf16.mxu0 0
        %2189 = vmatmul.mubr.bf16.gmra.mrb[0].mxu0 %v2119
        %v2190 = vpop.f32.mrb[0].mxu0
        %v2191 = vadd.f32 0.0, %v2190
        %v2192 = vpop.f32.mrb[0].mxu0
        %v2193 = vpop.f32.mrb[0].mxu0
        %v2194 = vadd.f32 0.0, %v2193
        %v2195 = vpop.f32.mrb[0].mxu0
        %2196 = vmatprep.mubr.bf16.mxu0 0
        %2197 = vmatmul.mubr.bf16.gmra.mrb[0].mxu0 %v2120
        %v2198 = vpop.f32.mrb[0].mxu0
        %v2199 = vadd.f32 0.0, %v2198
        %v2200 = vpop.f32.mrb[0].mxu0
        %v2201 = vpop.f32.mrb[0].mxu0
        %v2202 = vadd.f32 0.0, %v2201
        %v2203 = vpop.f32.mrb[0].mxu0
        %2204 = vmatprep.mubr.bf16.mxu0 0
        %2205 = vmatmul.mubr.bf16.gmra.mrb[0].mxu0 %v2121
        %v2206 = vpop.f32.mrb[0].mxu0
        %v2207 = vadd.f32 0.0, %v2206
        %v2208 = vpop.f32.mrb[0].mxu0
        %v2209 = vpop.f32.mrb[0].mxu0
        %v2210 = vadd.f32 0.0, %v2209
        %v2211 = vpop.f32.mrb[0].mxu0
        %2212 = vmatprep.mubr.bf16.mxu0 0
        %2213 = vmatmul.mubr.bf16.gmra.mrb[0].mxu0 %v2122
        %v2214 = vpop.f32.mrb[0].mxu0
        %v2215 = vadd.f32 0.0, %v2214
        %v2216 = vpop.f32.mrb[0].mxu0
        %v2217 = vpop.f32.mrb[0].mxu0
        %v2218 = vadd.f32 0.0, %v2217
        %v2219 = vpop.f32.mrb[0].mxu0
        %2220 = vmatprep.mubr.bf16.mxu0 0
        %2221 = vmatmul.mubr.bf16.gmra.mrb[0].mxu0 %v2123
        %v2222 = vpop.f32.mrb[0].mxu0
        %v2223 = vadd.f32 0.0, %v2222
        %v2224 = vpop.f32.mrb[0].mxu0
        %v2225 = vpop.f32.mrb[0].mxu0
        %v2226 = vadd.f32 0.0, %v2225
        %v2227 = vpop.f32.mrb[0].mxu0
        %2228 = vdwg.mxu0
        %v2229 = vpack.c.bf16 %v2170, %v2167
        %v2230 = vpack.c.bf16 %v2178, %v2175
        %v2231 = vpack.c.bf16 %v2186, %v2183
        %v2232 = vpack.c.bf16 %v2194, %v2191
        %v2233 = vpack.c.bf16 %v2202, %v2199
        %v2234 = vpack.c.bf16 %v2210, %v2207
        %v2235 = vpack.c.bf16 %v2218, %v2215
        %v2236 = vpack.c.bf16 %v2226, %v2223
        %2237 = vst [vmem:[#allocation3] sm:$0xff] %v2229
        %2238 = vst [vmem:[#allocation3 + $0x20] sm:$0xff] %v2230
        %2239 = vst [vmem:[#allocation3 + $0x40] sm:$0xff] %v2231
        %2240 = vst [vmem:[#allocation3 + $0x60] sm:$0xff] %v2232
        %2241 = vst [vmem:[#allocation3 + $0x80] sm:$0xff] %v2233
        %2242 = vst [vmem:[#allocation3 + $0xa0] sm:$0xff] %v2234
        %2243 = vst [vmem:[#allocation3 + $0xc0] sm:$0xff] %v2235
        %2244 = vst [vmem:[#allocation3 + $0xe0] sm:$0xff] %v2236
        %2245 = vmatprep.subr.mxu0 0.0
        %2246 = vmatpush1.xpose.msra.mxu0 %v1216
        %2247 = vmatprep.subr.mxu0 0.0
        %2248 = vmatpush1.xpose.msra.mxu0 %v1220
        %2249 = vmatprep.subr.mxu0 0.0
        %2250 = vmatpush1.xpose.msra.mxu0 %v1226
        %2251 = vmatprep.subr.mxu0 0.0
        %2252 = vmatpush1.xpose.msra.mxu0 %v1230
        %2253 = vmatprep.subr.mxu0 0.0
        %2254 = vmatpush1.xpose.msra.mxu0 %v1236
        %2255 = vmatprep.subr.mxu0 0.0
        %2256 = vmatpush1.xpose.msra.mxu0 %v1240
        %2257 = vmatprep.subr.mxu0 0.0
        %2258 = vmatpush1.xpose.msra.mxu0 %v1246
        %2259 = vmatprep.subr.mxu0 0.0
        %2260 = vmatpush1.xpose.msra.mxu0 %v1250
        %2261 = vmatprep.subr.mxu0 0.0
        %2262 = vmatpush1.xpose.msra.mxu0 %v1256
        %2263 = vmatprep.subr.mxu0 0.0
        %2264 = vmatpush1.xpose.msra.mxu0 %v1260
        %2265 = vmatprep.subr.mxu0 0.0
        %2266 = vmatpush1.xpose.msra.mxu0 %v1266
        %2267 = vmatprep.subr.mxu0 0.0
        %2268 = vmatpush1.xpose.msra.mxu0 %v1270
        %2269 = vmatprep.subr.mxu0 0.0
        %2270 = vmatpush1.xpose.msra.mxu0 %v1276
        %2271 = vmatprep.subr.mxu0 0.0
        %2272 = vmatpush1.xpose.msra.mxu0 %v1280
        %2273 = vmatprep.subr.mxu0 0.0
        %2274 = vmatpush1.xpose.msra.mxu0 %v1286
        %2275 = vmatprep.subr.mxu0 0.0
        %2276 = vmatpush1.xpose.msra.mxu0 %v1290
        %2277 = vmatprep.subr.mxu0 0.0
        %2278 = vmatpush1.xpose.msra.mxu0 0.0
        %2279 = vmatprep.subr.mxu0 0.0
        %2280 = vmatpush1.xpose.msra.mxu0 0.0
        %2281 = vmatprep.subr.mxu0 0.0
        %2282 = vmatpush1.xpose.msra.mxu0 0.0
        %2283 = vmatprep.subr.mxu0 0.0
        %2284 = vmatpush1.xpose.msra.mxu0 0.0
        %2285 = vmatprep.subr.mxu0 0.0
        %2286 = vmatpush1.xpose.msra.mxu0 0.0
        %2287 = vmatprep.subr.mxu0 0.0
        %2288 = vmatpush1.xpose.msra.mxu0 0.0
        %2289 = vmatprep.subr.mxu0 0.0
        %2290 = vmatpush1.xpose.msra.mxu0 0.0
        %2291 = vmatprep.subr.mxu0 0.0
        %2292 = vmatpush1.xpose.msra.mxu0 0.0
        %2293 = vmatprep.subr.mxu0 0.0
        %2294 = vmatpush1.xpose.msra.mxu0 0.0
        %2295 = vmatprep.subr.mxu0 0.0
        %2296 = vmatpush1.xpose.msra.mxu0 0.0
        %2297 = vmatprep.subr.mxu0 0.0
        %2298 = vmatpush1.xpose.msra.mxu0 0.0
        %2299 = vmatprep.subr.mxu0 0.0
        %2300 = vmatpush1.xpose.msra.mxu0 0.0
        %2301 = vmatprep.subr.mxu0 0.0
        %2302 = vmatpush1.xpose.msra.mxu0 0.0
        %2303 = vmatprep.subr.mxu0 0.0
        %2304 = vmatpush1.xpose.msra.mxu0 0.0
        %2305 = vmatprep.subr.mxu0 0.0
        %2306 = vmatpush1.xpose.msra.mxu0 0.0
        %2307 = vmatprep.subr.mxu0 0.0
        %2308 = vmatpush1.xpose.msra.mxu0 0.0
        %2309 = vmatprep.mubr.f32.mxu0 0.0
        %2310 = vmatmul.mubr.f32.gmra.mrb[0].mxu0 %v990
        %v2311 = vpop.f32.mrb[0].mxu0
        %v2312 = vadd.f32 %v1826, %v2311
        %v2313 = vpop.f32.mrb[0].mxu0
        %2314 = vmatprep.mubr.f32.mxu0 0.0
        %2315 = vmatmul.mubr.f32.gmra.mrb[0].mxu0 %v994
        %v2316 = vpop.f32.mrb[0].mxu0
        %v2317 = vadd.f32 %v1826, %v2316
        %v2318 = vpop.f32.mrb[0].mxu0
        %2319 = vmatprep.mubr.f32.mxu0 0.0
        %2320 = vmatmul.mubr.f32.gmra.mrb[0].mxu0 %v1000
        %v2321 = vpop.f32.mrb[0].mxu0
        %v2322 = vadd.f32 %v1826, %v2321
        %v2323 = vpop.f32.mrb[0].mxu0
        %2324 = vmatprep.mubr.f32.mxu0 0.0
        %2325 = vmatmul.mubr.f32.gmra.mrb[0].mxu0 %v1004
        %v2326 = vpop.f32.mrb[0].mxu0
        %v2327 = vadd.f32 %v1826, %v2326
        %v2328 = vpop.f32.mrb[0].mxu0
        %2329 = vmatprep.mubr.f32.mxu0 0.0
        %2330 = vmatmul.mubr.f32.gmra.mrb[0].mxu0 %v1010
        %v2331 = vpop.f32.mrb[0].mxu0
        %v2332 = vadd.f32 %v1826, %v2331
        %v2333 = vpop.f32.mrb[0].mxu0
        %2334 = vmatprep.mubr.f32.mxu0 0.0
        %2335 = vmatmul.mubr.f32.gmra.mrb[0].mxu0 %v1014
        %v2336 = vpop.f32.mrb[0].mxu0
        %v2337 = vadd.f32 %v1826, %v2336
        %v2338 = vpop.f32.mrb[0].mxu0
        %2339 = vmatprep.mubr.f32.mxu0 0.0
        %2340 = vmatmul.mubr.f32.gmra.mrb[0].mxu0 %v1020
        %v2341 = vpop.f32.mrb[0].mxu0
        %v2342 = vadd.f32 %v1826, %v2341
        %v2343 = vpop.f32.mrb[0].mxu0
        %2344 = vmatprep.mubr.f32.mxu0 0.0
        %2345 = vmatmul.mubr.f32.gmra.mrb[0].mxu0 %v1024
        %v2346 = vpop.f32.mrb[0].mxu0
        %v2347 = vadd.f32 %v1826, %v2346
        %v2348 = vpop.f32.mrb[0].mxu0
        %2349 = vmatprep.mubr.f32.mxu0 0.0
        %2350 = vmatmul.mubr.f32.gmra.mrb[0].mxu0 %v1030
        %v2351 = vpop.f32.mrb[0].mxu0
        %v2352 = vadd.f32 %v1826, %v2351
        %v2353 = vpop.f32.mrb[0].mxu0
        %2354 = vmatprep.mubr.f32.mxu0 0.0
        %2355 = vmatmul.mubr.f32.gmra.mrb[0].mxu0 %v1034
        %v2356 = vpop.f32.mrb[0].mxu0
        %v2357 = vadd.f32 %v1826, %v2356
        %v2358 = vpop.f32.mrb[0].mxu0
        %2359 = vmatprep.mubr.f32.mxu0 0.0
        %2360 = vmatmul.mubr.f32.gmra.mrb[0].mxu0 %v1040
        %v2361 = vpop.f32.mrb[0].mxu0
        %v2362 = vadd.f32 %v1826, %v2361
        %v2363 = vpop.f32.mrb[0].mxu0
        %2364 = vmatprep.mubr.f32.mxu0 0.0
        %2365 = vmatmul.mubr.f32.gmra.mrb[0].mxu0 %v1044
        %v2366 = vpop.f32.mrb[0].mxu0
        %v2367 = vadd.f32 %v1826, %v2366
        %v2368 = vpop.f32.mrb[0].mxu0
        %2369 = vmatprep.mubr.f32.mxu0 0.0
        %2370 = vmatmul.mubr.f32.gmra.mrb[0].mxu0 %v1050
        %v2371 = vpop.f32.mrb[0].mxu0
        %v2372 = vadd.f32 %v1826, %v2371
        %v2373 = vpop.f32.mrb[0].mxu0
        %2374 = vmatprep.mubr.f32.mxu0 0.0
        %2375 = vmatmul.mubr.f32.gmra.mrb[0].mxu0 %v1054
        %v2376 = vpop.f32.mrb[0].mxu0
        %v2377 = vadd.f32 %v1826, %v2376
        %v2378 = vpop.f32.mrb[0].mxu0
        %2379 = vmatprep.mubr.f32.mxu0 0.0
        %2380 = vmatmul.mubr.f32.gmra.mrb[0].mxu0 %v1060
        %v2381 = vpop.f32.mrb[0].mxu0
        %v2382 = vadd.f32 %v1826, %v2381
        %v2383 = vpop.f32.mrb[0].mxu0
        %2384 = vmatprep.mubr.f32.mxu0 0.0
        %2385 = vmatmul.mubr.f32.gmra.mrb[0].mxu0 %v1064
        %v2386 = vpop.f32.mrb[0].mxu0
        %v2387 = vadd.f32 %v1826, %v2386
        %v2388 = vpop.f32.mrb[0].mxu0
        %2389 = vdwg.mxu0
        %2390 = vmax.xlane.f32.xlu0 %v2312
        %v2391 = vpop.xlane.xlu0 %2390
        %2392 = vmax.xlane.f32.xlu0 %v2317
        %v2393 = vpop.xlane.xlu0 %2392
        %2394 = vmax.xlane.f32.xlu0 %v2322
        %v2395 = vpop.xlane.xlu0 %2394
        %2396 = vmax.xlane.f32.xlu0 %v2327
        %v2397 = vpop.xlane.xlu0 %2396
        %2398 = vmax.xlane.f32.xlu0 %v2332
        %v2399 = vpop.xlane.xlu0 %2398
        %2400 = vmax.xlane.f32.xlu0 %v2337
        %v2401 = vpop.xlane.xlu0 %2400
        %2402 = vmax.xlane.f32.xlu0 %v2342
        %v2403 = vpop.xlane.xlu0 %2402
        %2404 = vmax.xlane.f32.xlu0 %v2347
        %v2405 = vpop.xlane.xlu0 %2404
        %2406 = vmax.xlane.f32.xlu0 %v2352
        %v2407 = vpop.xlane.xlu0 %2406
        %2408 = vmax.xlane.f32.xlu0 %v2357
        %v2409 = vpop.xlane.xlu0 %2408
        %2410 = vmax.xlane.f32.xlu0 %v2362
        %v2411 = vpop.xlane.xlu0 %2410
        %2412 = vmax.xlane.f32.xlu0 %v2367
        %v2413 = vpop.xlane.xlu0 %2412
        %2414 = vmax.xlane.f32.xlu0 %v2372
        %v2415 = vpop.xlane.xlu0 %2414
        %2416 = vmax.xlane.f32.xlu0 %v2377
        %v2417 = vpop.xlane.xlu0 %2416
        %2418 = vmax.xlane.f32.xlu0 %v2382
        %v2419 = vpop.xlane.xlu0 %2418
        %2420 = vmax.xlane.f32.xlu0 %v2387
        %v2421 = vpop.xlane.xlu0 %2420
        %v2422 = vsub.f32 %v2312, %v2391
        %v2423 = vsub.f32 %v2317, %v2393
        %v2424 = vsub.f32 %v2322, %v2395
        %v2425 = vsub.f32 %v2327, %v2397
        %v2426 = vsub.f32 %v2332, %v2399
        %v2427 = vsub.f32 %v2337, %v2401
        %v2428 = vsub.f32 %v2342, %v2403
        %v2429 = vsub.f32 %v2347, %v2405
        %v2430 = vsub.f32 %v2352, %v2407
        %v2431 = vsub.f32 %v2357, %v2409
        %v2432 = vsub.f32 %v2362, %v2411
        %v2433 = vsub.f32 %v2367, %v2413
        %v2434 = vsub.f32 %v2372, %v2415
        %v2435 = vsub.f32 %v2377, %v2417
        %v2436 = vsub.f32 %v2382, %v2419
        %v2437 = vsub.f32 %v2387, %v2421
        %v2438 = vmul.f32 %v2422, 1.442695
        %v2439 = vpow.pop %v2438
        %v2440 = vmul.f32 %v2423, 1.442695
        %v2441 = vpow.pop %v2440
        %v2442 = vmul.f32 %v2424, 1.442695
        %v2443 = vpow.pop %v2442
        %v2444 = vmul.f32 %v2425, 1.442695
        %v2445 = vpow.pop %v2444
        %v2446 = vmul.f32 %v2426, 1.442695
        %v2447 = vpow.pop %v2446
        %v2448 = vmul.f32 %v2427, 1.442695
        %v2449 = vpow.pop %v2448
        %v2450 = vmul.f32 %v2428, 1.442695
        %v2451 = vpow.pop %v2450
        %v2452 = vmul.f32 %v2429, 1.442695
        %v2453 = vpow.pop %v2452
        %v2454 = vmul.f32 %v2430, 1.442695
        %v2455 = vpow.pop %v2454
        %v2456 = vmul.f32 %v2431, 1.442695
        %v2457 = vpow.pop %v2456
        %v2458 = vmul.f32 %v2432, 1.442695
        %v2459 = vpow.pop %v2458
        %v2460 = vmul.f32 %v2433, 1.442695
        %v2461 = vpow.pop %v2460
        %v2462 = vmul.f32 %v2434, 1.442695
        %v2463 = vpow.pop %v2462
        %v2464 = vmul.f32 %v2435, 1.442695
        %v2465 = vpow.pop %v2464
        %v2466 = vmul.f32 %v2436, 1.442695
        %v2467 = vpow.pop %v2466
        %v2468 = vmul.f32 %v2437, 1.442695
        %v2469 = vpow.pop %v2468
        %2470 = vadd.xlane.f32.xlu0 %v2439
        %v2471 = vpop.xlane.xlu0 %2470
        %2472 = vadd.xlane.f32.xlu0 %v2441
        %v2473 = vpop.xlane.xlu0 %2472
        %2474 = vadd.xlane.f32.xlu0 %v2443
        %v2475 = vpop.xlane.xlu0 %2474
        %2476 = vadd.xlane.f32.xlu0 %v2445
        %v2477 = vpop.xlane.xlu0 %2476
        %2478 = vadd.xlane.f32.xlu0 %v2447
        %v2479 = vpop.xlane.xlu0 %2478
        %2480 = vadd.xlane.f32.xlu0 %v2449
        %v2481 = vpop.xlane.xlu0 %2480
        %2482 = vadd.xlane.f32.xlu0 %v2451
        %v2483 = vpop.xlane.xlu0 %2482
        %2484 = vadd.xlane.f32.xlu0 %v2453
        %v2485 = vpop.xlane.xlu0 %2484
        %2486 = vadd.xlane.f32.xlu0 %v2455
        %v2487 = vpop.xlane.xlu0 %2486
        %2488 = vadd.xlane.f32.xlu0 %v2457
        %v2489 = vpop.xlane.xlu0 %2488
        %2490 = vadd.xlane.f32.xlu0 %v2459
        %v2491 = vpop.xlane.xlu0 %2490
        %2492 = vadd.xlane.f32.xlu0 %v2461
        %v2493 = vpop.xlane.xlu0 %2492
        %2494 = vadd.xlane.f32.xlu0 %v2463
        %v2495 = vpop.xlane.xlu0 %2494
        %2496 = vadd.xlane.f32.xlu0 %v2465
        %v2497 = vpop.xlane.xlu0 %2496
        %2498 = vadd.xlane.f32.xlu0 %v2467
        %v2499 = vpop.xlane.xlu0 %2498
        %2500 = vadd.xlane.f32.xlu0 %v2469
        %v2501 = vpop.xlane.xlu0 %2500
        %v2502 = vrcp.pop %v2471
        %v2503 = vrcp.pop %v2473
        %v2504 = vrcp.pop %v2475
        %v2505 = vrcp.pop %v2477
        %v2506 = vrcp.pop %v2479
        %v2507 = vrcp.pop %v2481
        %v2508 = vrcp.pop %v2483
        %v2509 = vrcp.pop %v2485
        %v2510 = vrcp.pop %v2487
        %v2511 = vrcp.pop %v2489
        %v2512 = vrcp.pop %v2491
        %v2513 = vrcp.pop %v2493
        %v2514 = vrcp.pop %v2495
        %v2515 = vrcp.pop %v2497
        %v2516 = vrcp.pop %v2499
        %v2517 = vrcp.pop %v2501
        %v2518 = vmul.f32 %v2439, %v2502
        %v2519 = vmul.f32 %v2441, %v2503
        %v2520 = vmul.f32 %v2443, %v2504
        %v2521 = vmul.f32 %v2445, %v2505
        %v2522 = vmul.f32 %v2447, %v2506
        %v2523 = vmul.f32 %v2449, %v2507
        %v2524 = vmul.f32 %v2451, %v2508
        %v2525 = vmul.f32 %v2453, %v2509
        %v2526 = vmul.f32 %v2455, %v2510
        %v2527 = vmul.f32 %v2457, %v2511
        %v2528 = vmul.f32 %v2459, %v2512
        %v2529 = vmul.f32 %v2461, %v2513
        %v2530 = vmul.f32 %v2463, %v2514
        %v2531 = vmul.f32 %v2465, %v2515
        %v2532 = vmul.f32 %v2467, %v2516
        %v2533 = vmul.f32 %v2469, %v2517
        %v2534 = vpack.c.bf16 %v2519, %v2518
        %v2535 = vpack.c.bf16 %v2521, %v2520
        %v2536 = vpack.c.bf16 %v2523, %v2522
        %v2537 = vpack.c.bf16 %v2525, %v2524
        %v2538 = vpack.c.bf16 %v2527, %v2526
        %v2539 = vpack.c.bf16 %v2529, %v2528
        %v2540 = vpack.c.bf16 %v2531, %v2530
        %v2541 = vpack.c.bf16 %v2533, %v2532
        %v2542 = vpack.c.bf16 %v1638, %v1634
        %v2543 = vpack.c.bf16 %v1648, %v1644
        %v2544 = vpack.c.bf16 %v1658, %v1654
        %v2545 = vpack.c.bf16 %v1668, %v1664
        %v2546 = vpack.c.bf16 %v1678, %v1674
        %v2547 = vpack.c.bf16 %v1688, %v1684
        %v2548 = vpack.c.bf16 %v1698, %v1694
        %v2549 = vpack.c.bf16 %v1708, %v1704
        %2550 = vmatprep.subr.bf16.mxu0 0
        %2551 = vmatpush1.bf16.msra.mxu0 %v2542
        %2552 = vmatprep.subr.bf16.mxu0 0
        %2553 = vmatpush1.bf16.msra.mxu0 %v2543
        %2554 = vmatprep.subr.bf16.mxu0 0
        %2555 = vmatpush1.bf16.msra.mxu0 %v2544
        %2556 = vmatprep.subr.bf16.mxu0 0
        %2557 = vmatpush1.bf16.msra.mxu0 %v2545
        %2558 = vmatprep.subr.bf16.mxu0 0
        %2559 = vmatpush1.bf16.msra.mxu0 %v2546
        %2560 = vmatprep.subr.bf16.mxu0 0
        %2561 = vmatpush1.bf16.msra.mxu0 %v2547
        %2562 = vmatprep.subr.bf16.mxu0 0
        %2563 = vmatpush1.bf16.msra.mxu0 %v2548
        %2564 = vmatprep.subr.bf16.mxu0 0
        %2565 = vmatpush1.bf16.msra.mxu0 %v2549
        %2566 = vmatprep.subr.bf16.mxu0 0
        %2567 = vmatpush1.bf16.msra.mxu0 0
        %2568 = vmatprep.subr.bf16.mxu0 0
        %2569 = vmatpush1.bf16.msra.mxu0 0
        %2570 = vmatprep.subr.bf16.mxu0 0
        %2571 = vmatpush1.bf16.msra.mxu0 0
        %2572 = vmatprep.subr.bf16.mxu0 0
        %2573 = vmatpush1.bf16.msra.mxu0 0
        %2574 = vmatprep.subr.bf16.mxu0 0
        %2575 = vmatpush1.bf16.msra.mxu0 0
        %2576 = vmatprep.subr.bf16.mxu0 0
        %2577 = vmatpush1.bf16.msra.mxu0 0
        %2578 = vmatprep.subr.bf16.mxu0 0
        %2579 = vmatpush1.bf16.msra.mxu0 0
        %2580 = vmatprep.subr.bf16.mxu0 0
        %2581 = vmatpush1.bf16.msra.mxu0 0
        %2582 = vmatprep.mubr.bf16.mxu0 0
        %2583 = vmatmul.mubr.bf16.gmra.mrb[0].mxu0 %v2534
        %v2584 = vpop.f32.mrb[0].mxu0
        %v2585 = vadd.f32 0.0, %v2584
        %v2586 = vpop.f32.mrb[0].mxu0
        %v2587 = vpop.f32.mrb[0].mxu0
        %v2588 = vadd.f32 0.0, %v2587
        %v2589 = vpop.f32.mrb[0].mxu0
        %2590 = vmatprep.mubr.bf16.mxu0 0
        %2591 = vmatmul.mubr.bf16.gmra.mrb[0].mxu0 %v2535
        %v2592 = vpop.f32.mrb[0].mxu0
        %v2593 = vadd.f32 0.0, %v2592
        %v2594 = vpop.f32.mrb[0].mxu0
        %v2595 = vpop.f32.mrb[0].mxu0
        %v2596 = vadd.f32 0.0, %v2595
        %v2597 = vpop.f32.mrb[0].mxu0
        %2598 = vmatprep.mubr.bf16.mxu0 0
        %2599 = vmatmul.mubr.bf16.gmra.mrb[0].mxu0 %v2536
        %v2600 = vpop.f32.mrb[0].mxu0
        %v2601 = vadd.f32 0.0, %v2600
        %v2602 = vpop.f32.mrb[0].mxu0
        %v2603 = vpop.f32.mrb[0].mxu0
        %v2604 = vadd.f32 0.0, %v2603
        %v2605 = vpop.f32.mrb[0].mxu0
        %2606 = vmatprep.mubr.bf16.mxu0 0
        %2607 = vmatmul.mubr.bf16.gmra.mrb[0].mxu0 %v2537
        %v2608 = vpop.f32.mrb[0].mxu0
        %v2609 = vadd.f32 0.0, %v2608
        %v2610 = vpop.f32.mrb[0].mxu0
        %v2611 = vpop.f32.mrb[0].mxu0
        %v2612 = vadd.f32 0.0, %v2611
        %v2613 = vpop.f32.mrb[0].mxu0
        %2614 = vmatprep.mubr.bf16.mxu0 0
        %2615 = vmatmul.mubr.bf16.gmra.mrb[0].mxu0 %v2538
        %v2616 = vpop.f32.mrb[0].mxu0
        %v2617 = vadd.f32 0.0, %v2616
        %v2618 = vpop.f32.mrb[0].mxu0
        %v2619 = vpop.f32.mrb[0].mxu0
        %v2620 = vadd.f32 0.0, %v2619
        %v2621 = vpop.f32.mrb[0].mxu0
        %2622 = vmatprep.mubr.bf16.mxu0 0
        %2623 = vmatmul.mubr.bf16.gmra.mrb[0].mxu0 %v2539
        %v2624 = vpop.f32.mrb[0].mxu0
        %v2625 = vadd.f32 0.0, %v2624
        %v2626 = vpop.f32.mrb[0].mxu0
        %v2627 = vpop.f32.mrb[0].mxu0
        %v2628 = vadd.f32 0.0, %v2627
        %v2629 = vpop.f32.mrb[0].mxu0
        %2630 = vmatprep.mubr.bf16.mxu0 0
        %2631 = vmatmul.mubr.bf16.gmra.mrb[0].mxu0 %v2540
        %v2632 = vpop.f32.mrb[0].mxu0
        %v2633 = vadd.f32 0.0, %v2632
        %v2634 = vpop.f32.mrb[0].mxu0
        %v2635 = vpop.f32.mrb[0].mxu0
        %v2636 = vadd.f32 0.0, %v2635
        %v2637 = vpop.f32.mrb[0].mxu0
        %2638 = vmatprep.mubr.bf16.mxu0 0
        %2639 = vmatmul.mubr.bf16.gmra.mrb[0].mxu0 %v2541
        %v2640 = vpop.f32.mrb[0].mxu0
        %v2641 = vadd.f32 0.0, %v2640
        %v2642 = vpop.f32.mrb[0].mxu0
        %v2643 = vpop.f32.mrb[0].mxu0
        %v2644 = vadd.f32 0.0, %v2643
        %v2645 = vpop.f32.mrb[0].mxu0
        %2646 = vdwg.mxu0
        %v2647 = vpack.c.bf16 %v2588, %v2585
        %v2648 = vpack.c.bf16 %v2596, %v2593
        %v2649 = vpack.c.bf16 %v2604, %v2601
        %v2650 = vpack.c.bf16 %v2612, %v2609
        %v2651 = vpack.c.bf16 %v2620, %v2617
        %v2652 = vpack.c.bf16 %v2628, %v2625
        %v2653 = vpack.c.bf16 %v2636, %v2633
        %v2654 = vpack.c.bf16 %v2644, %v2641
        %2655 = vst [vmem:[#allocation3 + $0x8] sm:$0xff] %v2647
        %2656 = vst [vmem:[#allocation3 + $0x28] sm:$0xff] %v2648
        %2657 = vst [vmem:[#allocation3 + $0x48] sm:$0xff] %v2649
        %2658 = vst [vmem:[#allocation3 + $0x68] sm:$0xff] %v2650
        %2659 = vst [vmem:[#allocation3 + $0x88] sm:$0xff] %v2651
        %2660 = vst [vmem:[#allocation3 + $0xa8] sm:$0xff] %v2652
        %2661 = vst [vmem:[#allocation3 + $0xc8] sm:$0xff] %v2653
        %2662 = vst [vmem:[#allocation3 + $0xe8] sm:$0xff] %v2654
        %2663 = vmatprep.subr.mxu0 0.0
        %2664 = vmatpush1.xpose.msra.mxu0 %v1327
        %2665 = vmatprep.subr.mxu0 0.0
        %2666 = vmatpush1.xpose.msra.mxu0 %v1331
        %2667 = vmatprep.subr.mxu0 0.0
        %2668 = vmatpush1.xpose.msra.mxu0 %v1337
        %2669 = vmatprep.subr.mxu0 0.0
        %2670 = vmatpush1.xpose.msra.mxu0 %v1341
        %2671 = vmatprep.subr.mxu0 0.0
        %2672 = vmatpush1.xpose.msra.mxu0 %v1347
        %2673 = vmatprep.subr.mxu0 0.0
        %2674 = vmatpush1.xpose.msra.mxu0 %v1351
        %2675 = vmatprep.subr.mxu0 0.0
        %2676 = vmatpush1.xpose.msra.mxu0 %v1357
        %2677 = vmatprep.subr.mxu0 0.0
        %2678 = vmatpush1.xpose.msra.mxu0 %v1361
        %2679 = vmatprep.subr.mxu0 0.0
        %2680 = vmatpush1.xpose.msra.mxu0 %v1367
        %2681 = vmatprep.subr.mxu0 0.0
        %2682 = vmatpush1.xpose.msra.mxu0 %v1371
        %2683 = vmatprep.subr.mxu0 0.0
        %2684 = vmatpush1.xpose.msra.mxu0 %v1377
        %2685 = vmatprep.subr.mxu0 0.0
        %2686 = vmatpush1.xpose.msra.mxu0 %v1381
        %2687 = vmatprep.subr.mxu0 0.0
        %2688 = vmatpush1.xpose.msra.mxu0 %v1387
        %2689 = vmatprep.subr.mxu0 0.0
        %2690 = vmatpush1.xpose.msra.mxu0 %v1391
        %2691 = vmatprep.subr.mxu0 0.0
        %2692 = vmatpush1.xpose.msra.mxu0 %v1397
        %2693 = vmatprep.subr.mxu0 0.0
        %2694 = vmatpush1.xpose.msra.mxu0 %v1401
        %2695 = vmatprep.subr.mxu0 0.0
        %2696 = vmatpush1.xpose.msra.mxu0 0.0
        %2697 = vmatprep.subr.mxu0 0.0
        %2698 = vmatpush1.xpose.msra.mxu0 0.0
        %2699 = vmatprep.subr.mxu0 0.0
        %2700 = vmatpush1.xpose.msra.mxu0 0.0
        %2701 = vmatprep.subr.mxu0 0.0
        %2702 = vmatpush1.xpose.msra.mxu0 0.0
        %2703 = vmatprep.subr.mxu0 0.0
        %2704 = vmatpush1.xpose.msra.mxu0 0.0
        %2705 = vmatprep.subr.mxu0 0.0
        %2706 = vmatpush1.xpose.msra.mxu0 0.0
        %2707 = vmatprep.subr.mxu0 0.0
        %2708 = vmatpush1.xpose.msra.mxu0 0.0
        %2709 = vmatprep.subr.mxu0 0.0
        %2710 = vmatpush1.xpose.msra.mxu0 0.0
        %2711 = vmatprep.subr.mxu0 0.0
        %2712 = vmatpush1.xpose.msra.mxu0 0.0
        %2713 = vmatprep.subr.mxu0 0.0
        %2714 = vmatpush1.xpose.msra.mxu0 0.0
        %2715 = vmatprep.subr.mxu0 0.0
        %2716 = vmatpush1.xpose.msra.mxu0 0.0
        %2717 = vmatprep.subr.mxu0 0.0
        %2718 = vmatpush1.xpose.msra.mxu0 0.0
        %2719 = vmatprep.subr.mxu0 0.0
        %2720 = vmatpush1.xpose.msra.mxu0 0.0
        %2721 = vmatprep.subr.mxu0 0.0
        %2722 = vmatpush1.xpose.msra.mxu0 0.0
        %2723 = vmatprep.subr.mxu0 0.0
        %2724 = vmatpush1.xpose.msra.mxu0 0.0
        %2725 = vmatprep.subr.mxu0 0.0
        %2726 = vmatpush1.xpose.msra.mxu0 0.0
        %2727 = vmatprep.mubr.f32.mxu0 0.0
        %2728 = vmatmul.mubr.f32.gmra.mrb[0].mxu0 %v1101
        %v2729 = vpop.f32.mrb[0].mxu0
        %v2730 = vadd.f32 %v1826, %v2729
        %v2731 = vpop.f32.mrb[0].mxu0
        %2732 = vmatprep.mubr.f32.mxu0 0.0
        %2733 = vmatmul.mubr.f32.gmra.mrb[0].mxu0 %v1105
        %v2734 = vpop.f32.mrb[0].mxu0
        %v2735 = vadd.f32 %v1826, %v2734
        %v2736 = vpop.f32.mrb[0].mxu0
        %2737 = vmatprep.mubr.f32.mxu0 0.0
        %2738 = vmatmul.mubr.f32.gmra.mrb[0].mxu0 %v1111
        %v2739 = vpop.f32.mrb[0].mxu0
        %v2740 = vadd.f32 %v1826, %v2739
        %v2741 = vpop.f32.mrb[0].mxu0
        %2742 = vmatprep.mubr.f32.mxu0 0.0
        %2743 = vmatmul.mubr.f32.gmra.mrb[0].mxu0 %v1115
        %v2744 = vpop.f32.mrb[0].mxu0
        %v2745 = vadd.f32 %v1826, %v2744
        %v2746 = vpop.f32.mrb[0].mxu0
        %2747 = vmatprep.mubr.f32.mxu0 0.0
        %2748 = vmatmul.mubr.f32.gmra.mrb[0].mxu0 %v1121
        %v2749 = vpop.f32.mrb[0].mxu0
        %v2750 = vadd.f32 %v1826, %v2749
        %v2751 = vpop.f32.mrb[0].mxu0
        %2752 = vmatprep.mubr.f32.mxu0 0.0
        %2753 = vmatmul.mubr.f32.gmra.mrb[0].mxu0 %v1125
        %v2754 = vpop.f32.mrb[0].mxu0
        %v2755 = vadd.f32 %v1826, %v2754
        %v2756 = vpop.f32.mrb[0].mxu0
        %2757 = vmatprep.mubr.f32.mxu0 0.0
        %2758 = vmatmul.mubr.f32.gmra.mrb[0].mxu0 %v1131
        %v2759 = vpop.f32.mrb[0].mxu0
        %v2760 = vadd.f32 %v1826, %v2759
        %v2761 = vpop.f32.mrb[0].mxu0
        %2762 = vmatprep.mubr.f32.mxu0 0.0
        %2763 = vmatmul.mubr.f32.gmra.mrb[0].mxu0 %v1135
        %v2764 = vpop.f32.mrb[0].mxu0
        %v2765 = vadd.f32 %v1826, %v2764
        %v2766 = vpop.f32.mrb[0].mxu0
        %2767 = vmatprep.mubr.f32.mxu0 0.0
        %2768 = vmatmul.mubr.f32.gmra.mrb[0].mxu0 %v1141
        %v2769 = vpop.f32.mrb[0].mxu0
        %v2770 = vadd.f32 %v1826, %v2769
        %v2771 = vpop.f32.mrb[0].mxu0
        %2772 = vmatprep.mubr.f32.mxu0 0.0
        %2773 = vmatmul.mubr.f32.gmra.mrb[0].mxu0 %v1145
        %v2774 = vpop.f32.mrb[0].mxu0
        %v2775 = vadd.f32 %v1826, %v2774
        %v2776 = vpop.f32.mrb[0].mxu0
        %2777 = vmatprep.mubr.f32.mxu0 0.0
        %2778 = vmatmul.mubr.f32.gmra.mrb[0].mxu0 %v1151
        %v2779 = vpop.f32.mrb[0].mxu0
        %v2780 = vadd.f32 %v1826, %v2779
        %v2781 = vpop.f32.mrb[0].mxu0
        %2782 = vmatprep.mubr.f32.mxu0 0.0
        %2783 = vmatmul.mubr.f32.gmra.mrb[0].mxu0 %v1155
        %v2784 = vpop.f32.mrb[0].mxu0
        %v2785 = vadd.f32 %v1826, %v2784
        %v2786 = vpop.f32.mrb[0].mxu0
        %2787 = vmatprep.mubr.f32.mxu0 0.0
        %2788 = vmatmul.mubr.f32.gmra.mrb[0].mxu0 %v1161
        %v2789 = vpop.f32.mrb[0].mxu0
        %v2790 = vadd.f32 %v1826, %v2789
        %v2791 = vpop.f32.mrb[0].mxu0
        %2792 = vmatprep.mubr.f32.mxu0 0.0
        %2793 = vmatmul.mubr.f32.gmra.mrb[0].mxu0 %v1165
        %v2794 = vpop.f32.mrb[0].mxu0
        %v2795 = vadd.f32 %v1826, %v2794
        %v2796 = vpop.f32.mrb[0].mxu0
        %2797 = vmatprep.mubr.f32.mxu0 0.0
        %2798 = vmatmul.mubr.f32.gmra.mrb[0].mxu0 %v1171
        %v2799 = vpop.f32.mrb[0].mxu0
        %v2800 = vadd.f32 %v1826, %v2799
        %v2801 = vpop.f32.mrb[0].mxu0
        %2802 = vmatprep.mubr.f32.mxu0 0.0
        %2803 = vmatmul.mubr.f32.gmra.mrb[0].mxu0 %v1175
        %v2804 = vpop.f32.mrb[0].mxu0
        %v2805 = vadd.f32 %v1826, %v2804
        %v2806 = vpop.f32.mrb[0].mxu0
        %2807 = vdwg.mxu0
        %2808 = vmax.xlane.f32.xlu0 %v2730
        %v2809 = vpop.xlane.xlu0 %2808
        %2810 = vmax.xlane.f32.xlu0 %v2735
        %v2811 = vpop.xlane.xlu0 %2810
        %2812 = vmax.xlane.f32.xlu0 %v2740
        %v2813 = vpop.xlane.xlu0 %2812
        %2814 = vmax.xlane.f32.xlu0 %v2745
        %v2815 = vpop.xlane.xlu0 %2814
        %2816 = vmax.xlane.f32.xlu0 %v2750
        %v2817 = vpop.xlane.xlu0 %2816
        %2818 = vmax.xlane.f32.xlu0 %v2755
        %v2819 = vpop.xlane.xlu0 %2818
        %2820 = vmax.xlane.f32.xlu0 %v2760
        %v2821 = vpop.xlane.xlu0 %2820
        %2822 = vmax.xlane.f32.xlu0 %v2765
        %v2823 = vpop.xlane.xlu0 %2822
        %2824 = vmax.xlane.f32.xlu0 %v2770
        %v2825 = vpop.xlane.xlu0 %2824
        %2826 = vmax.xlane.f32.xlu0 %v2775
        %v2827 = vpop.xlane.xlu0 %2826
        %2828 = vmax.xlane.f32.xlu0 %v2780
        %v2829 = vpop.xlane.xlu0 %2828
        %2830 = vmax.xlane.f32.xlu0 %v2785
        %v2831 = vpop.xlane.xlu0 %2830
        %2832 = vmax.xlane.f32.xlu0 %v2790
        %v2833 = vpop.xlane.xlu0 %2832
        %2834 = vmax.xlane.f32.xlu0 %v2795
        %v2835 = vpop.xlane.xlu0 %2834
        %2836 = vmax.xlane.f32.xlu0 %v2800
        %v2837 = vpop.xlane.xlu0 %2836
        %2838 = vmax.xlane.f32.xlu0 %v2805
        %v2839 = vpop.xlane.xlu0 %2838
        %v2840 = vsub.f32 %v2730, %v2809
        %v2841 = vsub.f32 %v2735, %v2811
        %v2842 = vsub.f32 %v2740, %v2813
        %v2843 = vsub.f32 %v2745, %v2815
        %v2844 = vsub.f32 %v2750, %v2817
        %v2845 = vsub.f32 %v2755, %v2819
        %v2846 = vsub.f32 %v2760, %v2821
        %v2847 = vsub.f32 %v2765, %v2823
        %v2848 = vsub.f32 %v2770, %v2825
        %v2849 = vsub.f32 %v2775, %v2827
        %v2850 = vsub.f32 %v2780, %v2829
        %v2851 = vsub.f32 %v2785, %v2831
        %v2852 = vsub.f32 %v2790, %v2833
        %v2853 = vsub.f32 %v2795, %v2835
        %v2854 = vsub.f32 %v2800, %v2837
        %v2855 = vsub.f32 %v2805, %v2839
        %v2856 = vmul.f32 %v2840, 1.442695
        %v2857 = vpow.pop %v2856
        %v2858 = vmul.f32 %v2841, 1.442695
        %v2859 = vpow.pop %v2858
        %v2860 = vmul.f32 %v2842, 1.442695
        %v2861 = vpow.pop %v2860
        %v2862 = vmul.f32 %v2843, 1.442695
        %v2863 = vpow.pop %v2862
        %v2864 = vmul.f32 %v2844, 1.442695
        %v2865 = vpow.pop %v2864
        %v2866 = vmul.f32 %v2845, 1.442695
        %v2867 = vpow.pop %v2866
        %v2868 = vmul.f32 %v2846, 1.442695
        %v2869 = vpow.pop %v2868
        %v2870 = vmul.f32 %v2847, 1.442695
        %v2871 = vpow.pop %v2870
        %v2872 = vmul.f32 %v2848, 1.442695
        %v2873 = vpow.pop %v2872
        %v2874 = vmul.f32 %v2849, 1.442695
        %v2875 = vpow.pop %v2874
        %v2876 = vmul.f32 %v2850, 1.442695
        %v2877 = vpow.pop %v2876
        %v2878 = vmul.f32 %v2851, 1.442695
        %v2879 = vpow.pop %v2878
        %v2880 = vmul.f32 %v2852, 1.442695
        %v2881 = vpow.pop %v2880
        %v2882 = vmul.f32 %v2853, 1.442695
        %v2883 = vpow.pop %v2882
        %v2884 = vmul.f32 %v2854, 1.442695
        %v2885 = vpow.pop %v2884
        %v2886 = vmul.f32 %v2855, 1.442695
        %v2887 = vpow.pop %v2886
        %2888 = vadd.xlane.f32.xlu0 %v2857
        %v2889 = vpop.xlane.xlu0 %2888
        %2890 = vadd.xlane.f32.xlu0 %v2859
        %v2891 = vpop.xlane.xlu0 %2890
        %2892 = vadd.xlane.f32.xlu0 %v2861
        %v2893 = vpop.xlane.xlu0 %2892
        %2894 = vadd.xlane.f32.xlu0 %v2863
        %v2895 = vpop.xlane.xlu0 %2894
        %2896 = vadd.xlane.f32.xlu0 %v2865
        %v2897 = vpop.xlane.xlu0 %2896
        %2898 = vadd.xlane.f32.xlu0 %v2867
        %v2899 = vpop.xlane.xlu0 %2898
        %2900 = vadd.xlane.f32.xlu0 %v2869
        %v2901 = vpop.xlane.xlu0 %2900
        %2902 = vadd.xlane.f32.xlu0 %v2871
        %v2903 = vpop.xlane.xlu0 %2902
        %2904 = vadd.xlane.f32.xlu0 %v2873
        %v2905 = vpop.xlane.xlu0 %2904
        %2906 = vadd.xlane.f32.xlu0 %v2875
        %v2907 = vpop.xlane.xlu0 %2906
        %2908 = vadd.xlane.f32.xlu0 %v2877
        %v2909 = vpop.xlane.xlu0 %2908
        %2910 = vadd.xlane.f32.xlu0 %v2879
        %v2911 = vpop.xlane.xlu0 %2910
        %2912 = vadd.xlane.f32.xlu0 %v2881
        %v2913 = vpop.xlane.xlu0 %2912
        %2914 = vadd.xlane.f32.xlu0 %v2883
        %v2915 = vpop.xlane.xlu0 %2914
        %2916 = vadd.xlane.f32.xlu0 %v2885
        %v2917 = vpop.xlane.xlu0 %2916
        %2918 = vadd.xlane.f32.xlu0 %v2887
        %v2919 = vpop.xlane.xlu0 %2918
        %v2920 = vrcp.pop %v2889
        %v2921 = vrcp.pop %v2891
        %v2922 = vrcp.pop %v2893
        %v2923 = vrcp.pop %v2895
        %v2924 = vrcp.pop %v2897
        %v2925 = vrcp.pop %v2899
        %v2926 = vrcp.pop %v2901
        %v2927 = vrcp.pop %v2903
        %v2928 = vrcp.pop %v2905
        %v2929 = vrcp.pop %v2907
        %v2930 = vrcp.pop %v2909
        %v2931 = vrcp.pop %v2911
        %v2932 = vrcp.pop %v2913
        %v2933 = vrcp.pop %v2915
        %v2934 = vrcp.pop %v2917
        %v2935 = vrcp.pop %v2919
        %v2936 = vmul.f32 %v2857, %v2920
        %v2937 = vmul.f32 %v2859, %v2921
        %v2938 = vmul.f32 %v2861, %v2922
        %v2939 = vmul.f32 %v2863, %v2923
        %v2940 = vmul.f32 %v2865, %v2924
        %v2941 = vmul.f32 %v2867, %v2925
        %v2942 = vmul.f32 %v2869, %v2926
        %v2943 = vmul.f32 %v2871, %v2927
        %v2944 = vmul.f32 %v2873, %v2928
        %v2945 = vmul.f32 %v2875, %v2929
        %v2946 = vmul.f32 %v2877, %v2930
        %v2947 = vmul.f32 %v2879, %v2931
        %v2948 = vmul.f32 %v2881, %v2932
        %v2949 = vmul.f32 %v2883, %v2933
        %v2950 = vmul.f32 %v2885, %v2934
        %v2951 = vmul.f32 %v2887, %v2935
        %v2952 = vpack.c.bf16 %v2937, %v2936
        %v2953 = vpack.c.bf16 %v2939, %v2938
        %v2954 = vpack.c.bf16 %v2941, %v2940
        %v2955 = vpack.c.bf16 %v2943, %v2942
        %v2956 = vpack.c.bf16 %v2945, %v2944
        %v2957 = vpack.c.bf16 %v2947, %v2946
        %v2958 = vpack.c.bf16 %v2949, %v2948
        %v2959 = vpack.c.bf16 %v2951, %v2950
        %v2960 = vpack.c.bf16 %v1749, %v1745
        %v2961 = vpack.c.bf16 %v1759, %v1755
        %v2962 = vpack.c.bf16 %v1769, %v1765
        %v2963 = vpack.c.bf16 %v1779, %v1775
        %v2964 = vpack.c.bf16 %v1789, %v1785
        %v2965 = vpack.c.bf16 %v1799, %v1795
        %v2966 = vpack.c.bf16 %v1809, %v1805
        %v2967 = vpack.c.bf16 %v1819, %v1815
        %2968 = vmatprep.subr.bf16.mxu0 0
        %2969 = vmatpush1.bf16.msra.mxu0 %v2960
        %2970 = vmatprep.subr.bf16.mxu0 0
        %2971 = vmatpush1.bf16.msra.mxu0 %v2961
        %2972 = vmatprep.subr.bf16.mxu0 0
        %2973 = vmatpush1.bf16.msra.mxu0 %v2962
        %2974 = vmatprep.subr.bf16.mxu0 0
        %2975 = vmatpush1.bf16.msra.mxu0 %v2963
        %2976 = vmatprep.subr.bf16.mxu0 0
        %2977 = vmatpush1.bf16.msra.mxu0 %v2964
        %2978 = vmatprep.subr.bf16.mxu0 0
        %2979 = vmatpush1.bf16.msra.mxu0 %v2965
        %2980 = vmatprep.subr.bf16.mxu0 0
        %2981 = vmatpush1.bf16.msra.mxu0 %v2966
        %2982 = vmatprep.subr.bf16.mxu0 0
        %2983 = vmatpush1.bf16.msra.mxu0 %v2967
        %2984 = vmatprep.subr.bf16.mxu0 0
        %2985 = vmatpush1.bf16.msra.mxu0 0
        %2986 = vmatprep.subr.bf16.mxu0 0
        %2987 = vmatpush1.bf16.msra.mxu0 0
        %2988 = vmatprep.subr.bf16.mxu0 0
        %2989 = vmatpush1.bf16.msra.mxu0 0
        %2990 = vmatprep.subr.bf16.mxu0 0
        %2991 = vmatpush1.bf16.msra.mxu0 0
        %2992 = vmatprep.subr.bf16.mxu0 0
        %2993 = vmatpush1.bf16.msra.mxu0 0
        %2994 = vmatprep.subr.bf16.mxu0 0
        %2995 = vmatpush1.bf16.msra.mxu0 0
        %2996 = vmatprep.subr.bf16.mxu0 0
        %2997 = vmatpush1.bf16.msra.mxu0 0
        %2998 = vmatprep.subr.bf16.mxu0 0
        %2999 = vmatpush1.bf16.msra.mxu0 0
        %3000 = vmatprep.mubr.bf16.mxu0 0
        %3001 = vmatmul.mubr.bf16.gmra.mrb[0].mxu0 %v2952
        %v3002 = vpop.f32.mrb[0].mxu0
        %v3003 = vadd.f32 0.0, %v3002
        %v3004 = vpop.f32.mrb[0].mxu0
        %v3005 = vpop.f32.mrb[0].mxu0
        %v3006 = vadd.f32 0.0, %v3005
        %v3007 = vpop.f32.mrb[0].mxu0
        %3008 = vmatprep.mubr.bf16.mxu0 0
        %3009 = vmatmul.mubr.bf16.gmra.mrb[0].mxu0 %v2953
        %v3010 = vpop.f32.mrb[0].mxu0
        %v3011 = vadd.f32 0.0, %v3010
        %v3012 = vpop.f32.mrb[0].mxu0
        %v3013 = vpop.f32.mrb[0].mxu0
        %v3014 = vadd.f32 0.0, %v3013
        %v3015 = vpop.f32.mrb[0].mxu0
        %3016 = vmatprep.mubr.bf16.mxu0 0
        %3017 = vmatmul.mubr.bf16.gmra.mrb[0].mxu0 %v2954
        %v3018 = vpop.f32.mrb[0].mxu0
        %v3019 = vadd.f32 0.0, %v3018
        %v3020 = vpop.f32.mrb[0].mxu0
        %v3021 = vpop.f32.mrb[0].mxu0
        %v3022 = vadd.f32 0.0, %v3021
        %v3023 = vpop.f32.mrb[0].mxu0
        %3024 = vmatprep.mubr.bf16.mxu0 0
        %3025 = vmatmul.mubr.bf16.gmra.mrb[0].mxu0 %v2955
        %v3026 = vpop.f32.mrb[0].mxu0
        %v3027 = vadd.f32 0.0, %v3026
        %v3028 = vpop.f32.mrb[0].mxu0
        %v3029 = vpop.f32.mrb[0].mxu0
        %v3030 = vadd.f32 0.0, %v3029
        %v3031 = vpop.f32.mrb[0].mxu0
        %3032 = vmatprep.mubr.bf16.mxu0 0
        %3033 = vmatmul.mubr.bf16.gmra.mrb[0].mxu0 %v2956
        %v3034 = vpop.f32.mrb[0].mxu0
        %v3035 = vadd.f32 0.0, %v3034
        %v3036 = vpop.f32.mrb[0].mxu0
        %v3037 = vpop.f32.mrb[0].mxu0
        %v3038 = vadd.f32 0.0, %v3037
        %v3039 = vpop.f32.mrb[0].mxu0
        %3040 = vmatprep.mubr.bf16.mxu0 0
        %3041 = vmatmul.mubr.bf16.gmra.mrb[0].mxu0 %v2957
        %v3042 = vpop.f32.mrb[0].mxu0
        %v3043 = vadd.f32 0.0, %v3042
        %v3044 = vpop.f32.mrb[0].mxu0
        %v3045 = vpop.f32.mrb[0].mxu0
        %v3046 = vadd.f32 0.0, %v3045
        %v3047 = vpop.f32.mrb[0].mxu0
        %3048 = vmatprep.mubr.bf16.mxu0 0
        %3049 = vmatmul.mubr.bf16.gmra.mrb[0].mxu0 %v2958
        %v3050 = vpop.f32.mrb[0].mxu0
        %v3051 = vadd.f32 0.0, %v3050
        %v3052 = vpop.f32.mrb[0].mxu0
        %v3053 = vpop.f32.mrb[0].mxu0
        %v3054 = vadd.f32 0.0, %v3053
        %v3055 = vpop.f32.mrb[0].mxu0
        %3056 = vmatprep.mubr.bf16.mxu0 0
        %3057 = vmatmul.mubr.bf16.gmra.mrb[0].mxu0 %v2959
        %v3058 = vpop.f32.mrb[0].mxu0
        %v3059 = vadd.f32 0.0, %v3058
        %v3060 = vpop.f32.mrb[0].mxu0
        %v3061 = vpop.f32.mrb[0].mxu0
        %v3062 = vadd.f32 0.0, %v3061
        %v3063 = vpop.f32.mrb[0].mxu0
        %3064 = vdwg.mxu0
        %v3065 = vpack.c.bf16 %v3006, %v3003
        %v3066 = vpack.c.bf16 %v3014, %v3011
        %v3067 = vpack.c.bf16 %v3022, %v3019
        %v3068 = vpack.c.bf16 %v3030, %v3027
        %v3069 = vpack.c.bf16 %v3038, %v3035
        %v3070 = vpack.c.bf16 %v3046, %v3043
        %v3071 = vpack.c.bf16 %v3054, %v3051
        %v3072 = vpack.c.bf16 %v3062, %v3059
        %3073 = vst [vmem:[#allocation3 + $0x10] sm:$0xff] %v3065
        %3074 = vst [vmem:[#allocation3 + $0x30] sm:$0xff] %v3066
        %3075 = vst [vmem:[#allocation3 + $0x50] sm:$0xff] %v3067
        %3076 = vst [vmem:[#allocation3 + $0x70] sm:$0xff] %v3068
        %3077 = vst [vmem:[#allocation3 + $0x90] sm:$0xff] %v3069
        %3078 = vst [vmem:[#allocation3 + $0xb0] sm:$0xff] %v3070
        %3079 = vst [vmem:[#allocation3 + $0xd0] sm:$0xff] %v3071
        %3080 = vst [vmem:[#allocation3 + $0xf0] sm:$0xff] %v3072
        %3081 = vmatprep.subr.mxu0 0.0
        %3082 = vmatpush1.xpose.msra.mxu0 %v1329
        %3083 = vmatprep.subr.mxu0 0.0
        %3084 = vmatpush1.xpose.msra.mxu0 %v1333
        %3085 = vmatprep.subr.mxu0 0.0
        %3086 = vmatpush1.xpose.msra.mxu0 %v1339
        %3087 = vmatprep.subr.mxu0 0.0
        %3088 = vmatpush1.xpose.msra.mxu0 %v1343
        %3089 = vmatprep.subr.mxu0 0.0
        %3090 = vmatpush1.xpose.msra.mxu0 %v1349
        %3091 = vmatprep.subr.mxu0 0.0
        %3092 = vmatpush1.xpose.msra.mxu0 %v1353
        %3093 = vmatprep.subr.mxu0 0.0
        %3094 = vmatpush1.xpose.msra.mxu0 %v1359
        %3095 = vmatprep.subr.mxu0 0.0
        %3096 = vmatpush1.xpose.msra.mxu0 %v1363
        %3097 = vmatprep.subr.mxu0 0.0
        %3098 = vmatpush1.xpose.msra.mxu0 %v1369
        %3099 = vmatprep.subr.mxu0 0.0
        %3100 = vmatpush1.xpose.msra.mxu0 %v1373
        %3101 = vmatprep.subr.mxu0 0.0
        %3102 = vmatpush1.xpose.msra.mxu0 %v1379
        %3103 = vmatprep.subr.mxu0 0.0
        %3104 = vmatpush1.xpose.msra.mxu0 %v1383
        %3105 = vmatprep.subr.mxu0 0.0
        %3106 = vmatpush1.xpose.msra.mxu0 %v1389
        %3107 = vmatprep.subr.mxu0 0.0
        %3108 = vmatpush1.xpose.msra.mxu0 %v1393
        %3109 = vmatprep.subr.mxu0 0.0
        %3110 = vmatpush1.xpose.msra.mxu0 %v1399
        %3111 = vmatprep.subr.mxu0 0.0
        %3112 = vmatpush1.xpose.msra.mxu0 %v1403
        %3113 = vmatprep.subr.mxu0 0.0
        %3114 = vmatpush1.xpose.msra.mxu0 0.0
        %3115 = vmatprep.subr.mxu0 0.0
        %3116 = vmatpush1.xpose.msra.mxu0 0.0
        %3117 = vmatprep.subr.mxu0 0.0
        %3118 = vmatpush1.xpose.msra.mxu0 0.0
        %3119 = vmatprep.subr.mxu0 0.0
        %3120 = vmatpush1.xpose.msra.mxu0 0.0
        %3121 = vmatprep.subr.mxu0 0.0
        %3122 = vmatpush1.xpose.msra.mxu0 0.0
        %3123 = vmatprep.subr.mxu0 0.0
        %3124 = vmatpush1.xpose.msra.mxu0 0.0
        %3125 = vmatprep.subr.mxu0 0.0
        %3126 = vmatpush1.xpose.msra.mxu0 0.0
        %3127 = vmatprep.subr.mxu0 0.0
        %3128 = vmatpush1.xpose.msra.mxu0 0.0
        %3129 = vmatprep.subr.mxu0 0.0
        %3130 = vmatpush1.xpose.msra.mxu0 0.0
        %3131 = vmatprep.subr.mxu0 0.0
        %3132 = vmatpush1.xpose.msra.mxu0 0.0
        %3133 = vmatprep.subr.mxu0 0.0
        %3134 = vmatpush1.xpose.msra.mxu0 0.0
        %3135 = vmatprep.subr.mxu0 0.0
        %3136 = vmatpush1.xpose.msra.mxu0 0.0
        %3137 = vmatprep.subr.mxu0 0.0
        %3138 = vmatpush1.xpose.msra.mxu0 0.0
        %3139 = vmatprep.subr.mxu0 0.0
        %3140 = vmatpush1.xpose.msra.mxu0 0.0
        %3141 = vmatprep.subr.mxu0 0.0
        %3142 = vmatpush1.xpose.msra.mxu0 0.0
        %3143 = vmatprep.subr.mxu0 0.0
        %3144 = vmatpush1.xpose.msra.mxu0 0.0
        %3145 = vmatprep.mubr.f32.mxu0 0.0
        %3146 = vmatmul.mubr.f32.gmra.mrb[0].mxu0 %v1103
        %v3147 = vpop.f32.mrb[0].mxu0
        %v3148 = vadd.f32 %v1826, %v3147
        %v3149 = vpop.f32.mrb[0].mxu0
        %3150 = vmatprep.mubr.f32.mxu0 0.0
        %3151 = vmatmul.mubr.f32.gmra.mrb[0].mxu0 %v1107
        %v3152 = vpop.f32.mrb[0].mxu0
        %v3153 = vadd.f32 %v1826, %v3152
        %v3154 = vpop.f32.mrb[0].mxu0
        %3155 = vmatprep.mubr.f32.mxu0 0.0
        %3156 = vmatmul.mubr.f32.gmra.mrb[0].mxu0 %v1113
        %v3157 = vpop.f32.mrb[0].mxu0
        %v3158 = vadd.f32 %v1826, %v3157
        %v3159 = vpop.f32.mrb[0].mxu0
        %3160 = vmatprep.mubr.f32.mxu0 0.0
        %3161 = vmatmul.mubr.f32.gmra.mrb[0].mxu0 %v1117
        %v3162 = vpop.f32.mrb[0].mxu0
        %v3163 = vadd.f32 %v1826, %v3162
        %v3164 = vpop.f32.mrb[0].mxu0
        %3165 = vmatprep.mubr.f32.mxu0 0.0
        %3166 = vmatmul.mubr.f32.gmra.mrb[0].mxu0 %v1123
        %v3167 = vpop.f32.mrb[0].mxu0
        %v3168 = vadd.f32 %v1826, %v3167
        %v3169 = vpop.f32.mrb[0].mxu0
        %3170 = vmatprep.mubr.f32.mxu0 0.0
        %3171 = vmatmul.mubr.f32.gmra.mrb[0].mxu0 %v1127
        %v3172 = vpop.f32.mrb[0].mxu0
        %v3173 = vadd.f32 %v1826, %v3172
        %v3174 = vpop.f32.mrb[0].mxu0
        %3175 = vmatprep.mubr.f32.mxu0 0.0
        %3176 = vmatmul.mubr.f32.gmra.mrb[0].mxu0 %v1133
        %v3177 = vpop.f32.mrb[0].mxu0
        %v3178 = vadd.f32 %v1826, %v3177
        %v3179 = vpop.f32.mrb[0].mxu0
        %3180 = vmatprep.mubr.f32.mxu0 0.0
        %3181 = vmatmul.mubr.f32.gmra.mrb[0].mxu0 %v1137
        %v3182 = vpop.f32.mrb[0].mxu0
        %v3183 = vadd.f32 %v1826, %v3182
        %v3184 = vpop.f32.mrb[0].mxu0
        %3185 = vmatprep.mubr.f32.mxu0 0.0
        %3186 = vmatmul.mubr.f32.gmra.mrb[0].mxu0 %v1143
        %v3187 = vpop.f32.mrb[0].mxu0
        %v3188 = vadd.f32 %v1826, %v3187
        %v3189 = vpop.f32.mrb[0].mxu0
        %3190 = vmatprep.mubr.f32.mxu0 0.0
        %3191 = vmatmul.mubr.f32.gmra.mrb[0].mxu0 %v1147
        %v3192 = vpop.f32.mrb[0].mxu0
        %v3193 = vadd.f32 %v1826, %v3192
        %v3194 = vpop.f32.mrb[0].mxu0
        %3195 = vmatprep.mubr.f32.mxu0 0.0
        %3196 = vmatmul.mubr.f32.gmra.mrb[0].mxu0 %v1153
        %v3197 = vpop.f32.mrb[0].mxu0
        %v3198 = vadd.f32 %v1826, %v3197
        %v3199 = vpop.f32.mrb[0].mxu0
        %3200 = vmatprep.mubr.f32.mxu0 0.0
        %3201 = vmatmul.mubr.f32.gmra.mrb[0].mxu0 %v1157
        %v3202 = vpop.f32.mrb[0].mxu0
        %v3203 = vadd.f32 %v1826, %v3202
        %v3204 = vpop.f32.mrb[0].mxu0
        %3205 = vmatprep.mubr.f32.mxu0 0.0
        %3206 = vmatmul.mubr.f32.gmra.mrb[0].mxu0 %v1163
        %v3207 = vpop.f32.mrb[0].mxu0
        %v3208 = vadd.f32 %v1826, %v3207
        %v3209 = vpop.f32.mrb[0].mxu0
        %3210 = vmatprep.mubr.f32.mxu0 0.0
        %3211 = vmatmul.mubr.f32.gmra.mrb[0].mxu0 %v1167
        %v3212 = vpop.f32.mrb[0].mxu0
        %v3213 = vadd.f32 %v1826, %v3212
        %v3214 = vpop.f32.mrb[0].mxu0
        %3215 = vmatprep.mubr.f32.mxu0 0.0
        %3216 = vmatmul.mubr.f32.gmra.mrb[0].mxu0 %v1173
        %v3217 = vpop.f32.mrb[0].mxu0
        %v3218 = vadd.f32 %v1826, %v3217
        %v3219 = vpop.f32.mrb[0].mxu0
        %3220 = vmatprep.mubr.f32.mxu0 0.0
        %3221 = vmatmul.mubr.f32.gmra.mrb[0].mxu0 %v1177
        %v3222 = vpop.f32.mrb[0].mxu0
        %v3223 = vadd.f32 %v1826, %v3222
        %v3224 = vpop.f32.mrb[0].mxu0
        %3225 = vdwg.mxu0
        %3226 = vmax.xlane.f32.xlu0 %v3148
        %v3227 = vpop.xlane.xlu0 %3226
        %3228 = vmax.xlane.f32.xlu0 %v3153
        %v3229 = vpop.xlane.xlu0 %3228
        %3230 = vmax.xlane.f32.xlu0 %v3158
        %v3231 = vpop.xlane.xlu0 %3230
        %3232 = vmax.xlane.f32.xlu0 %v3163
        %v3233 = vpop.xlane.xlu0 %3232
        %3234 = vmax.xlane.f32.xlu0 %v3168
        %v3235 = vpop.xlane.xlu0 %3234
        %3236 = vmax.xlane.f32.xlu0 %v3173
        %v3237 = vpop.xlane.xlu0 %3236
        %3238 = vmax.xlane.f32.xlu0 %v3178
        %v3239 = vpop.xlane.xlu0 %3238
        %3240 = vmax.xlane.f32.xlu0 %v3183
        %v3241 = vpop.xlane.xlu0 %3240
        %3242 = vmax.xlane.f32.xlu0 %v3188
        %v3243 = vpop.xlane.xlu0 %3242
        %3244 = vmax.xlane.f32.xlu0 %v3193
        %v3245 = vpop.xlane.xlu0 %3244
        %3246 = vmax.xlane.f32.xlu0 %v3198
        %v3247 = vpop.xlane.xlu0 %3246
        %3248 = vmax.xlane.f32.xlu0 %v3203
        %v3249 = vpop.xlane.xlu0 %3248
        %3250 = vmax.xlane.f32.xlu0 %v3208
        %v3251 = vpop.xlane.xlu0 %3250
        %3252 = vmax.xlane.f32.xlu0 %v3213
        %v3253 = vpop.xlane.xlu0 %3252
        %3254 = vmax.xlane.f32.xlu0 %v3218
        %v3255 = vpop.xlane.xlu0 %3254
        %3256 = vmax.xlane.f32.xlu0 %v3223
        %v3257 = vpop.xlane.xlu0 %3256
        %v3258 = vsub.f32 %v3148, %v3227
        %v3259 = vsub.f32 %v3153, %v3229
        %v3260 = vsub.f32 %v3158, %v3231
        %v3261 = vsub.f32 %v3163, %v3233
        %v3262 = vsub.f32 %v3168, %v3235
        %v3263 = vsub.f32 %v3173, %v3237
        %v3264 = vsub.f32 %v3178, %v3239
        %v3265 = vsub.f32 %v3183, %v3241
        %v3266 = vsub.f32 %v3188, %v3243
        %v3267 = vsub.f32 %v3193, %v3245
        %v3268 = vsub.f32 %v3198, %v3247
        %v3269 = vsub.f32 %v3203, %v3249
        %v3270 = vsub.f32 %v3208, %v3251
        %v3271 = vsub.f32 %v3213, %v3253
        %v3272 = vsub.f32 %v3218, %v3255
        %v3273 = vsub.f32 %v3223, %v3257
        %v3274 = vmul.f32 %v3258, 1.442695
        %v3275 = vpow.pop %v3274
        %v3276 = vmul.f32 %v3259, 1.442695
        %v3277 = vpow.pop %v3276
        %v3278 = vmul.f32 %v3260, 1.442695
        %v3279 = vpow.pop %v3278
        %v3280 = vmul.f32 %v3261, 1.442695
        %v3281 = vpow.pop %v3280
        %v3282 = vmul.f32 %v3262, 1.442695
        %v3283 = vpow.pop %v3282
        %v3284 = vmul.f32 %v3263, 1.442695
        %v3285 = vpow.pop %v3284
        %v3286 = vmul.f32 %v3264, 1.442695
        %v3287 = vpow.pop %v3286
        %v3288 = vmul.f32 %v3265, 1.442695
        %v3289 = vpow.pop %v3288
        %v3290 = vmul.f32 %v3266, 1.442695
        %v3291 = vpow.pop %v3290
        %v3292 = vmul.f32 %v3267, 1.442695
        %v3293 = vpow.pop %v3292
        %v3294 = vmul.f32 %v3268, 1.442695
        %v3295 = vpow.pop %v3294
        %v3296 = vmul.f32 %v3269, 1.442695
        %v3297 = vpow.pop %v3296
        %v3298 = vmul.f32 %v3270, 1.442695
        %v3299 = vpow.pop %v3298
        %v3300 = vmul.f32 %v3271, 1.442695
        %v3301 = vpow.pop %v3300
        %v3302 = vmul.f32 %v3272, 1.442695
        %v3303 = vpow.pop %v3302
        %v3304 = vmul.f32 %v3273, 1.442695
        %v3305 = vpow.pop %v3304
        %3306 = vadd.xlane.f32.xlu0 %v3275
        %v3307 = vpop.xlane.xlu0 %3306
        %3308 = vadd.xlane.f32.xlu0 %v3277
        %v3309 = vpop.xlane.xlu0 %3308
        %3310 = vadd.xlane.f32.xlu0 %v3279
        %v3311 = vpop.xlane.xlu0 %3310
        %3312 = vadd.xlane.f32.xlu0 %v3281
        %v3313 = vpop.xlane.xlu0 %3312
        %3314 = vadd.xlane.f32.xlu0 %v3283
        %v3315 = vpop.xlane.xlu0 %3314
        %3316 = vadd.xlane.f32.xlu0 %v3285
        %v3317 = vpop.xlane.xlu0 %3316
        %3318 = vadd.xlane.f32.xlu0 %v3287
        %v3319 = vpop.xlane.xlu0 %3318
        %3320 = vadd.xlane.f32.xlu0 %v3289
        %v3321 = vpop.xlane.xlu0 %3320
        %3322 = vadd.xlane.f32.xlu0 %v3291
        %v3323 = vpop.xlane.xlu0 %3322
        %3324 = vadd.xlane.f32.xlu0 %v3293
        %v3325 = vpop.xlane.xlu0 %3324
        %3326 = vadd.xlane.f32.xlu0 %v3295
        %v3327 = vpop.xlane.xlu0 %3326
        %3328 = vadd.xlane.f32.xlu0 %v3297
        %v3329 = vpop.xlane.xlu0 %3328
        %3330 = vadd.xlane.f32.xlu0 %v3299
        %v3331 = vpop.xlane.xlu0 %3330
        %3332 = vadd.xlane.f32.xlu0 %v3301
        %v3333 = vpop.xlane.xlu0 %3332
        %3334 = vadd.xlane.f32.xlu0 %v3303
        %v3335 = vpop.xlane.xlu0 %3334
        %3336 = vadd.xlane.f32.xlu0 %v3305
        %v3337 = vpop.xlane.xlu0 %3336
        %v3338 = vrcp.pop %v3307
        %v3339 = vrcp.pop %v3309
        %v3340 = vrcp.pop %v3311
        %v3341 = vrcp.pop %v3313
        %v3342 = vrcp.pop %v3315
        %v3343 = vrcp.pop %v3317
        %v3344 = vrcp.pop %v3319
        %v3345 = vrcp.pop %v3321
        %v3346 = vrcp.pop %v3323
        %v3347 = vrcp.pop %v3325
        %v3348 = vrcp.pop %v3327
        %v3349 = vrcp.pop %v3329
        %v3350 = vrcp.pop %v3331
        %v3351 = vrcp.pop %v3333
        %v3352 = vrcp.pop %v3335
        %v3353 = vrcp.pop %v3337
        %v3354 = vmul.f32 %v3275, %v3338
        %v3355 = vmul.f32 %v3277, %v3339
        %v3356 = vmul.f32 %v3279, %v3340
        %v3357 = vmul.f32 %v3281, %v3341
        %v3358 = vmul.f32 %v3283, %v3342
        %v3359 = vmul.f32 %v3285, %v3343
        %v3360 = vmul.f32 %v3287, %v3344
        %v3361 = vmul.f32 %v3289, %v3345
        %v3362 = vmul.f32 %v3291, %v3346
        %v3363 = vmul.f32 %v3293, %v3347
        %v3364 = vmul.f32 %v3295, %v3348
        %v3365 = vmul.f32 %v3297, %v3349
        %v3366 = vmul.f32 %v3299, %v3350
        %v3367 = vmul.f32 %v3301, %v3351
        %v3368 = vmul.f32 %v3303, %v3352
        %v3369 = vmul.f32 %v3305, %v3353
        %v3370 = vpack.c.bf16 %v3355, %v3354
        %v3371 = vpack.c.bf16 %v3357, %v3356
        %v3372 = vpack.c.bf16 %v3359, %v3358
        %v3373 = vpack.c.bf16 %v3361, %v3360
        %v3374 = vpack.c.bf16 %v3363, %v3362
        %v3375 = vpack.c.bf16 %v3365, %v3364
        %v3376 = vpack.c.bf16 %v3367, %v3366
        %v3377 = vpack.c.bf16 %v3369, %v3368
        %v3378 = vpack.c.bf16 %v1751, %v1747
        %v3379 = vpack.c.bf16 %v1761, %v1757
        %v3380 = vpack.c.bf16 %v1771, %v1767
        %v3381 = vpack.c.bf16 %v1781, %v1777
        %v3382 = vpack.c.bf16 %v1791, %v1787
        %v3383 = vpack.c.bf16 %v1801, %v1797
        %v3384 = vpack.c.bf16 %v1811, %v1807
        %v3385 = vpack.c.bf16 %v1821, %v1817
        %3386 = vmatprep.subr.bf16.mxu0 0
        %3387 = vmatpush1.bf16.msra.mxu0 %v3378
        %3388 = vmatprep.subr.bf16.mxu0 0
        %3389 = vmatpush1.bf16.msra.mxu0 %v3379
        %3390 = vmatprep.subr.bf16.mxu0 0
        %3391 = vmatpush1.bf16.msra.mxu0 %v3380
        %3392 = vmatprep.subr.bf16.mxu0 0
        %3393 = vmatpush1.bf16.msra.mxu0 %v3381
        %3394 = vmatprep.subr.bf16.mxu0 0
        %3395 = vmatpush1.bf16.msra.mxu0 %v3382
        %3396 = vmatprep.subr.bf16.mxu0 0
        %3397 = vmatpush1.bf16.msra.mxu0 %v3383
        %3398 = vmatprep.subr.bf16.mxu0 0
        %3399 = vmatpush1.bf16.msra.mxu0 %v3384
        %3400 = vmatprep.subr.bf16.mxu0 0
        %3401 = vmatpush1.bf16.msra.mxu0 %v3385
        %3402 = vmatprep.subr.bf16.mxu0 0
        %3403 = vmatpush1.bf16.msra.mxu0 0
        %3404 = vmatprep.subr.bf16.mxu0 0
        %3405 = vmatpush1.bf16.msra.mxu0 0
        %3406 = vmatprep.subr.bf16.mxu0 0
        %3407 = vmatpush1.bf16.msra.mxu0 0
        %3408 = vmatprep.subr.bf16.mxu0 0
        %3409 = vmatpush1.bf16.msra.mxu0 0
        %3410 = vmatprep.subr.bf16.mxu0 0
        %3411 = vmatpush1.bf16.msra.mxu0 0
        %3412 = vmatprep.subr.bf16.mxu0 0
        %3413 = vmatpush1.bf16.msra.mxu0 0
        %3414 = vmatprep.subr.bf16.mxu0 0
        %3415 = vmatpush1.bf16.msra.mxu0 0
        %3416 = vmatprep.subr.bf16.mxu0 0
        %3417 = vmatpush1.bf16.msra.mxu0 0
        %3418 = vmatprep.mubr.bf16.mxu0 0
        %3419 = vmatmul.mubr.bf16.gmra.mrb[0].mxu0 %v3370
        %v3420 = vpop.f32.mrb[0].mxu0
        %v3421 = vadd.f32 0.0, %v3420
        %v3422 = vpop.f32.mrb[0].mxu0
        %v3423 = vpop.f32.mrb[0].mxu0
        %v3424 = vadd.f32 0.0, %v3423
        %v3425 = vpop.f32.mrb[0].mxu0
        %3426 = vmatprep.mubr.bf16.mxu0 0
        %3427 = vmatmul.mubr.bf16.gmra.mrb[0].mxu0 %v3371
        %v3428 = vpop.f32.mrb[0].mxu0
        %v3429 = vadd.f32 0.0, %v3428
        %v3430 = vpop.f32.mrb[0].mxu0
        %v3431 = vpop.f32.mrb[0].mxu0
        %v3432 = vadd.f32 0.0, %v3431
        %v3433 = vpop.f32.mrb[0].mxu0
        %3434 = vmatprep.mubr.bf16.mxu0 0
        %3435 = vmatmul.mubr.bf16.gmra.mrb[0].mxu0 %v3372
        %v3436 = vpop.f32.mrb[0].mxu0
        %v3437 = vadd.f32 0.0, %v3436
        %v3438 = vpop.f32.mrb[0].mxu0
        %v3439 = vpop.f32.mrb[0].mxu0
        %v3440 = vadd.f32 0.0, %v3439
        %v3441 = vpop.f32.mrb[0].mxu0
        %3442 = vmatprep.mubr.bf16.mxu0 0
        %3443 = vmatmul.mubr.bf16.gmra.mrb[0].mxu0 %v3373
        %v3444 = vpop.f32.mrb[0].mxu0
        %v3445 = vadd.f32 0.0, %v3444
        %v3446 = vpop.f32.mrb[0].mxu0
        %v3447 = vpop.f32.mrb[0].mxu0
        %v3448 = vadd.f32 0.0, %v3447
        %v3449 = vpop.f32.mrb[0].mxu0
        %3450 = vmatprep.mubr.bf16.mxu0 0
        %3451 = vmatmul.mubr.bf16.gmra.mrb[0].mxu0 %v3374
        %v3452 = vpop.f32.mrb[0].mxu0
        %v3453 = vadd.f32 0.0, %v3452
        %v3454 = vpop.f32.mrb[0].mxu0
        %v3455 = vpop.f32.mrb[0].mxu0
        %v3456 = vadd.f32 0.0, %v3455
        %v3457 = vpop.f32.mrb[0].mxu0
        %3458 = vmatprep.mubr.bf16.mxu0 0
        %3459 = vmatmul.mubr.bf16.gmra.mrb[0].mxu0 %v3375
        %v3460 = vpop.f32.mrb[0].mxu0
        %v3461 = vadd.f32 0.0, %v3460
        %v3462 = vpop.f32.mrb[0].mxu0
        %v3463 = vpop.f32.mrb[0].mxu0
        %v3464 = vadd.f32 0.0, %v3463
        %v3465 = vpop.f32.mrb[0].mxu0
        %3466 = vmatprep.mubr.bf16.mxu0 0
        %3467 = vmatmul.mubr.bf16.gmra.mrb[0].mxu0 %v3376
        %v3468 = vpop.f32.mrb[0].mxu0
        %v3469 = vadd.f32 0.0, %v3468
        %v3470 = vpop.f32.mrb[0].mxu0
        %v3471 = vpop.f32.mrb[0].mxu0
        %v3472 = vadd.f32 0.0, %v3471
        %v3473 = vpop.f32.mrb[0].mxu0
        %3474 = vmatprep.mubr.bf16.mxu0 0
        %3475 = vmatmul.mubr.bf16.gmra.mrb[0].mxu0 %v3377
        %v3476 = vpop.f32.mrb[0].mxu0
        %v3477 = vadd.f32 0.0, %v3476
        %v3478 = vpop.f32.mrb[0].mxu0
        %v3479 = vpop.f32.mrb[0].mxu0
        %v3480 = vadd.f32 0.0, %v3479
        %v3481 = vpop.f32.mrb[0].mxu0
        %3482 = vdwg.mxu0
        %v3483 = vpack.c.bf16 %v3424, %v3421
        %v3484 = vpack.c.bf16 %v3432, %v3429
        %v3485 = vpack.c.bf16 %v3440, %v3437
        %v3486 = vpack.c.bf16 %v3448, %v3445
        %v3487 = vpack.c.bf16 %v3456, %v3453
        %v3488 = vpack.c.bf16 %v3464, %v3461
        %v3489 = vpack.c.bf16 %v3472, %v3469
        %v3490 = vpack.c.bf16 %v3480, %v3477
        %3491 = vst [vmem:[#allocation3 + $0x18] sm:$0xff] %v3483
        %3492 = vst [vmem:[#allocation3 + $0x38] sm:$0xff] %v3484
        %3493 = vst [vmem:[#allocation3 + $0x58] sm:$0xff] %v3485
        %3494 = vst [vmem:[#allocation3 + $0x78] sm:$0xff] %v3486
        %3495 = vst [vmem:[#allocation3 + $0x98] sm:$0xff] %v3487
        %3496 = vst [vmem:[#allocation3 + $0xb8] sm:$0xff] %v3488
        %3497 = vst [vmem:[#allocation3 + $0xd8] sm:$0xff] %v3489
        %3498 = vst [vmem:[#allocation3 + $0xf8] sm:$0xff] %v3490
        %v3499 = vld [vmem:[#allocation3] sm:$0xff]
        %v3500 = vld [vmem:[#allocation3 + $0x8] sm:$0xff]
        %v3501 = vld [vmem:[#allocation3 + $0x10] sm:$0xff]
        %v3502 = vld [vmem:[#allocation3 + $0x18] sm:$0xff]
        %v3503 = vld [vmem:[#allocation3 + $0x20] sm:$0xff]
        %v3504 = vld [vmem:[#allocation3 + $0x28] sm:$0xff]
        %v3505 = vld [vmem:[#allocation3 + $0x30] sm:$0xff]
        %v3506 = vld [vmem:[#allocation3 + $0x38] sm:$0xff]
        %v3507 = vld [vmem:[#allocation3 + $0x40] sm:$0xff]
        %v3508 = vld [vmem:[#allocation3 + $0x48] sm:$0xff]
        %v3509 = vld [vmem:[#allocation3 + $0x50] sm:$0xff]
        %v3510 = vld [vmem:[#allocation3 + $0x58] sm:$0xff]
        %v3511 = vld [vmem:[#allocation3 + $0x60] sm:$0xff]
        %v3512 = vld [vmem:[#allocation3 + $0x68] sm:$0xff]
        %v3513 = vld [vmem:[#allocation3 + $0x70] sm:$0xff]
        %v3514 = vld [vmem:[#allocation3 + $0x78] sm:$0xff]
        %v3515 = vld [vmem:[#allocation3 + $0x80] sm:$0xff]
        %v3516 = vld [vmem:[#allocation3 + $0x88] sm:$0xff]
        %v3517 = vld [vmem:[#allocation3 + $0x90] sm:$0xff]
        %v3518 = vld [vmem:[#allocation3 + $0x98] sm:$0xff]
        %v3519 = vld [vmem:[#allocation3 + $0xa0] sm:$0xff]
        %v3520 = vld [vmem:[#allocation3 + $0xa8] sm:$0xff]
        %v3521 = vld [vmem:[#allocation3 + $0xb0] sm:$0xff]
        %v3522 = vld [vmem:[#allocation3 + $0xb8] sm:$0xff]
        %v3523 = vld [vmem:[#allocation3 + $0xc0] sm:$0xff]
        %v3524 = vld [vmem:[#allocation3 + $0xc8] sm:$0xff]
        %v3525 = vld [vmem:[#allocation3 + $0xd0] sm:$0xff]
        %v3526 = vld [vmem:[#allocation3 + $0xd8] sm:$0xff]
        %v3527 = vld [vmem:[#allocation3 + $0xe0] sm:$0xff]
        %v3528 = vld [vmem:[#allocation3 + $0xe8] sm:$0xff]
        %v3529 = vld [vmem:[#allocation3 + $0xf0] sm:$0xff]
        %v3530 = vld [vmem:[#allocation3 + $0xf8] sm:$0xff]
        %v3531 = vld [vmem:[%s395] sm:$0xf]
        %v3532 = vld [vmem:[%s395 + $0x4] sm:$0xf]
        %v3533 = vld [vmem:[%s395 + $0x8] sm:$0xf]
        %v3534 = vld [vmem:[%s395 + $0xc] sm:$0xf]
        %v3535 = vld [vmem:[%s395 + $0x10] sm:$0xf]
        %v3536 = vld [vmem:[%s395 + $0x14] sm:$0xf]
        %v3537 = vld [vmem:[%s395 + $0x18] sm:$0xf]
        %v3538 = vld [vmem:[%s395 + $0x1c] sm:$0xf]
        %v3539 = vld [vmem:[%s395 + $0x20] sm:$0xf]
        %v3540 = vld [vmem:[%s395 + $0x24] sm:$0xf]
        %v3541 = vld [vmem:[%s395 + $0x28] sm:$0xf]
        %v3542 = vld [vmem:[%s395 + $0x2c] sm:$0xf]
        %v3543 = vld [vmem:[%s395 + $0x30] sm:$0xf]
        %v3544 = vld [vmem:[%s395 + $0x34] sm:$0xf]
        %v3545 = vld [vmem:[%s395 + $0x38] sm:$0xf]
        %v3546 = vld [vmem:[%s395 + $0x3c] sm:$0xf]
        %v3547 = vld [vmem:[%s395 + $0x40] sm:$0xf]
        %v3548 = vld [vmem:[%s395 + $0x44] sm:$0xf]
        %v3549 = vld [vmem:[%s395 + $0x48] sm:$0xf]
        %v3550 = vld [vmem:[%s395 + $0x4c] sm:$0xf]
        %v3551 = vld [vmem:[%s395 + $0x50] sm:$0xf]
        %v3552 = vld [vmem:[%s395 + $0x54] sm:$0xf]
        %v3553 = vld [vmem:[%s395 + $0x58] sm:$0xf]
        %v3554 = vld [vmem:[%s395 + $0x5c] sm:$0xf]
        %v3555 = vld [vmem:[%s395 + $0x60] sm:$0xf]
        %v3556 = vld [vmem:[%s395 + $0x64] sm:$0xf]
        %v3557 = vld [vmem:[%s395 + $0x68] sm:$0xf]
        %v3558 = vld [vmem:[%s395 + $0x6c] sm:$0xf]
        %v3559 = vld [vmem:[%s395 + $0x70] sm:$0xf]
        %v3560 = vld [vmem:[%s395 + $0x74] sm:$0xf]
        %v3561 = vld [vmem:[%s395 + $0x78] sm:$0xf]
        %v3562 = vld [vmem:[%s395 + $0x7c] sm:$0xf]
        %v3563 = vld [vmem:[%s395 + $0x80] sm:$0xf]
        %v3564 = vld [vmem:[%s395 + $0x84] sm:$0xf]
        %v3565 = vld [vmem:[%s395 + $0x88] sm:$0xf]
        %v3566 = vld [vmem:[%s395 + $0x8c] sm:$0xf]
        %v3567 = vld [vmem:[%s395 + $0x90] sm:$0xf]
        %v3568 = vld [vmem:[%s395 + $0x94] sm:$0xf]
        %v3569 = vld [vmem:[%s395 + $0x98] sm:$0xf]
        %v3570 = vld [vmem:[%s395 + $0x9c] sm:$0xf]
        %v3571 = vld [vmem:[%s395 + $0xa0] sm:$0xf]
        %v3572 = vld [vmem:[%s395 + $0xa4] sm:$0xf]
        %v3573 = vld [vmem:[%s395 + $0xa8] sm:$0xf]
        %v3574 = vld [vmem:[%s395 + $0xac] sm:$0xf]
        %v3575 = vld [vmem:[%s395 + $0xb0] sm:$0xf]
        %v3576 = vld [vmem:[%s395 + $0xb4] sm:$0xf]
        %v3577 = vld [vmem:[%s395 + $0xb8] sm:$0xf]
        %v3578 = vld [vmem:[%s395 + $0xbc] sm:$0xf]
        %v3579 = vld [vmem:[%s395 + $0xc0] sm:$0xf]
        %v3580 = vld [vmem:[%s395 + $0xc4] sm:$0xf]
        %v3581 = vld [vmem:[%s395 + $0xc8] sm:$0xf]
        %v3582 = vld [vmem:[%s395 + $0xcc] sm:$0xf]
        %v3583 = vld [vmem:[%s395 + $0xd0] sm:$0xf]
        %v3584 = vld [vmem:[%s395 + $0xd4] sm:$0xf]
        %v3585 = vld [vmem:[%s395 + $0xd8] sm:$0xf]
        %v3586 = vld [vmem:[%s395 + $0xdc] sm:$0xf]
        %v3587 = vld [vmem:[%s395 + $0xe0] sm:$0xf]
        %v3588 = vld [vmem:[%s395 + $0xe4] sm:$0xf]
        %v3589 = vld [vmem:[%s395 + $0xe8] sm:$0xf]
        %v3590 = vld [vmem:[%s395 + $0xec] sm:$0xf]
        %v3591 = vld [vmem:[%s395 + $0xf0] sm:$0xf]
        %v3592 = vld [vmem:[%s395 + $0xf4] sm:$0xf]
        %v3593 = vld [vmem:[%s395 + $0xf8] sm:$0xf]
        %v3594 = vld [vmem:[%s395 + $0xfc] sm:$0xf]
        %v3595 = vld [vmem:[%s450] sm:$0x1]
        %v3597 = vlaneseq
        %v3598 = vshrl.u32 %v3597, 7
        %v3599 = vsub.s32 0, %v3598
        %v3600 = vrot.slane %v3595, %v3599
        %v3666 = vunpack.c.l.b16 %v3531
        %v3667 = vunpack.c.l.b16 %v3532
        %v3668 = vunpack.c.l.b16 %v3533
        %v3669 = vunpack.c.l.b16 %v3534
        %v3670 = vunpack.c.l.b16 %v3535
        %v3671 = vunpack.c.l.b16 %v3536
        %v3672 = vunpack.c.l.b16 %v3537
        %v3673 = vunpack.c.l.b16 %v3538
        %v3674 = vunpack.c.l.b16 %v3539
        %v3675 = vunpack.c.l.b16 %v3540
        %v3676 = vunpack.c.l.b16 %v3541
        %v3677 = vunpack.c.l.b16 %v3542
        %v3678 = vunpack.c.l.b16 %v3543
        %v3679 = vunpack.c.l.b16 %v3544
        %v3680 = vunpack.c.l.b16 %v3545
        %v3681 = vunpack.c.l.b16 %v3546
        %v3682 = vunpack.c.l.b16 %v3547
        %v3683 = vunpack.c.l.b16 %v3548
        %v3684 = vunpack.c.l.b16 %v3549
        %v3685 = vunpack.c.l.b16 %v3550
        %v3686 = vunpack.c.l.b16 %v3551
        %v3687 = vunpack.c.l.b16 %v3552
        %v3688 = vunpack.c.l.b16 %v3553
        %v3689 = vunpack.c.l.b16 %v3554
        %v3690 = vunpack.c.l.b16 %v3555
        %v3691 = vunpack.c.l.b16 %v3556
        %v3692 = vunpack.c.l.b16 %v3557
        %v3693 = vunpack.c.l.b16 %v3558
        %v3694 = vunpack.c.l.b16 %v3559
        %v3695 = vunpack.c.l.b16 %v3560
        %v3696 = vunpack.c.l.b16 %v3561
        %v3697 = vunpack.c.l.b16 %v3562
        %v3698 = vunpack.c.l.b16 %v3563
        %v3699 = vunpack.c.l.b16 %v3564
        %v3700 = vunpack.c.l.b16 %v3565
        %v3701 = vunpack.c.l.b16 %v3566
        %v3702 = vunpack.c.l.b16 %v3567
        %v3703 = vunpack.c.l.b16 %v3568
        %v3704 = vunpack.c.l.b16 %v3569
        %v3705 = vunpack.c.l.b16 %v3570
        %v3706 = vunpack.c.l.b16 %v3571
        %v3707 = vunpack.c.l.b16 %v3572
        %v3708 = vunpack.c.l.b16 %v3573
        %v3709 = vunpack.c.l.b16 %v3574
        %v3710 = vunpack.c.l.b16 %v3575
        %v3711 = vunpack.c.l.b16 %v3576
        %v3712 = vunpack.c.l.b16 %v3577
        %v3713 = vunpack.c.l.b16 %v3578
        %v3714 = vunpack.c.l.b16 %v3579
        %v3715 = vunpack.c.l.b16 %v3580
        %v3716 = vunpack.c.l.b16 %v3581
        %v3717 = vunpack.c.l.b16 %v3582
        %v3718 = vunpack.c.l.b16 %v3583
        %v3719 = vunpack.c.l.b16 %v3584
        %v3720 = vunpack.c.l.b16 %v3585
        %v3721 = vunpack.c.l.b16 %v3586
        %v3722 = vunpack.c.l.b16 %v3587
        %v3723 = vunpack.c.l.b16 %v3588
        %v3724 = vunpack.c.l.b16 %v3589
        %v3725 = vunpack.c.l.b16 %v3590
        %v3726 = vunpack.c.l.b16 %v3591
        %v3727 = vunpack.c.l.b16 %v3592
        %v3728 = vunpack.c.l.b16 %v3593
        %v3729 = vunpack.c.l.b16 %v3594
        %v3730 = vpack.c.b16 %v3667, %v3666
        %v3731 = vpack.c.b16 %v3669, %v3668
        %v3732 = vpack.c.b16 %v3671, %v3670
        %v3733 = vpack.c.b16 %v3673, %v3672
        %v3734 = vpack.c.b16 %v3675, %v3674
        %v3735 = vpack.c.b16 %v3677, %v3676
        %v3736 = vpack.c.b16 %v3679, %v3678
        %v3737 = vpack.c.b16 %v3681, %v3680
        %v3738 = vpack.c.b16 %v3683, %v3682
        %v3739 = vpack.c.b16 %v3685, %v3684
        %v3740 = vpack.c.b16 %v3687, %v3686
        %v3741 = vpack.c.b16 %v3689, %v3688
        %v3742 = vpack.c.b16 %v3691, %v3690
        %v3743 = vpack.c.b16 %v3693, %v3692
        %v3744 = vpack.c.b16 %v3695, %v3694
        %v3745 = vpack.c.b16 %v3697, %v3696
        %v3746 = vpack.c.b16 %v3699, %v3698
        %v3747 = vpack.c.b16 %v3701, %v3700
        %v3748 = vpack.c.b16 %v3703, %v3702
        %v3749 = vpack.c.b16 %v3705, %v3704
        %v3750 = vpack.c.b16 %v3707, %v3706
        %v3751 = vpack.c.b16 %v3709, %v3708
        %v3752 = vpack.c.b16 %v3711, %v3710
        %v3753 = vpack.c.b16 %v3713, %v3712
        %v3754 = vpack.c.b16 %v3715, %v3714
        %v3755 = vpack.c.b16 %v3717, %v3716
        %v3756 = vpack.c.b16 %v3719, %v3718
        %v3757 = vpack.c.b16 %v3721, %v3720
        %v3758 = vpack.c.b16 %v3723, %v3722
        %v3759 = vpack.c.b16 %v3725, %v3724
        %v3760 = vpack.c.b16 %v3727, %v3726
        %v3761 = vpack.c.b16 %v3729, %v3728
        %3794 = vmatprep.subr.bf16.mxu0 0
        %3795 = vmatpush1.bf16.msra.mxu0 %v3730
        %3796 = vmatprep.subr.bf16.mxu0 0
        %3797 = vmatpush1.bf16.msra.mxu0 %v3731
        %3798 = vmatprep.subr.bf16.mxu0 0
        %3799 = vmatpush1.bf16.msra.mxu0 %v3732
        %3800 = vmatprep.subr.bf16.mxu0 0
        %3801 = vmatpush1.bf16.msra.mxu0 %v3733
        %3802 = vmatprep.subr.bf16.mxu0 0
        %3803 = vmatpush1.bf16.msra.mxu0 %v3734
        %3804 = vmatprep.subr.bf16.mxu0 0
        %3805 = vmatpush1.bf16.msra.mxu0 %v3735
        %3806 = vmatprep.subr.bf16.mxu0 0
        %3807 = vmatpush1.bf16.msra.mxu0 %v3736
        %3808 = vmatprep.subr.bf16.mxu0 0
        %3809 = vmatpush1.bf16.msra.mxu0 %v3737
        %3810 = vmatprep.subr.bf16.mxu0 0
        %3811 = vmatpush1.bf16.msra.mxu0 %v3738
        %3812 = vmatprep.subr.bf16.mxu0 0
        %3813 = vmatpush1.bf16.msra.mxu0 %v3739
        %3814 = vmatprep.subr.bf16.mxu0 0
        %3815 = vmatpush1.bf16.msra.mxu0 %v3740
        %3816 = vmatprep.subr.bf16.mxu0 0
        %3817 = vmatpush1.bf16.msra.mxu0 %v3741
        %3818 = vmatprep.subr.bf16.mxu0 0
        %3819 = vmatpush1.bf16.msra.mxu0 %v3742
        %3820 = vmatprep.subr.bf16.mxu0 0
        %3821 = vmatpush1.bf16.msra.mxu0 %v3743
        %3822 = vmatprep.subr.bf16.mxu0 0
        %3823 = vmatpush1.bf16.msra.mxu0 %v3744
        %3824 = vmatprep.subr.bf16.mxu0 0
        %3825 = vmatpush1.bf16.msra.mxu0 %v3745
        %3826 = vmatprep.mubr.bf16.mxu0 %v3500
        %3827 = vmatmul.mubr.bf16.gmra.mrb[0].mxu0 %v3499
        %v3828 = vpop.f32.mrb[0].mxu0
        %v3829 = vadd.f32 %v3600, %v3828
        %v3830 = vpop.f32.mrb[0].mxu0
        %v3831 = vpop.f32.mrb[0].mxu0
        %v3832 = vadd.f32 %v3600, %v3831
        %v3833 = vpop.f32.mrb[0].mxu0
        %3834 = vmatprep.mubr.bf16.mxu0 %v3504
        %3835 = vmatmul.mubr.bf16.gmra.mrb[0].mxu0 %v3503
        %v3836 = vpop.f32.mrb[0].mxu0
        %v3837 = vadd.f32 %v3600, %v3836
        %v3838 = vpop.f32.mrb[0].mxu0
        %v3839 = vpop.f32.mrb[0].mxu0
        %v3840 = vadd.f32 %v3600, %v3839
        %v3841 = vpop.f32.mrb[0].mxu0
        %3842 = vmatprep.mubr.bf16.mxu0 %v3508
        %3843 = vmatmul.mubr.bf16.gmra.mrb[0].mxu0 %v3507
        %v3844 = vpop.f32.mrb[0].mxu0
        %v3845 = vadd.f32 %v3600, %v3844
        %v3846 = vpop.f32.mrb[0].mxu0
        %v3847 = vpop.f32.mrb[0].mxu0
        %v3848 = vadd.f32 %v3600, %v3847
        %v3849 = vpop.f32.mrb[0].mxu0
        %3850 = vmatprep.mubr.bf16.mxu0 %v3512
        %3851 = vmatmul.mubr.bf16.gmra.mrb[0].mxu0 %v3511
        %v3852 = vpop.f32.mrb[0].mxu0
        %v3853 = vadd.f32 %v3600, %v3852
        %v3854 = vpop.f32.mrb[0].mxu0
        %v3855 = vpop.f32.mrb[0].mxu0
        %v3856 = vadd.f32 %v3600, %v3855
        %v3857 = vpop.f32.mrb[0].mxu0
        %3858 = vmatprep.mubr.bf16.mxu0 %v3516
        %3859 = vmatmul.mubr.bf16.gmra.mrb[0].mxu0 %v3515
        %v3860 = vpop.f32.mrb[0].mxu0
        %v3861 = vadd.f32 %v3600, %v3860
        %v3862 = vpop.f32.mrb[0].mxu0
        %v3863 = vpop.f32.mrb[0].mxu0
        %v3864 = vadd.f32 %v3600, %v3863
        %v3865 = vpop.f32.mrb[0].mxu0
        %3866 = vmatprep.mubr.bf16.mxu0 %v3520
        %3867 = vmatmul.mubr.bf16.gmra.mrb[0].mxu0 %v3519
        %v3868 = vpop.f32.mrb[0].mxu0
        %v3869 = vadd.f32 %v3600, %v3868
        %v3870 = vpop.f32.mrb[0].mxu0
        %v3871 = vpop.f32.mrb[0].mxu0
        %v3872 = vadd.f32 %v3600, %v3871
        %v3873 = vpop.f32.mrb[0].mxu0
        %3874 = vmatprep.mubr.bf16.mxu0 %v3524
        %3875 = vmatmul.mubr.bf16.gmra.mrb[0].mxu0 %v3523
        %v3876 = vpop.f32.mrb[0].mxu0
        %v3877 = vadd.f32 %v3600, %v3876
        %v3878 = vpop.f32.mrb[0].mxu0
        %v3879 = vpop.f32.mrb[0].mxu0
        %v3880 = vadd.f32 %v3600, %v3879
        %v3881 = vpop.f32.mrb[0].mxu0
        %3882 = vmatprep.mubr.bf16.mxu0 %v3528
        %3883 = vmatmul.mubr.bf16.gmra.mrb[0].mxu0 %v3527
        %v3884 = vpop.f32.mrb[0].mxu0
        %v3885 = vadd.f32 %v3600, %v3884
        %v3886 = vpop.f32.mrb[0].mxu0
        %v3887 = vpop.f32.mrb[0].mxu0
        %v3888 = vadd.f32 %v3600, %v3887
        %v3889 = vpop.f32.mrb[0].mxu0
        %3890 = vdwg.mxu0
        %3891 = vmatprep.subr.bf16.mxu0 0
        %3892 = vmatpush1.bf16.msra.mxu0 %v3746
        %3893 = vmatprep.subr.bf16.mxu0 0
        %3894 = vmatpush1.bf16.msra.mxu0 %v3747
        %3895 = vmatprep.subr.bf16.mxu0 0
        %3896 = vmatpush1.bf16.msra.mxu0 %v3748
        %3897 = vmatprep.subr.bf16.mxu0 0
        %3898 = vmatpush1.bf16.msra.mxu0 %v3749
        %3899 = vmatprep.subr.bf16.mxu0 0
        %3900 = vmatpush1.bf16.msra.mxu0 %v3750
        %3901 = vmatprep.subr.bf16.mxu0 0
        %3902 = vmatpush1.bf16.msra.mxu0 %v3751
        %3903 = vmatprep.subr.bf16.mxu0 0
        %3904 = vmatpush1.bf16.msra.mxu0 %v3752
        %3905 = vmatprep.subr.bf16.mxu0 0
        %3906 = vmatpush1.bf16.msra.mxu0 %v3753
        %3907 = vmatprep.subr.bf16.mxu0 0
        %3908 = vmatpush1.bf16.msra.mxu0 %v3754
        %3909 = vmatprep.subr.bf16.mxu0 0
        %3910 = vmatpush1.bf16.msra.mxu0 %v3755
        %3911 = vmatprep.subr.bf16.mxu0 0
        %3912 = vmatpush1.bf16.msra.mxu0 %v3756
        %3913 = vmatprep.subr.bf16.mxu0 0
        %3914 = vmatpush1.bf16.msra.mxu0 %v3757
        %3915 = vmatprep.subr.bf16.mxu0 0
        %3916 = vmatpush1.bf16.msra.mxu0 %v3758
        %3917 = vmatprep.subr.bf16.mxu0 0
        %3918 = vmatpush1.bf16.msra.mxu0 %v3759
        %3919 = vmatprep.subr.bf16.mxu0 0
        %3920 = vmatpush1.bf16.msra.mxu0 %v3760
        %3921 = vmatprep.subr.bf16.mxu0 0
        %3922 = vmatpush1.bf16.msra.mxu0 %v3761
        %3923 = vmatprep.mubr.bf16.mxu0 %v3502
        %3924 = vmatmul.mubr.bf16.gmra.mrb[0].mxu0 %v3501
        %v3925 = vpop.f32.mrb[0].mxu0
        %v3926 = vadd.f32 %v3829, %v3925
        %v3927 = vpop.f32.mrb[0].mxu0
        %v3928 = vpop.f32.mrb[0].mxu0
        %v3929 = vadd.f32 %v3832, %v3928
        %v3930 = vpop.f32.mrb[0].mxu0
        %3931 = vmatprep.mubr.bf16.mxu0 %v3506
        %3932 = vmatmul.mubr.bf16.gmra.mrb[0].mxu0 %v3505
        %v3933 = vpop.f32.mrb[0].mxu0
        %v3934 = vadd.f32 %v3837, %v3933
        %v3935 = vpop.f32.mrb[0].mxu0
        %v3936 = vpop.f32.mrb[0].mxu0
        %v3937 = vadd.f32 %v3840, %v3936
        %v3938 = vpop.f32.mrb[0].mxu0
        %3939 = vmatprep.mubr.bf16.mxu0 %v3510
        %3940 = vmatmul.mubr.bf16.gmra.mrb[0].mxu0 %v3509
        %v3941 = vpop.f32.mrb[0].mxu0
        %v3942 = vadd.f32 %v3845, %v3941
        %v3943 = vpop.f32.mrb[0].mxu0
        %v3944 = vpop.f32.mrb[0].mxu0
        %v3945 = vadd.f32 %v3848, %v3944
        %v3946 = vpop.f32.mrb[0].mxu0
        %3947 = vmatprep.mubr.bf16.mxu0 %v3514
        %3948 = vmatmul.mubr.bf16.gmra.mrb[0].mxu0 %v3513
        %v3949 = vpop.f32.mrb[0].mxu0
        %v3950 = vadd.f32 %v3853, %v3949
        %v3951 = vpop.f32.mrb[0].mxu0
        %v3952 = vpop.f32.mrb[0].mxu0
        %v3953 = vadd.f32 %v3856, %v3952
        %v3954 = vpop.f32.mrb[0].mxu0
        %3955 = vmatprep.mubr.bf16.mxu0 %v3518
        %3956 = vmatmul.mubr.bf16.gmra.mrb[0].mxu0 %v3517
        %v3957 = vpop.f32.mrb[0].mxu0
        %v3958 = vadd.f32 %v3861, %v3957
        %v3959 = vpop.f32.mrb[0].mxu0
        %v3960 = vpop.f32.mrb[0].mxu0
        %v3961 = vadd.f32 %v3864, %v3960
        %v3962 = vpop.f32.mrb[0].mxu0
        %3963 = vmatprep.mubr.bf16.mxu0 %v3522
        %3964 = vmatmul.mubr.bf16.gmra.mrb[0].mxu0 %v3521
        %v3965 = vpop.f32.mrb[0].mxu0
        %v3966 = vadd.f32 %v3869, %v3965
        %v3967 = vpop.f32.mrb[0].mxu0
        %v3968 = vpop.f32.mrb[0].mxu0
        %v3969 = vadd.f32 %v3872, %v3968
        %v3970 = vpop.f32.mrb[0].mxu0
        %3971 = vmatprep.mubr.bf16.mxu0 %v3526
        %3972 = vmatmul.mubr.bf16.gmra.mrb[0].mxu0 %v3525
        %v3973 = vpop.f32.mrb[0].mxu0
        %v3974 = vadd.f32 %v3877, %v3973
        %v3975 = vpop.f32.mrb[0].mxu0
        %v3976 = vpop.f32.mrb[0].mxu0
        %v3977 = vadd.f32 %v3880, %v3976
        %v3978 = vpop.f32.mrb[0].mxu0
        %3979 = vmatprep.mubr.bf16.mxu0 %v3530
        %3980 = vmatmul.mubr.bf16.gmra.mrb[0].mxu0 %v3529
        %v3981 = vpop.f32.mrb[0].mxu0
        %v3982 = vadd.f32 %v3885, %v3981
        %v3983 = vpop.f32.mrb[0].mxu0
        %v3984 = vpop.f32.mrb[0].mxu0
        %v3985 = vadd.f32 %v3888, %v3984
        %v3986 = vpop.f32.mrb[0].mxu0
        %3987 = vdwg.mxu0
        %v3988 = vmax.f32 %v3926, 0.0
        %v3989 = vmax.f32 %v3929, 0.0
        %v3990 = vmax.f32 %v3934, 0.0
        %v3991 = vmax.f32 %v3937, 0.0
        %v3992 = vmax.f32 %v3942, 0.0
        %v3993 = vmax.f32 %v3945, 0.0
        %v3994 = vmax.f32 %v3950, 0.0
        %v3995 = vmax.f32 %v3953, 0.0
        %v3996 = vmax.f32 %v3958, 0.0
        %v3997 = vmax.f32 %v3961, 0.0
        %v3998 = vmax.f32 %v3966, 0.0
        %v3999 = vmax.f32 %v3969, 0.0
        %v4000 = vmax.f32 %v3974, 0.0
        %v4001 = vmax.f32 %v3977, 0.0
        %v4002 = vmax.f32 %v3982, 0.0
        %v4003 = vmax.f32 %v3985, 0.0
        %p4004 = scmp.lt.s32.totalorder %s34, 1
        // Predicated region
        $region69: #{tpu_custom_call.1} parent=43 // pred_check
          %p4005 = pneg %p4004
        $region70: #{tpu_custom_call.1} parent=43 // pred_check_branch
          %4007 = sbr.rel (%p4005) target = $region72
        $region71: #{tpu_custom_call.1} parent=43 // pred_region
          %v4008 = vpack.c.bf16 %v3989, %v3988
          %v4009 = vpack.c.bf16 %v3991, %v3990
          %v4010 = vpack.c.bf16 %v3993, %v3992
          %v4011 = vpack.c.bf16 %v3995, %v3994
          %v4012 = vpack.c.bf16 %v3997, %v3996
          %v4013 = vpack.c.bf16 %v3999, %v3998
          %v4014 = vpack.c.bf16 %v4001, %v4000
          %v4015 = vpack.c.bf16 %v4003, %v4002
          %4016 = vst [vmem:[#allocation2] sm:$0xff] %v4008
          %4017 = vst [vmem:[#allocation2 + $0x8] sm:$0xff] %v4009
          %4018 = vst [vmem:[#allocation2 + $0x10] sm:$0xff] %v4010
          %4019 = vst [vmem:[#allocation2 + $0x18] sm:$0xff] %v4011
          %4020 = vst [vmem:[#allocation2 + $0x20] sm:$0xff] %v4012
          %4021 = vst [vmem:[#allocation2 + $0x28] sm:$0xff] %v4013
          %4022 = vst [vmem:[#allocation2 + $0x30] sm:$0xff] %v4014
          %4023 = vst [vmem:[#allocation2 + $0x38] sm:$0xff] %v4015
        $region72: #{tpu_custom_call.1} parent=43 // pred_fallthru
          _
        %p4024 = scmp.eq.s32.totalorder %s34, 1
        // Predicated region
        $region73: #{tpu_custom_call.1} parent=43 // pred_check
          %p4025 = pneg %p4024
        $region74: #{tpu_custom_call.1} parent=43 // pred_check_branch
          %4027 = sbr.rel (%p4025) target = $region76
        $region75: #{tpu_custom_call.1} parent=43 // pred_region
          %4028 = vst [vmem:[%s446] sm:$0xff] %v3988
          %4029 = vst [vmem:[%s446 + $0x8] sm:$0xff] %v3989
          %4030 = vst [vmem:[%s446 + $0x10] sm:$0xff] %v3990
          %4031 = vst [vmem:[%s446 + $0x18] sm:$0xff] %v3991
          %4032 = vst [vmem:[%s446 + $0x20] sm:$0xff] %v3992
          %4033 = vst [vmem:[%s446 + $0x28] sm:$0xff] %v3993
          %4034 = vst [vmem:[%s446 + $0x30] sm:$0xff] %v3994
          %4035 = vst [vmem:[%s446 + $0x38] sm:$0xff] %v3995
          %4036 = vst [vmem:[%s446 + $0x40] sm:$0xff] %v3996
          %4037 = vst [vmem:[%s446 + $0x48] sm:$0xff] %v3997
          %4038 = vst [vmem:[%s446 + $0x50] sm:$0xff] %v3998
          %4039 = vst [vmem:[%s446 + $0x58] sm:$0xff] %v3999
          %4040 = vst [vmem:[%s446 + $0x60] sm:$0xff] %v4000
          %4041 = vst [vmem:[%s446 + $0x68] sm:$0xff] %v4001
          %4042 = vst [vmem:[%s446 + $0x70] sm:$0xff] %v4002
          %4043 = vst [vmem:[%s446 + $0x78] sm:$0xff] %v4003
        $region76: #{tpu_custom_call.1} parent=43 // pred_fallthru
          _
        %s4044 = sand.u32 %s205, 1
        %s4045 = scalar_lea.sflag [#allocation6], %s4044
        %s4046 = sand.u32 %s205, 1
        %s4047 = smul.addr %s4046, 128
        %s4048 = scalar_lea.vmem [#allocation13], %s4047
        // Predicated region
        $region77: #{tpu_custom_call.1} parent=43 // pred_check
          %p4049 = pneg %p215
        $region78: #{tpu_custom_call.1} parent=43 // pred_check_branch
          %4051 = sbr.rel (%p4049) target = $region80
        $region79: #{tpu_custom_call.1} parent=43 // pred_region
          %s4052 = smul.u32 16, %s33
          %s4054 = ssub.s32 2048, 2048
          %4055 = vsyncadd %s4045, %s4054
          %s4056 = smul.addr %s4052, 128
          %s4057 = scalar_lea.hbm %s6, %s4056
          %s4058 = sshll.u32 %s4048, 4
          %s4059 = int_to_ptr.vmem [resolvable:$true] %s4058
          %4064 = dma.vmem_to_hbm [thread:$0]  %s4059, 2048, %s4057, %s4045, 128, 128, 8
        $region80: #{tpu_custom_call.1} parent=43 // pred_fallthru
          _
      $region44: #{tpu_custom_call.1} parent=5 // pred_fallthru
        _
      %p4065 = scmp.le.s32.totalorder 2, %s24
      // Predicated region
      $region81: #{tpu_custom_call.1} parent=5 // pred_check
        %p4066 = pneg %p4065
      $region82: #{tpu_custom_call.1} parent=5 // pred_check_branch
        %4068 = sbr.rel (%p4066) target = $region84
      $region83: #{tpu_custom_call.1} parent=5 // pred_region
        %s4069 = ssub.s32 %s24, 2
        // Predicated region
        $region85: #{tpu_custom_call.1} parent=83 // pred_check
          %p4070 = pneg %p221
        $region86: #{tpu_custom_call.1} parent=83 // pred_check_branch
          %4072 = sbr.rel (%p4070) target = $region88
        $region87: #{tpu_custom_call.1} parent=83 // pred_region
          %s4073 = sand.u32 %s206, 1
          %s4074 = scalar_lea.sflag [#allocation6], %s4073
          %s4075 = sand.u32 %s206, 1
          %s4076 = smul.addr %s4075, 128
          %s4077 = scalar_lea.vmem [#allocation13], %s4076
          %4078 = dma.done %s4074, 2048
        $region88: #{tpu_custom_call.1} parent=83 // pred_fallthru
          _
      $region84: #{tpu_custom_call.1} parent=5 // pred_fallthru
        _
    $region6: #{tpu_custom_call.1} parent=1 // loop_footer
      %s28 = sadd.s32 1, %s24
    $region7: #{tpu_custom_call.1} parent=1 // loop_footer_branch
      %23 = sbr.rel target = $region3
    $region8: #{tpu_custom_call.1} parent=1 // loop_exit
      _
    %4079 = vsyncpa [#allocation5], 1
    %s4080 = scalar_lea.sflag [#allocation5], 1
    %4081 = vsyncpa %s4080, 1
    %4082 = vsyncpa [#allocation8], 1
    %s4083 = scalar_lea.sflag [#allocation8], 1
    %4084 = vsyncpa %s4083, 1
    %4085 = vsyncpa [#allocation11], 1
    %s4086 = scalar_lea.sflag [#allocation11], 1
    %4087 = vsyncpa %s4086, 1
    %4088 = vsyncpa [#allocation6], 1
    %s4089 = scalar_lea.sflag [#allocation6], 1
    %4090 = vsyncpa %s4089, 1

</llo_original>
